<compile_context>
chip_gen: v7x
topology: tpu7x:2x2x1
jax: 0.10.0
libtpu: 0.0.40
codegen_flags: <defaults>
</compile_context>

<pallas_src>
import math
import functools

import numpy as np
import jax
import jax.numpy as jnp
from jax.experimental import pallas as pl
from jax.experimental.pallas import tpu as pltpu


def _round_up(x, m):
    return ((x + m - 1) // m) * m


# ----------------------------- vertex cleanup ------------------------------------------------
def clean_vertices(x):
    # CleanVertices(r): zero the two icosahedron vertex pixels of every chart.
    x = x.at[..., 0, -1].set(0.0)
    x = x.at[..., -1, 0].set(0.0)
    return x


# ----------------------------- PadIco (fast path: pad + border strips) -----------------------
def pad_ico(x, r):
    """PadIco forward (smooth_vertices=False): (..., R, 5, H, W) -> (..., R, 5, H+2, W+2).

    Zero-pad + 6 thin roll/flip border strips (mirrors the torch index table) instead of a
    full-slab gather.  The 5 per-chart corner pixels that the torch gather leaves pointing at
    flat index 0 are filled with x[..., 0, 0, 0, 0] for exact parity with the module.
    """
    h = 2 ** r
    x = clean_vertices(x)
    xp = jnp.pad(x, [(0, 0)] * (x.ndim - 2) + [(1, 1), (1, 1)])
    roll_c = lambda a, s: jnp.roll(a, s, axis=-3)   # chart axis
    roll_r = lambda a, s: jnp.roll(a, s, axis=-4)   # R axis
    xp = xp.at[..., 0, 1:h + 1].set(roll_c(x, 1)[..., -1, h:])
    xp = xp.at[..., 0, h + 1:-1].set(jnp.flip(roll_r(roll_c(x, 1), -1)[..., :, -1], -1))
    xp = xp.at[..., -1, 2:h + 2].set(jnp.flip(roll_r(roll_c(x, -1), -1)[..., :, 0], -1))
    xp = xp.at[..., -1, h + 1:-1].set(roll_c(x, -1)[..., 0, 0:h])
    xp = xp.at[..., 1:-1, 0].set(jnp.flip(roll_r(roll_c(x, 1), 1)[..., -1, 0:h], -1))
    xp = xp.at[..., 2:, -1].set(jnp.flip(roll_r(roll_c(x, -1), 1)[..., 0, h:], -1))
    corner = x[..., 0, 0, 0, 0][..., None, None]    # value picked up by the gather's zero index
    for hh, ww in ((0, 0), (0, -1), (1, -1), (-1, 0), (-1, 1)):
        xp = xp.at[..., hh, ww].set(corner)
    return xp


# ----------------------------- PadIco (gather path, used only by the reference) --------------
def build_padico_reorder_idx(r, R):
    H, W = 2 ** r, 2 ** (r + 1)
    idx_in = np.arange(R * 5 * H * W, dtype=np.int32).reshape(R, 5, H, W)
    idx_out = np.zeros((R, 5, H + 2, W + 2), dtype=np.int32)
    idx_out[..., 1:-1, 1:-1] = idx_in
    idx_out[..., 0, 1:2 ** r + 1] = np.roll(idx_in, 1, axis=-3)[..., -1, 2 ** r:]
    idx_out[..., 0, 2 ** r + 1:-1] = np.flip(
        np.roll(np.roll(idx_in, 1, axis=-3), -1, axis=-4)[..., :, -1], axis=-1)
    idx_out[..., -1, 2:2 ** r + 2] = np.flip(
        np.roll(np.roll(idx_in, -1, axis=-3), -1, axis=-4)[..., :, 0], axis=-1)
    idx_out[..., -1, 2 ** r + 1:-1] = np.roll(idx_in, -1, axis=-3)[..., 0, 0:2 ** r]
    idx_out[..., 1:-1, 0] = np.flip(
        np.roll(np.roll(idx_in, 1, axis=-3), 1, axis=-4)[..., -1, 0:2 ** r], axis=-1)
    idx_out[..., 2:, -1] = np.flip(
        np.roll(np.roll(idx_in, -1, axis=-3), 1, axis=-4)[..., 0, 2 ** r:], axis=-1)
    return idx_out


def pad_ico_reference(x, reorder_idx, R, H, W):
    x = clean_vertices(x)
    x_flat = x.reshape(x.shape[:-4] + (R * 5 * H * W,))
    return jnp.take(x_flat, reorder_idx, axis=-1)


# ----------------------------- kernel expansion (get_kernel) ---------------------------------
def get_expanded_kernel(weight, kernel_type, Cout, Cin, Rin, Rout):
    n = weight.shape[-1]
    if kernel_type == "discovered":
        idx_k = np.array([[0, 0, -1, 0, 0, 0, -1, 0, 0]], dtype=np.int64)
    elif kernel_type == "baseline":
        idx_k = np.array([[5, 4, -1, 6, 0, 3, -1, 1, 2],
                          [4, 3, -1, 5, 0, 2, -1, 6, 1],
                          [3, 2, -1, 4, 0, 1, -1, 5, 6],
                          [2, 1, -1, 3, 0, 6, -1, 4, 5],
                          [1, 6, -1, 2, 0, 5, -1, 3, 4],
                          [6, 5, -1, 1, 0, 4, -1, 2, 3]], dtype=np.int64)
    else:
        raise ValueError("Invalid kernel type")
    idx = np.zeros((Cout, Rout, Cin, Rin, 9, 4), dtype=np.int64)
    idx[..., 0] = np.arange(Cout).reshape(Cout, 1, 1, 1, 1)
    idx[..., 1] = np.arange(Cin).reshape(1, 1, Cin, 1, 1)
    for i in range(Rout):
        idx[:, i, :, :, :, 2] = np.arange(Rin).reshape(1, 1, Rin, 1)
        idx[:, i, :, :, :, 3] = idx_k[i, :]
    idx[..., 3] = idx[..., 3] % n  # -1 -> n-1 (that tap is zeroed below anyway, as in torch)
    ker = weight[idx[..., 0], idx[..., 1], idx[..., 2], idx[..., 3]]
    ker = ker.reshape(Cout, Rout, Cin, Rin, 3, 3)
    ker = ker.at[..., 0, 2].set(0.0)
    ker = ker.at[..., 2, 0].set(0.0)
    return ker


# ----------------------------- Pallas conv (hot path) ----------------------------------------
def ico_conv_pallas(x_in, w_stack, *, offsets, CRp, NL):
    # x_in   : (B, CRp, TIN) f32   per-batch flat padded slab + ones-row + tap-tail pad
    # w_stack: (O, n_taps*CRp) f32 K-stacked tap weights (bias folded on the centre tap)
    # returns: (B, O, NL) f32
    B, CRp_, TIN = x_in.shape
    O, K = w_stack.shape
    n_taps = len(offsets)
    assert CRp_ == CRp and K == n_taps * CRp
    assert NL % 128 == 0 and TIN >= NL + max(offsets)

    def kernel(x_ref, w_ref, o_ref, k_ref):
        # Assemble the K-stacked RHS: one shifted lane window per non-masked 3x3 tap.
        for t, d in enumerate(offsets):                    # static 7-iteration loop
            k_ref[t * CRp:(t + 1) * CRp, :] = x_ref[:, d:d + NL]
        # Single MXU contraction; f32 HIGHEST matches the XLA reference conv precision.
        o_ref[...] = jnp.dot(w_ref[...], k_ref[...],
                             precision=jax.lax.Precision.HIGHEST,
                             preferred_element_type=jnp.float32)

    return pl.pallas_call(
        kernel,
        out_shape=jax.ShapeDtypeStruct((B, O, NL), jnp.float32),
        grid=(B,),
        in_specs=[
            pl.BlockSpec((None, CRp, TIN), lambda b: (b, 0, 0)),   # disjoint per-batch rows
            pl.BlockSpec((O, K), lambda b: (0, 0)),                # weights stay resident
        ],
        out_specs=pl.BlockSpec((None, O, NL), lambda b: (b, 0, 0)),  # lane-dense unmasked store
        scratch_shapes=[pltpu.VMEM((K, NL), jnp.float32)],
        compiler_params=pltpu.CompilerParams(
            dimension_semantics=("parallel",),        # batch steps are independent (v7x megacore)
            vmem_limit_bytes=32 * 1024 * 1024,        # far above the <1 MiB/step used; safe everywhere
        ),
    )(x_in, w_stack)


# ----------------------------- StrideConv forward --------------------------------------------
def stride_conv_forward(x, weight, bias, *, kernel_type, r, Cin, Cout, Rin):
    Rout = 1 if kernel_type == "discovered" else 6
    B = x.shape[0]
    H, W = 2 ** r, 2 ** (r + 1)
    Hp, Wp = H + 2, W + 2
    CR = Cin * Rin
    O = Cout * Rout
    LANE = 128
    CRp = _round_up(CR + 1, 8)                 # +1 ones-row folds the bias (f32 sublane tile = 8)

    # icosahedral padding (pad + thin border strips; no full-slab gather)
    xp = pad_ico(x, r)                                            # (B, Cin, Rin, 5, Hp, Wp)

    # matmul RHS layout: (B, CRp, lanes); (5, Hp, Wp) packed in lanes -> pure reshape, no transpose
    NP = 5 * Hp * Wp
    NL = _round_up(NP, LANE)                                      # output lanes per batch element
    maxoff = 2 * Wp + 2                                           # largest 3x3 tap offset (flat coords)
    TIN = NL + _round_up(maxoff, LANE)                            # input row = output lanes + tail pad

    xq = xp.reshape(B, CR, NP)
    ones = jnp.ones((B, 1, NP), xq.dtype)                         # bias rides this row
    pad_rows = jnp.zeros((B, CRp - CR - 1, NP), xq.dtype)
    xq = jnp.concatenate([xq, ones, pad_rows], axis=1)            # (B, CRp, NP)
    x_in = jnp.pad(xq, ((0, 0), (0, 0), (0, TIN - NP)))           # (B, CRp, TIN)

    # K-stacked weights: one (O, CRp) block per non-masked 3x3 tap; bias on the centre tap
    taps = [(kh, kw) for kh in range(3) for kw in range(3) if (kh, kw) not in ((0, 2), (2, 0))]
    offsets = tuple(kh * Wp + kw for kh, kw in taps)
    ker = get_expanded_kernel(weight, kernel_type, Cout, Cin, Rin, Rout)   # (Cout,Rout,Cin,Rin,3,3)
    kmat = ker.reshape(O, CR, 3, 3)
    bias_rep = jnp.repeat(bias, Rout) if bias is not None else jnp.zeros((O,), jnp.float32)
    w_stack = jnp.zeros((O, len(taps), CRp), jnp.float32)
    for t, (kh, kw) in enumerate(taps):
        w_stack = w_stack.at[:, t, :CR].set(kmat[:, :, kh, kw])
    w_stack = w_stack.at[:, taps.index((1, 1)), CR].set(bias_rep)          # exact f32 bias
    w_stack = w_stack.reshape(O, len(taps) * CRp)

    # hot path: one fused lane-dense matmul per batch element
    out = ico_conv_pallas(x_in, w_stack, offsets=offsets, CRp=CRp, NL=NL)  # (B, O, NL)

    # drop padded-coordinate garbage lanes; (B, O, ...) order already matches the module layout
    y = out[:, :, :NP].reshape(B, O, 5, Hp, Wp)[..., :H, :W]
    y = y.reshape(B, Cout, Rout, 5, H, W)
    return clean_vertices(y)                                      # process_vertices (stride=1)


# ----------------------------- pure-JAX reference (for self-check) ---------------------------
def stride_conv_reference(x, weight, bias, *, kernel_type, r, Cin, Cout, Rin):
    Rout = 1 if kernel_type == "discovered" else 6
    B = x.shape[0]
    H, W = 2 ** r, 2 ** (r + 1)
    Hp, Wp = H + 2, W + 2
    CR = Cin * Rin
    O = Cout * Rout

    reorder_idx = jnp.asarray(build_padico_reorder_idx(r, Rin))   # faithful torch index table
    xp = pad_ico_reference(x, reorder_idx, Rin, H, W)
    x2 = xp.reshape(B, CR, 5 * Hp, Wp)
    ker = get_expanded_kernel(weight, kernel_type, Cout, Cin, Rin, Rout).reshape(O, CR, 3, 3)
    out = jax.lax.conv_general_dilated(
        x2, ker, window_strides=(1, 1), padding=((1, 1), (1, 1)),
        dimension_numbers=("NCHW", "OIHW", "NCHW"),
        precision=jax.lax.Precision.HIGHEST)
    out = out + jnp.repeat(bias, Rout).reshape(1, O, 1, 1)
    out = out.reshape(B, O, 5, Hp, Wp)[..., 1:-1, 1:-1]
    out = out.reshape(B, Cout, Rout, 5, H, W)
    return clean_vertices(out)


if __name__ == "__main__":
    kernel_type = "baseline"   # -> Rout = 6, n = 7
    r = 3
    Cin, Cout, Rin = 4, 4, 1
    n = 7
    B = 2
    H, W = 2 ** r, 2 ** (r + 1)

    key = jax.random.PRNGKey(0)
    kx, kw, kb = jax.random.split(key, 3)
    x = jax.random.normal(kx, (B, Cin, Rin, 5, H, W), dtype=jnp.float32)
    s = math.sqrt(2.0 / (3 * 3 * Cin * Rin))
    weight = (s * jax.random.normal(kw, (Cout, Cin, Rin, n))).astype(jnp.float32)
    # module inits bias to zeros; use a small non-zero bias to exercise the folded-bias path
    bias = (0.1 * jax.random.normal(kb, (Cout,))).astype(jnp.float32)

    fwd = jax.jit(functools.partial(
        stride_conv_forward, kernel_type=kernel_type, r=r, Cin=Cin, Cout=Cout, Rin=Rin))
    y = jax.block_until_ready(fwd(x, weight, bias))

    y_ref = jax.block_until_ready(stride_conv_reference(
        x, weight, bias, kernel_type=kernel_type, r=r, Cin=Cin, Cout=Cout, Rin=Rin))

    assert y.shape == (B, Cout, 6, 5, H, W), y.shape
    # f32 operands + HIGHEST on both sides -> expected agreement ~1e-5; tolerance leaves slack
    # for the MXU's multi-pass f32 decomposition while still catching any structural error.
    err = float(jnp.max(jnp.abs(y - y_ref)))
    if not err <= 2e-2:
        raise AssertionError(f"Pallas StrideConv does not match JAX reference (max|d|={err})")
    print("KERNEL_OK")
</pallas_src>

<mosaic_0001>
module attributes {stable_mosaic.version = 11 : i64} {
  func.func @kernel(%arg0: i32, %arg1: memref<1x8x1152xf32, #tpu.memory_space<vmem>>, %arg2: memref<24x56xf32, #tpu.memory_space<vmem>>, %arg3: memref<1x24x1024xf32, #tpu.memory_space<vmem>>, %arg4: memref<56x1024xf32, #tpu.memory_space<vmem>>) attributes {dimension_semantics = [#tpu.dimension_semantics<parallel>], iteration_bounds = array<i64: 2>, scalar_prefetch = 0 : i64, scratch_operands = 1 : i64, tpu.core_type = #tpu.core_type<tc>, window_params = [{transform_indices = @transform_0, window_bounds = array<i64: 1, 8, 1152>}, {pipeline_mode = #tpu.pipeline_mode<synchronous>, transform_indices = @transform_1, window_bounds = array<i64: 24, 56>}, {transform_indices = @transform_2, window_bounds = array<i64: 1, 24, 1024>}]} {
    %c0 = arith.constant 0 : index
    %c0_0 = arith.constant 0 : index
    %c0_1 = arith.constant 0 : index
    %0 = vector.load %arg1[%c0, %c0_0, %c0_1] : memref<1x8x1152xf32, #tpu.memory_space<vmem>>, vector<1x8x1024xf32>
    %1 = vector.shape_cast %0 : vector<1x8x1024xf32> to vector<8x1024xf32>
    %c0_2 = arith.constant 0 : index
    %c0_3 = arith.constant 0 : index
    %2 = vector.load %arg4[%c0_2, %c0_3] : memref<56x1024xf32, #tpu.memory_space<vmem>>, vector<8x1024xf32>
    tpu.vector_store %arg4[%c0_2, %c0_3], %1 {strides = array<i32>} : memref<56x1024xf32, #tpu.memory_space<vmem>>, vector<8x1024xf32>,
    %c0_4 = arith.constant 0 : index
    %c0_5 = arith.constant 0 : index
    %c1 = arith.constant 1 : index
    %3 = vector.load %arg1[%c0_4, %c0_5, %c1] : memref<1x8x1152xf32, #tpu.memory_space<vmem>>, vector<1x8x1024xf32>
    %4 = vector.shape_cast %3 : vector<1x8x1024xf32> to vector<8x1024xf32>
    %c8 = arith.constant 8 : index
    %c0_6 = arith.constant 0 : index
    %5 = vector.load %arg4[%c8, %c0_6] : memref<56x1024xf32, #tpu.memory_space<vmem>>, vector<8x1024xf32>
    tpu.vector_store %arg4[%c8, %c0_6], %4 {strides = array<i32>} : memref<56x1024xf32, #tpu.memory_space<vmem>>, vector<8x1024xf32>,
    %c0_7 = arith.constant 0 : index
    %c0_8 = arith.constant 0 : index
    %c18 = arith.constant 18 : index
    %6 = vector.load %arg1[%c0_7, %c0_8, %c18] : memref<1x8x1152xf32, #tpu.memory_space<vmem>>, vector<1x8x1024xf32>
    %7 = vector.shape_cast %6 : vector<1x8x1024xf32> to vector<8x1024xf32>
    %c16 = arith.constant 16 : index
    %c0_9 = arith.constant 0 : index
    %8 = vector.load %arg4[%c16, %c0_9] : memref<56x1024xf32, #tpu.memory_space<vmem>>, vector<8x1024xf32>
    tpu.vector_store %arg4[%c16, %c0_9], %7 {strides = array<i32>} : memref<56x1024xf32, #tpu.memory_space<vmem>>, vector<8x1024xf32>,
    %c0_10 = arith.constant 0 : index
    %c0_11 = arith.constant 0 : index
    %c19 = arith.constant 19 : index
    %9 = vector.load %arg1[%c0_10, %c0_11, %c19] : memref<1x8x1152xf32, #tpu.memory_space<vmem>>, vector<1x8x1024xf32>
    %10 = vector.shape_cast %9 : vector<1x8x1024xf32> to vector<8x1024xf32>
    %c24 = arith.constant 24 : index
    %c0_12 = arith.constant 0 : index
    %11 = vector.load %arg4[%c24, %c0_12] : memref<56x1024xf32, #tpu.memory_space<vmem>>, vector<8x1024xf32>
    tpu.vector_store %arg4[%c24, %c0_12], %10 {strides = array<i32>} : memref<56x1024xf32, #tpu.memory_space<vmem>>, vector<8x1024xf32>,
    %c0_13 = arith.constant 0 : index
    %c0_14 = arith.constant 0 : index
    %c20 = arith.constant 20 : index
    %12 = vector.load %arg1[%c0_13, %c0_14, %c20] : memref<1x8x1152xf32, #tpu.memory_space<vmem>>, vector<1x8x1024xf32>
    %13 = vector.shape_cast %12 : vector<1x8x1024xf32> to vector<8x1024xf32>
    %c32 = arith.constant 32 : index
    %c0_15 = arith.constant 0 : index
    %14 = vector.load %arg4[%c32, %c0_15] : memref<56x1024xf32, #tpu.memory_space<vmem>>, vector<8x1024xf32>
    tpu.vector_store %arg4[%c32, %c0_15], %13 {strides = array<i32>} : memref<56x1024xf32, #tpu.memory_space<vmem>>, vector<8x1024xf32>,
    %c0_16 = arith.constant 0 : index
    %c0_17 = arith.constant 0 : index
    %c37 = arith.constant 37 : index
    %15 = vector.load %arg1[%c0_16, %c0_17, %c37] : memref<1x8x1152xf32, #tpu.memory_space<vmem>>, vector<1x8x1024xf32>
    %16 = vector.shape_cast %15 : vector<1x8x1024xf32> to vector<8x1024xf32>
    %c40 = arith.constant 40 : index
    %c0_18 = arith.constant 0 : index
    %17 = vector.load %arg4[%c40, %c0_18] : memref<56x1024xf32, #tpu.memory_space<vmem>>, vector<8x1024xf32>
    tpu.vector_store %arg4[%c40, %c0_18], %16 {strides = array<i32>} : memref<56x1024xf32, #tpu.memory_space<vmem>>, vector<8x1024xf32>,
    %c0_19 = arith.constant 0 : index
    %c0_20 = arith.constant 0 : index
    %c38 = arith.constant 38 : index
    %18 = vector.load %arg1[%c0_19, %c0_20, %c38] : memref<1x8x1152xf32, #tpu.memory_space<vmem>>, vector<1x8x1024xf32>
    %19 = vector.shape_cast %18 : vector<1x8x1024xf32> to vector<8x1024xf32>
    %c48 = arith.constant 48 : index
    %c0_21 = arith.constant 0 : index
    %20 = vector.load %arg4[%c48, %c0_21] : memref<56x1024xf32, #tpu.memory_space<vmem>>, vector<8x1024xf32>
    tpu.vector_store %arg4[%c48, %c0_21], %19 {strides = array<i32>} : memref<56x1024xf32, #tpu.memory_space<vmem>>, vector<8x1024xf32>,
    %c0_22 = arith.constant 0 : index
    %c0_23 = arith.constant 0 : index
    %21 = vector.load %arg2[%c0_22, %c0_23] : memref<24x56xf32, #tpu.memory_space<vmem>>, vector<24x56xf32>
    %c0_24 = arith.constant 0 : index
    %c0_25 = arith.constant 0 : index
    %22 = vector.load %arg4[%c0_24, %c0_25] : memref<56x1024xf32, #tpu.memory_space<vmem>>, vector<56x1024xf32>
    %cst = arith.constant dense<0.000000e+00> : vector<24x1024xf32>
    %23 = tpu.matmul %21, %22, %cst {dimension_numbers = #tpu.dot_dimension_numbers<[1], [0], [0], [1], [0, 0, 1, 1], [], []>, precision = #tpu.contract_precision<fp32>} : vector<24x56xf32>, vector<56x1024xf32>, vector<24x1024xf32> -> vector<24x1024xf32>
    %c0_26 = arith.constant 0 : index
    %c0_27 = arith.constant 0 : index
    %c0_28 = arith.constant 0 : index
    %24 = vector.load %arg3[%c0_26, %c0_27, %c0_28] : memref<1x24x1024xf32, #tpu.memory_space<vmem>>, vector<1x24x1024xf32>
    %25 = vector.shape_cast %24 : vector<1x24x1024xf32> to vector<24x1024xf32>
    %26 = vector.shape_cast %23 : vector<24x1024xf32> to vector<1x24x1024xf32>
    tpu.vector_store %arg3[%c0_26, %c0_27, %c0_28], %26 {strides = array<i32>} : memref<1x24x1024xf32, #tpu.memory_space<vmem>>, vector<1x24x1024xf32>,
    return
  }
  func.func @transform_0(%arg0: i32) -> (i32, i32, i32) {
    %c0_i32 = arith.constant 0 : i32
    %c0_i32_0 = arith.constant 0 : i32
    %c0_i32_1 = arith.constant 0 : i32
    return %arg0, %c0_i32, %c0_i32_0 : i32, i32, i32
  }
  func.func @transform_1(%arg0: i32) -> (i32, i32) {
    %c0_i32 = arith.constant 0 : i32
    %c0_i32_0 = arith.constant 0 : i32
    %c0_i32_1 = arith.constant 0 : i32
    return %c0_i32, %c0_i32_0 : i32, i32
  }
  func.func @transform_2(%arg0: i32) -> (i32, i32, i32) {
    %c0_i32 = arith.constant 0 : i32
    %c0_i32_0 = arith.constant 0 : i32
    %c0_i32_1 = arith.constant 0 : i32
    return %arg0, %c0_i32, %c0_i32_0 : i32, i32, i32
  }
}

</mosaic_0001>

<llo_original>
// kernel: stride_conv_forward.1
$region0: #{stride_conv_forward.1}
  #allocation0 [shape = 'u32[]', space=smem, size = 0x4, offset = 0x4, fixed_abs, tag = 'smem constant byte address 0x4 - core index']
  #allocation1 [shape = 'u32[144,128]{1,0:T(1,128)}', space=vmem, size = 0x12000, scoped, tag = 'internal scratch']
  #allocation2 [shape = 'f32[56,1024]{1,0:T(8,128)}', space=vmem, size = 0x38000, scoped, tag = 'scratch operand']
  %s0 = inlined_call_operand.vmem [shape: f32[2,8,1152], index: 0, kind: input, shape index: {}]
  %s1 = inlined_call_operand.vmem [shape: f32[24,56], index: 1, kind: input, shape index: {}]
  %s2 = inlined_call_operand.vmem [shape: f32[2,24,1024], index: 2, kind: output, shape index: {}]
  %s3 = sld [smem:[#allocation0]]
  $region41: #{stride_conv_forward.1} parent=0
    _
  %s5 = ssub.s32 1, %s3
  %s6 = scalar_select 0, %s5, %s3
  loop: start=0, step=1, limit=4
  $region2: #{stride_conv_forward.1} parent=0 // loop_pre_header
    _
  $region3: #{stride_conv_forward.1} parent=0 // loop_header
    %s8 = sphi 0, %s12
    %p9 = scmp.ge.s32.totalorder %s8, 4
    %s18 = sphi 0, %s20
    %s21 = sphi 0, %s18
    %s22 = sphi 0, %s21
    %s38 = sphi 0, %s22
    %s42 = sphi 0, %s42
    %s44 = sphi 0, %s42
    %s45 = sphi 0, %s44
    %s59 = sphi 0, %s45
    %s65 = sphi 0, %s67
    %s68 = sphi 0, %s65
    %s69 = sphi 0, %s68
    %s85 = sphi 0, %s69
  $region4: #{stride_conv_forward.1} parent=0 // loop_header_branch
    %11 = sbr.rel (%p9) target = $region8
  $region5: #{stride_conv_forward.1} parent=0 // loop_body
    %s13 = ssub.s32 %s8, 1
    %s14 = ssub.s32 %s8, 2
    %s15 = sadd.s32 %s8, 1
    %s16 = ssub.s32 %s8, %s15
    %p17 = scmp.eq.s32.totalorder %s16, 0
    %s19 = sadd.s32 %s18, 1
    %s20 = scalar_select %p17, %s18, %s19
    %p23 = pneg %p17
    %p24 = scmp.eq.s32.totalorder %s8, 1
    %p25 = por %p23, %p24
    %p26 = scmp.ne.s32.totalorder %s18, %s21
    %p27 = scmp.eq.s32.totalorder %s8, 0
    %p28 = por %p26, %p27
    %p29 = scmp.ne.s32.totalorder %s18, %s21
    %p30 = scmp.eq.s32.totalorder %s13, 1
    %p31 = por %p29, %p30
    %p32 = scmp.ne.s32.totalorder %s21, %s22
    %p33 = scmp.eq.s32.totalorder %s13, 0
    %p34 = por %p32, %p33
    %p35 = scmp.ne.s32.totalorder %s21, %s22
    %p36 = scmp.eq.s32.totalorder %s14, 1
    %p37 = por %p35, %p36
    %p39 = scmp.ne.s32.totalorder %s22, %s38
    %p40 = scmp.eq.s32.totalorder %s14, 0
    %p41 = por %p39, %p40
    %s43 = sadd.s32 %s42, 1
    %p46 = scmp.eq.s32.totalorder %s8, 1
    %p47 = scmp.ne.s32.totalorder %s42, %s44
    %p48 = scmp.eq.s32.totalorder %s8, 0
    %p49 = por %p47, %p48
    %p50 = scmp.ne.s32.totalorder %s42, %s44
    %p51 = scmp.eq.s32.totalorder %s13, 1
    %p52 = por %p50, %p51
    %p53 = scmp.ne.s32.totalorder %s44, %s45
    %p54 = scmp.eq.s32.totalorder %s13, 0
    %p55 = por %p53, %p54
    %p56 = scmp.ne.s32.totalorder %s44, %s45
    %p57 = scmp.eq.s32.totalorder %s14, 1
    %p58 = por %p56, %p57
    %p60 = scmp.ne.s32.totalorder %s45, %s59
    %p61 = scmp.eq.s32.totalorder %s14, 0
    %p62 = por %p60, %p61
    %s63 = ssub.s32 %s8, %s15
    %p64 = scmp.eq.s32.totalorder %s63, 0
    %s66 = sadd.s32 %s65, 1
    %s67 = scalar_select %p64, %s65, %s66
    %p70 = pneg %p64
    %p71 = scmp.eq.s32.totalorder %s8, 1
    %p72 = por %p70, %p71
    %p73 = scmp.ne.s32.totalorder %s65, %s68
    %p74 = scmp.eq.s32.totalorder %s8, 0
    %p75 = por %p73, %p74
    %p76 = scmp.ne.s32.totalorder %s65, %s68
    %p77 = scmp.eq.s32.totalorder %s13, 1
    %p78 = por %p76, %p77
    %p79 = scmp.ne.s32.totalorder %s68, %s69
    %p80 = scmp.eq.s32.totalorder %s13, 0
    %p81 = por %p79, %p80
    %p82 = scmp.ne.s32.totalorder %s68, %s69
    %p83 = scmp.eq.s32.totalorder %s14, 1
    %p84 = por %p82, %p83
    %p86 = scmp.ne.s32.totalorder %s69, %s85
    %p87 = scmp.eq.s32.totalorder %s14, 0
    %p88 = por %p86, %p87
    %p89 = scmp.le.s32.totalorder 1, %s8
    %p90 = scmp.lt.s32.totalorder %s8, 3
    %p91 = pnand %p89, %p90
    %p92 = pneg %p91
    // Predicated region
    $region9: #{stride_conv_forward.1} parent=5 // pred_check
      _
    $region10: #{stride_conv_forward.1} parent=5 // pred_check_branch
      %94 = sbr.rel (%p91) target = $region12
    $region11: #{stride_conv_forward.1} parent=5 // pred_region
      %s95 = ssub.s32 %s8, 1
      // Predicated region
      $region13: #{stride_conv_forward.1} parent=11 // pred_check
        %p96 = pneg %p55
      $region14: #{stride_conv_forward.1} parent=11 // pred_check_branch
        %98 = sbr.rel (%p96) target = $region16
      $region15: #{stride_conv_forward.1} parent=11 // pred_region
        _
      $region16: #{stride_conv_forward.1} parent=11 // pred_fallthru
        _
    $region12: #{stride_conv_forward.1} parent=5 // pred_fallthru
      _
    %p99 = scmp.lt.s32.totalorder %s8, 2
    // Predicated region
    $region17: #{stride_conv_forward.1} parent=5 // pred_check
      %p100 = pneg %p99
    $region18: #{stride_conv_forward.1} parent=5 // pred_check_branch
      %102 = sbr.rel (%p100) target = $region20
    $region19: #{stride_conv_forward.1} parent=5 // pred_region
      // Predicated region
      $region21: #{stride_conv_forward.1} parent=19 // pred_check
        %p103 = pneg %p28
      $region22: #{stride_conv_forward.1} parent=19 // pred_check_branch
        %105 = sbr.rel (%p103) target = $region24
      $region23: #{stride_conv_forward.1} parent=19 // pred_region
        %p106 = scmp.lt.s32.totalorder %s8, 1
        %s107 = scalar_select %p106, %s8, 1
        %s108 = smul.addr %s107, 9
        %s109 = smul.addr %s108, 8
        %s110 = scalar_lea.vmem %s0, %s109
      $region24: #{stride_conv_forward.1} parent=19 // pred_fallthru
        _
    $region20: #{stride_conv_forward.1} parent=5 // pred_fallthru
      _
    %p111 = scmp.le.s32.totalorder 1, %s8
    %p112 = scmp.lt.s32.totalorder %s8, 3
    %p113 = pnand %p111, %p112
    %p114 = pneg %p113
    // Predicated region
    $region25: #{stride_conv_forward.1} parent=5 // pred_check
      _
    $region26: #{stride_conv_forward.1} parent=5 // pred_check_branch
      %116 = sbr.rel (%p113) target = $region28
    $region27: #{stride_conv_forward.1} parent=5 // pred_region
      %s117 = ssub.s32 %s8, 1
      %p118 = scmp.lt.s32.totalorder %s13, 1
      %s119 = scalar_select %p118, %s13, 1
      %s120 = smul.addr %s119, 9
      %s121 = smul.addr %s120, 8
      %s122 = scalar_lea.vmem %s0, %s121
      %p123 = pneg %p34
      %p124 = pneg %p31
      %p125 = pneg %p55
      %p126 = pneg %p52
      %p127 = pneg %p81
      %p128 = pneg %p78
      %p129 = scmp.lt.s32.totalorder %s13, 1
      %s130 = scalar_select %p129, %s13, 1
      %s131 = smul.addr %s130, 24
      %s132 = smul.addr %s131, 8
      %s133 = scalar_lea.vmem %s2, %s132
      %p134 = scmp.lt.s32.totalorder %s13, 1
      %s135 = scalar_select %p134, %s13, 1
      %s136 = smul.addr %s135, 9
      %s137 = smul.addr %s136, 8
      %s138 = scalar_lea.vmem %s0, %s137
      %p139 = scmp.lt.s32.totalorder %s13, 1
      %s140 = scalar_select %p139, %s13, 1
      %s141 = smul.addr %s140, 24
      %s142 = smul.addr %s141, 8
      %s143 = scalar_lea.vmem %s2, %s142
      %v144 = vld [vmem:[%s138] sm:$0xff]
      %v145 = vld [vmem:[%s138 + $0x8] sm:$0xff]
      %v146 = vld [vmem:[%s138 + $0x10] sm:$0xff]
      %v147 = vld [vmem:[%s138 + $0x18] sm:$0xff]
      %v148 = vld [vmem:[%s138 + $0x20] sm:$0xff]
      %v149 = vld [vmem:[%s138 + $0x28] sm:$0xff]
      %v150 = vld [vmem:[%s138 + $0x30] sm:$0xff]
      %v151 = vld [vmem:[%s138 + $0x38] sm:$0xff]
      %152 = vst [vmem:[#allocation2] sm:$0xff] %v144
      %153 = vst [vmem:[#allocation2 + $0x8] sm:$0xff] %v145
      %154 = vst [vmem:[#allocation2 + $0x10] sm:$0xff] %v146
      %155 = vst [vmem:[#allocation2 + $0x18] sm:$0xff] %v147
      %156 = vst [vmem:[#allocation2 + $0x20] sm:$0xff] %v148
      %157 = vst [vmem:[#allocation2 + $0x28] sm:$0xff] %v149
      %158 = vst [vmem:[#allocation2 + $0x30] sm:$0xff] %v150
      %159 = vst [vmem:[#allocation2 + $0x38] sm:$0xff] %v151
      %v160 = vld [vmem:[%s138] sm:$0xff]
      %v161 = vld [vmem:[%s138 + $0x8] sm:$0xff]
      %v162 = vld [vmem:[%s138 + $0x10] sm:$0xff]
      %v163 = vld [vmem:[%s138 + $0x18] sm:$0xff]
      %v164 = vld [vmem:[%s138 + $0x20] sm:$0xff]
      %v165 = vld [vmem:[%s138 + $0x28] sm:$0xff]
      %v166 = vld [vmem:[%s138 + $0x30] sm:$0xff]
      %v167 = vld [vmem:[%s138 + $0x38] sm:$0xff]
      %v168 = vld [vmem:[%s138 + $0x40] sm:$0xff]
      %178 = vrot.lane.b32.xlu0 %v160, 127
      %v179 = vpop.permute.xlu0 %178
      %180 = vrot.lane.b32.xlu0 %v161, 127
      %v181 = vpop.permute.xlu0 %180
      %182 = vrot.lane.b32.xlu0 %v162, 127
      %v183 = vpop.permute.xlu0 %182
      %184 = vrot.lane.b32.xlu0 %v163, 127
      %v185 = vpop.permute.xlu0 %184
      %186 = vrot.lane.b32.xlu0 %v164, 127
      %v187 = vpop.permute.xlu0 %186
      %188 = vrot.lane.b32.xlu0 %v165, 127
      %v189 = vpop.permute.xlu0 %188
      %190 = vrot.lane.b32.xlu0 %v166, 127
      %v191 = vpop.permute.xlu0 %190
      %192 = vrot.lane.b32.xlu0 %v167, 127
      %v193 = vpop.permute.xlu0 %192
      %194 = vrot.lane.b32.xlu0 %v168, 127
      %v195 = vpop.permute.xlu0 %194
      %vm196 = vcmask 1039360
      %v197 = vsel %vm196, %v179, %v181
      %v198 = vsel %vm196, %v181, %v183
      %v199 = vsel %vm196, %v183, %v185
      %v200 = vsel %vm196, %v185, %v187
      %v201 = vsel %vm196, %v187, %v189
      %v202 = vsel %vm196, %v189, %v191
      %v203 = vsel %vm196, %v191, %v193
      %v204 = vsel %vm196, %v193, %v195
      %213 = vst [vmem:[#allocation2 + $0x40] sm:$0xff] %v197
      %214 = vst [vmem:[#allocation2 + $0x48] sm:$0xff] %v198
      %215 = vst [vmem:[#allocation2 + $0x50] sm:$0xff] %v199
      %216 = vst [vmem:[#allocation2 + $0x58] sm:$0xff] %v200
      %217 = vst [vmem:[#allocation2 + $0x60] sm:$0xff] %v201
      %218 = vst [vmem:[#allocation2 + $0x68] sm:$0xff] %v202
      %219 = vst [vmem:[#allocation2 + $0x70] sm:$0xff] %v203
      %220 = vst [vmem:[#allocation2 + $0x78] sm:$0xff] %v204
      %v221 = vld [vmem:[%s138] sm:$0xff]
      %v222 = vld [vmem:[%s138 + $0x8] sm:$0xff]
      %v223 = vld [vmem:[%s138 + $0x10] sm:$0xff]
      %v224 = vld [vmem:[%s138 + $0x18] sm:$0xff]
      %v225 = vld [vmem:[%s138 + $0x20] sm:$0xff]
      %v226 = vld [vmem:[%s138 + $0x28] sm:$0xff]
      %v227 = vld [vmem:[%s138 + $0x30] sm:$0xff]
      %v228 = vld [vmem:[%s138 + $0x38] sm:$0xff]
      %v229 = vld [vmem:[%s138 + $0x40] sm:$0xff]
      %239 = vrot.lane.b32.xlu0 %v221, 110
      %v240 = vpop.permute.xlu0 %239
      %241 = vrot.lane.b32.xlu0 %v222, 110
      %v242 = vpop.permute.xlu0 %241
      %243 = vrot.lane.b32.xlu0 %v223, 110
      %v244 = vpop.permute.xlu0 %243
      %245 = vrot.lane.b32.xlu0 %v224, 110
      %v246 = vpop.permute.xlu0 %245
      %247 = vrot.lane.b32.xlu0 %v225, 110
      %v248 = vpop.permute.xlu0 %247
      %249 = vrot.lane.b32.xlu0 %v226, 110
      %v250 = vpop.permute.xlu0 %249
      %251 = vrot.lane.b32.xlu0 %v227, 110
      %v252 = vpop.permute.xlu0 %251
      %253 = vrot.lane.b32.xlu0 %v228, 110
      %v254 = vpop.permute.xlu0 %253
      %255 = vrot.lane.b32.xlu0 %v229, 110
      %v256 = vpop.permute.xlu0 %255
      %vm257 = vcmask 900096
      %v258 = vsel %vm257, %v240, %v242
      %v259 = vsel %vm257, %v242, %v244
      %v260 = vsel %vm257, %v244, %v246
      %v261 = vsel %vm257, %v246, %v248
      %v262 = vsel %vm257, %v248, %v250
      %v263 = vsel %vm257, %v250, %v252
      %v264 = vsel %vm257, %v252, %v254
      %v265 = vsel %vm257, %v254, %v256
      %274 = vst [vmem:[#allocation2 + $0x80] sm:$0xff] %v258
      %275 = vst [vmem:[#allocation2 + $0x88] sm:$0xff] %v259
      %276 = vst [vmem:[#allocation2 + $0x90] sm:$0xff] %v260
      %277 = vst [vmem:[#allocation2 + $0x98] sm:$0xff] %v261
      %278 = vst [vmem:[#allocation2 + $0xa0] sm:$0xff] %v262
      %279 = vst [vmem:[#allocation2 + $0xa8] sm:$0xff] %v263
      %280 = vst [vmem:[#allocation2 + $0xb0] sm:$0xff] %v264
      %281 = vst [vmem:[#allocation2 + $0xb8] sm:$0xff] %v265
      %v282 = vld [vmem:[%s138] sm:$0xff]
      %v283 = vld [vmem:[%s138 + $0x8] sm:$0xff]
      %v284 = vld [vmem:[%s138 + $0x10] sm:$0xff]
      %v285 = vld [vmem:[%s138 + $0x18] sm:$0xff]
      %v286 = vld [vmem:[%s138 + $0x20] sm:$0xff]
      %v287 = vld [vmem:[%s138 + $0x28] sm:$0xff]
      %v288 = vld [vmem:[%s138 + $0x30] sm:$0xff]
      %v289 = vld [vmem:[%s138 + $0x38] sm:$0xff]
      %v290 = vld [vmem:[%s138 + $0x40] sm:$0xff]
      %300 = vrot.lane.b32.xlu0 %v282, 109
      %v301 = vpop.permute.xlu0 %300
      %302 = vrot.lane.b32.xlu0 %v283, 109
      %v303 = vpop.permute.xlu0 %302
      %304 = vrot.lane.b32.xlu0 %v284, 109
      %v305 = vpop.permute.xlu0 %304
      %306 = vrot.lane.b32.xlu0 %v285, 109
      %v307 = vpop.permute.xlu0 %306
      %308 = vrot.lane.b32.xlu0 %v286, 109
      %v309 = vpop.permute.xlu0 %308
      %310 = vrot.lane.b32.xlu0 %v287, 109
      %v311 = vpop.permute.xlu0 %310
      %312 = vrot.lane.b32.xlu0 %v288, 109
      %v313 = vpop.permute.xlu0 %312
      %314 = vrot.lane.b32.xlu0 %v289, 109
      %v315 = vpop.permute.xlu0 %314
      %316 = vrot.lane.b32.xlu0 %v290, 109
      %v317 = vpop.permute.xlu0 %316
      %vm318 = vcmask 891904
      %v319 = vsel %vm318, %v301, %v303
      %v320 = vsel %vm318, %v303, %v305
      %v321 = vsel %vm318, %v305, %v307
      %v322 = vsel %vm318, %v307, %v309
      %v323 = vsel %vm318, %v309, %v311
      %v324 = vsel %vm318, %v311, %v313
      %v325 = vsel %vm318, %v313, %v315
      %v326 = vsel %vm318, %v315, %v317
      %335 = vst [vmem:[#allocation2 + $0xc0] sm:$0xff] %v319
      %336 = vst [vmem:[#allocation2 + $0xc8] sm:$0xff] %v320
      %337 = vst [vmem:[#allocation2 + $0xd0] sm:$0xff] %v321
      %338 = vst [vmem:[#allocation2 + $0xd8] sm:$0xff] %v322
      %339 = vst [vmem:[#allocation2 + $0xe0] sm:$0xff] %v323
      %340 = vst [vmem:[#allocation2 + $0xe8] sm:$0xff] %v324
      %341 = vst [vmem:[#allocation2 + $0xf0] sm:$0xff] %v325
      %342 = vst [vmem:[#allocation2 + $0xf8] sm:$0xff] %v326
      %v343 = vld [vmem:[%s138] sm:$0xff]
      %v344 = vld [vmem:[%s138 + $0x8] sm:$0xff]
      %v345 = vld [vmem:[%s138 + $0x10] sm:$0xff]
      %v346 = vld [vmem:[%s138 + $0x18] sm:$0xff]
      %v347 = vld [vmem:[%s138 + $0x20] sm:$0xff]
      %v348 = vld [vmem:[%s138 + $0x28] sm:$0xff]
      %v349 = vld [vmem:[%s138 + $0x30] sm:$0xff]
      %v350 = vld [vmem:[%s138 + $0x38] sm:$0xff]
      %v351 = vld [vmem:[%s138 + $0x40] sm:$0xff]
      %361 = vrot.lane.b32.xlu0 %v343, 108
      %v362 = vpop.permute.xlu0 %361
      %363 = vrot.lane.b32.xlu0 %v344, 108
      %v364 = vpop.permute.xlu0 %363
      %365 = vrot.lane.b32.xlu0 %v345, 108
      %v366 = vpop.permute.xlu0 %365
      %367 = vrot.lane.b32.xlu0 %v346, 108
      %v368 = vpop.permute.xlu0 %367
      %369 = vrot.lane.b32.xlu0 %v347, 108
      %v370 = vpop.permute.xlu0 %369
      %371 = vrot.lane.b32.xlu0 %v348, 108
      %v372 = vpop.permute.xlu0 %371
      %373 = vrot.lane.b32.xlu0 %v349, 108
      %v374 = vpop.permute.xlu0 %373
      %375 = vrot.lane.b32.xlu0 %v350, 108
      %v376 = vpop.permute.xlu0 %375
      %377 = vrot.lane.b32.xlu0 %v351, 108
      %v378 = vpop.permute.xlu0 %377
      %vm379 = vcmask 883712
      %v380 = vsel %vm379, %v362, %v364
      %v381 = vsel %vm379, %v364, %v366
      %v382 = vsel %vm379, %v366, %v368
      %v383 = vsel %vm379, %v368, %v370
      %v384 = vsel %vm379, %v370, %v372
      %v385 = vsel %vm379, %v372, %v374
      %v386 = vsel %vm379, %v374, %v376
      %v387 = vsel %vm379, %v376, %v378
      %396 = vst [vmem:[#allocation2 + $0x100] sm:$0xff] %v380
      %397 = vst [vmem:[#allocation2 + $0x108] sm:$0xff] %v381
      %398 = vst [vmem:[#allocation2 + $0x110] sm:$0xff] %v382
      %399 = vst [vmem:[#allocation2 + $0x118] sm:$0xff] %v383
      %400 = vst [vmem:[#allocation2 + $0x120] sm:$0xff] %v384
      %401 = vst [vmem:[#allocation2 + $0x128] sm:$0xff] %v385
      %402 = vst [vmem:[#allocation2 + $0x130] sm:$0xff] %v386
      %403 = vst [vmem:[#allocation2 + $0x138] sm:$0xff] %v387
      %v404 = vld [vmem:[%s138] sm:$0xff]
      %v405 = vld [vmem:[%s138 + $0x8] sm:$0xff]
      %v406 = vld [vmem:[%s138 + $0x10] sm:$0xff]
      %v407 = vld [vmem:[%s138 + $0x18] sm:$0xff]
      %v408 = vld [vmem:[%s138 + $0x20] sm:$0xff]
      %v409 = vld [vmem:[%s138 + $0x28] sm:$0xff]
      %v410 = vld [vmem:[%s138 + $0x30] sm:$0xff]
      %v411 = vld [vmem:[%s138 + $0x38] sm:$0xff]
      %v412 = vld [vmem:[%s138 + $0x40] sm:$0xff]
      %422 = vrot.lane.b32.xlu0 %v404, 91
      %v423 = vpop.permute.xlu0 %422
      %424 = vrot.lane.b32.xlu0 %v405, 91
      %v425 = vpop.permute.xlu0 %424
      %426 = vrot.lane.b32.xlu0 %v406, 91
      %v427 = vpop.permute.xlu0 %426
      %428 = vrot.lane.b32.xlu0 %v407, 91
      %v429 = vpop.permute.xlu0 %428
      %430 = vrot.lane.b32.xlu0 %v408, 91
      %v431 = vpop.permute.xlu0 %430
      %432 = vrot.lane.b32.xlu0 %v409, 91
      %v433 = vpop.permute.xlu0 %432
      %434 = vrot.lane.b32.xlu0 %v410, 91
      %v435 = vpop.permute.xlu0 %434
      %436 = vrot.lane.b32.xlu0 %v411, 91
      %v437 = vpop.permute.xlu0 %436
      %438 = vrot.lane.b32.xlu0 %v412, 91
      %v439 = vpop.permute.xlu0 %438
      %vm440 = vcmask 744448
      %v441 = vsel %vm440, %v423, %v425
      %v442 = vsel %vm440, %v425, %v427
      %v443 = vsel %vm440, %v427, %v429
      %v444 = vsel %vm440, %v429, %v431
      %v445 = vsel %vm440, %v431, %v433
      %v446 = vsel %vm440, %v433, %v435
      %v447 = vsel %vm440, %v435, %v437
      %v448 = vsel %vm440, %v437, %v439
      %457 = vst [vmem:[#allocation2 + $0x140] sm:$0xff] %v441
      %458 = vst [vmem:[#allocation2 + $0x148] sm:$0xff] %v442
      %459 = vst [vmem:[#allocation2 + $0x150] sm:$0xff] %v443
      %460 = vst [vmem:[#allocation2 + $0x158] sm:$0xff] %v444
      %461 = vst [vmem:[#allocation2 + $0x160] sm:$0xff] %v445
      %462 = vst [vmem:[#allocation2 + $0x168] sm:$0xff] %v446
      %463 = vst [vmem:[#allocation2 + $0x170] sm:$0xff] %v447
      %464 = vst [vmem:[#allocation2 + $0x178] sm:$0xff] %v448
      %v465 = vld [vmem:[%s138] sm:$0xff]
      %v466 = vld [vmem:[%s138 + $0x8] sm:$0xff]
      %v467 = vld [vmem:[%s138 + $0x10] sm:$0xff]
      %v468 = vld [vmem:[%s138 + $0x18] sm:$0xff]
      %v469 = vld [vmem:[%s138 + $0x20] sm:$0xff]
      %v470 = vld [vmem:[%s138 + $0x28] sm:$0xff]
      %v471 = vld [vmem:[%s138 + $0x30] sm:$0xff]
      %v472 = vld [vmem:[%s138 + $0x38] sm:$0xff]
      %v473 = vld [vmem:[%s138 + $0x40] sm:$0xff]
      %483 = vrot.lane.b32.xlu0 %v465, 90
      %v484 = vpop.permute.xlu0 %483
      %485 = vrot.lane.b32.xlu0 %v466, 90
      %v486 = vpop.permute.xlu0 %485
      %487 = vrot.lane.b32.xlu0 %v467, 90
      %v488 = vpop.permute.xlu0 %487
      %489 = vrot.lane.b32.xlu0 %v468, 90
      %v490 = vpop.permute.xlu0 %489
      %491 = vrot.lane.b32.xlu0 %v469, 90
      %v492 = vpop.permute.xlu0 %491
      %493 = vrot.lane.b32.xlu0 %v470, 90
      %v494 = vpop.permute.xlu0 %493
      %495 = vrot.lane.b32.xlu0 %v471, 90
      %v496 = vpop.permute.xlu0 %495
      %497 = vrot.lane.b32.xlu0 %v472, 90
      %v498 = vpop.permute.xlu0 %497
      %499 = vrot.lane.b32.xlu0 %v473, 90
      %v500 = vpop.permute.xlu0 %499
      %vm501 = vcmask 736256
      %v502 = vsel %vm501, %v484, %v486
      %v503 = vsel %vm501, %v486, %v488
      %v504 = vsel %vm501, %v488, %v490
      %v505 = vsel %vm501, %v490, %v492
      %v506 = vsel %vm501, %v492, %v494
      %v507 = vsel %vm501, %v494, %v496
      %v508 = vsel %vm501, %v496, %v498
      %v509 = vsel %vm501, %v498, %v500
      %518 = vst [vmem:[#allocation2 + $0x180] sm:$0xff] %v502
      %519 = vst [vmem:[#allocation2 + $0x188] sm:$0xff] %v503
      %520 = vst [vmem:[#allocation2 + $0x190] sm:$0xff] %v504
      %521 = vst [vmem:[#allocation2 + $0x198] sm:$0xff] %v505
      %522 = vst [vmem:[#allocation2 + $0x1a0] sm:$0xff] %v506
      %523 = vst [vmem:[#allocation2 + $0x1a8] sm:$0xff] %v507
      %524 = vst [vmem:[#allocation2 + $0x1b0] sm:$0xff] %v508
      %525 = vst [vmem:[#allocation2 + $0x1b8] sm:$0xff] %v509
      %v526 = vld [vmem:[%s1] sm:$0xff]
      %v527 = vld [vmem:[%s1 + $0x8] sm:$0xff]
      %v528 = vld [vmem:[%s1 + $0x10] sm:$0xff]
      %v529 = vld [vmem:[#allocation2] sm:$0xff]
      %v530 = vld [vmem:[#allocation2 + $0x8] sm:$0xff]
      %v531 = vld [vmem:[#allocation2 + $0x10] sm:$0xff]
      %v532 = vld [vmem:[#allocation2 + $0x18] sm:$0xff]
      %v533 = vld [vmem:[#allocation2 + $0x20] sm:$0xff]
      %v534 = vld [vmem:[#allocation2 + $0x28] sm:$0xff]
      %v535 = vld [vmem:[#allocation2 + $0x30] sm:$0xff]
      %v536 = vld [vmem:[#allocation2 + $0x38] sm:$0xff]
      %v537 = vld [vmem:[#allocation2 + $0x40] sm:$0xff]
      %v538 = vld [vmem:[#allocation2 + $0x48] sm:$0xff]
      %v539 = vld [vmem:[#allocation2 + $0x50] sm:$0xff]
      %v540 = vld [vmem:[#allocation2 + $0x58] sm:$0xff]
      %v541 = vld [vmem:[#allocation2 + $0x60] sm:$0xff]
      %v542 = vld [vmem:[#allocation2 + $0x68] sm:$0xff]
      %v543 = vld [vmem:[#allocation2 + $0x70] sm:$0xff]
      %v544 = vld [vmem:[#allocation2 + $0x78] sm:$0xff]
      %v545 = vld [vmem:[#allocation2 + $0x80] sm:$0xff]
      %v546 = vld [vmem:[#allocation2 + $0x88] sm:$0xff]
      %v547 = vld [vmem:[#allocation2 + $0x90] sm:$0xff]
      %v548 = vld [vmem:[#allocation2 + $0x98] sm:$0xff]
      %v549 = vld [vmem:[#allocation2 + $0xa0] sm:$0xff]
      %v550 = vld [vmem:[#allocation2 + $0xa8] sm:$0xff]
      %v551 = vld [vmem:[#allocation2 + $0xb0] sm:$0xff]
      %v552 = vld [vmem:[#allocation2 + $0xb8] sm:$0xff]
      %v553 = vld [vmem:[#allocation2 + $0xc0] sm:$0xff]
      %v554 = vld [vmem:[#allocation2 + $0xc8] sm:$0xff]
      %v555 = vld [vmem:[#allocation2 + $0xd0] sm:$0xff]
      %v556 = vld [vmem:[#allocation2 + $0xd8] sm:$0xff]
      %v557 = vld [vmem:[#allocation2 + $0xe0] sm:$0xff]
      %v558 = vld [vmem:[#allocation2 + $0xe8] sm:$0xff]
      %v559 = vld [vmem:[#allocation2 + $0xf0] sm:$0xff]
      %v560 = vld [vmem:[#allocation2 + $0xf8] sm:$0xff]
      %v561 = vld [vmem:[#allocation2 + $0x100] sm:$0xff]
      %v562 = vld [vmem:[#allocation2 + $0x108] sm:$0xff]
      %v563 = vld [vmem:[#allocation2 + $0x110] sm:$0xff]
      %v564 = vld [vmem:[#allocation2 + $0x118] sm:$0xff]
      %v565 = vld [vmem:[#allocation2 + $0x120] sm:$0xff]
      %v566 = vld [vmem:[#allocation2 + $0x128] sm:$0xff]
      %v567 = vld [vmem:[#allocation2 + $0x130] sm:$0xff]
      %v568 = vld [vmem:[#allocation2 + $0x138] sm:$0xff]
      %v569 = vld [vmem:[#allocation2 + $0x140] sm:$0xff]
      %v570 = vld [vmem:[#allocation2 + $0x148] sm:$0xff]
      %v571 = vld [vmem:[#allocation2 + $0x150] sm:$0xff]
      %v572 = vld [vmem:[#allocation2 + $0x158] sm:$0xff]
      %v573 = vld [vmem:[#allocation2 + $0x160] sm:$0xff]
      %v574 = vld [vmem:[#allocation2 + $0x168] sm:$0xff]
      %v575 = vld [vmem:[#allocation2 + $0x170] sm:$0xff]
      %v576 = vld [vmem:[#allocation2 + $0x178] sm:$0xff]
      %v577 = vld [vmem:[#allocation2 + $0x180] sm:$0xff]
      %v578 = vld [vmem:[#allocation2 + $0x188] sm:$0xff]
      %v579 = vld [vmem:[#allocation2 + $0x190] sm:$0xff]
      %v580 = vld [vmem:[#allocation2 + $0x198] sm:$0xff]
      %v581 = vld [vmem:[#allocation2 + $0x1a0] sm:$0xff]
      %v582 = vld [vmem:[#allocation2 + $0x1a8] sm:$0xff]
      %v583 = vld [vmem:[#allocation2 + $0x1b0] sm:$0xff]
      %v584 = vld [vmem:[#allocation2 + $0x1b8] sm:$0xff]
      %vm585 = vcmask 457728
      %v587 = vsel %vm585, %v526, 0
      %v590 = vsel %vm585, %v527, 0
      %v593 = vsel %vm585, %v528, 0
      %v595 = vand.u32 %v530, 4294901760
      %596 = vmatprep.subr.mxu0 %v595
      %v597 = vand.u32 %v529, 4294901760
      %598 = vmatpush1.msra.mxu0 %v597
      %v599 = vand.u32 %v538, 4294901760
      %600 = vmatprep.subr.mxu0 %v599
      %v601 = vand.u32 %v537, 4294901760
      %602 = vmatpush1.msra.mxu0 %v601
      %v603 = vand.u32 %v546, 4294901760
      %604 = vmatprep.subr.mxu0 %v603
      %v605 = vand.u32 %v545, 4294901760
      %606 = vmatpush1.msra.mxu0 %v605
      %v607 = vand.u32 %v554, 4294901760
      %608 = vmatprep.subr.mxu0 %v607
      %v609 = vand.u32 %v553, 4294901760
      %610 = vmatpush1.msra.mxu0 %v609
      %v611 = vand.u32 %v562, 4294901760
      %612 = vmatprep.subr.mxu0 %v611
      %v613 = vand.u32 %v561, 4294901760
      %614 = vmatpush1.msra.mxu0 %v613
      %v615 = vand.u32 %v570, 4294901760
      %616 = vmatprep.subr.mxu0 %v615
      %v617 = vand.u32 %v569, 4294901760
      %618 = vmatpush1.msra.mxu0 %v617
      %v619 = vand.u32 %v578, 4294901760
      %620 = vmatprep.subr.mxu0 %v619
      %v621 = vand.u32 %v577, 4294901760
      %622 = vmatpush1.msra.mxu0 %v621
      %623 = vmatprep.subr.mxu0 0.0
      %624 = vmatpush1.msra.mxu0 0.0
      %625 = vmatprep.subr.mxu0 0.0
      %626 = vmatpush1.msra.mxu0 0.0
      %627 = vmatprep.subr.mxu0 0.0
      %628 = vmatpush1.msra.mxu0 0.0
      %629 = vmatprep.subr.mxu0 0.0
      %630 = vmatpush1.msra.mxu0 0.0
      %631 = vmatprep.subr.mxu0 0.0
      %632 = vmatpush1.msra.mxu0 0.0
      %633 = vmatprep.subr.mxu0 0.0
      %634 = vmatpush1.msra.mxu0 0.0
      %635 = vmatprep.subr.mxu0 0.0
      %636 = vmatpush1.msra.mxu0 0.0
      %637 = vmatprep.subr.mxu0 0.0
      %638 = vmatpush1.msra.mxu0 0.0
      %639 = vmatprep.subr.mxu0 0.0
      %640 = vmatpush1.msra.mxu0 0.0
      %641 = vmatprep.subr.mxu0 0.0
      %642 = vmatpush1.msra.mxu0 0.0
      %643 = vmatprep.subr.mxu0 0.0
      %644 = vmatpush1.msra.mxu0 0.0
      %645 = vmatprep.subr.mxu0 0.0
      %646 = vmatpush1.msra.mxu0 0.0
      %647 = vmatprep.subr.mxu0 0.0
      %648 = vmatpush1.msra.mxu0 0.0
      %649 = vmatprep.subr.mxu0 0.0
      %650 = vmatpush1.msra.mxu0 0.0
      %651 = vmatprep.subr.mxu0 0.0
      %652 = vmatpush1.msra.mxu0 0.0
      %653 = vmatprep.subr.mxu0 0.0
      %654 = vmatpush1.msra.mxu0 0.0
      %655 = vmatprep.subr.mxu0 0.0
      %656 = vmatpush1.msra.mxu0 0.0
      %657 = vmatprep.subr.mxu0 0.0
      %658 = vmatpush1.msra.mxu0 0.0
      %659 = vmatprep.subr.mxu0 0.0
      %660 = vmatpush1.msra.mxu0 0.0
      %661 = vmatprep.subr.mxu0 0.0
      %662 = vmatpush1.msra.mxu0 0.0
      %663 = vmatprep.subr.mxu0 0.0
      %664 = vmatpush1.msra.mxu0 0.0
      %665 = vmatprep.subr.mxu0 0.0
      %666 = vmatpush1.msra.mxu0 0.0
      %667 = vmatprep.subr.mxu0 0.0
      %668 = vmatpush1.msra.mxu0 0.0
      %669 = vmatprep.subr.mxu0 0.0
      %670 = vmatpush1.msra.mxu0 0.0
      %671 = vmatprep.subr.mxu0 0.0
      %672 = vmatpush1.msra.mxu0 0.0
      %673 = vmatprep.mubr.f32.mxu0 0.0
      %v674 = vand.u32 %v587, 4294901760
      %v675 = vsub.f32 %v587, %v674
      %v676 = vand.u32 %v675, 4294901760
      %v677 = vsub.f32 %v675, %v676
      %v678 = vand.u32 %v677, 4294901760
      %679 = vmatmul.mubr.f32.gmra.mrb[0].mxu0 %v678
      %v680 = vpop.f32.mrb[0].mxu0
      %v681 = vadd.f32 0.0, %v680
      %v682 = vpop.f32.mrb[0].mxu0
      %v683 = vadd.f32 0.0, %v682
      %684 = vmatprep.mubr.f32.mxu0 0.0
      %v685 = vand.u32 %v590, 4294901760
      %v686 = vsub.f32 %v590, %v685
      %v687 = vand.u32 %v686, 4294901760
      %v688 = vsub.f32 %v686, %v687
      %v689 = vand.u32 %v688, 4294901760
      %690 = vmatmul.mubr.f32.gmra.mrb[0].mxu0 %v689
      %v691 = vpop.f32.mrb[0].mxu0
      %v692 = vadd.f32 0.0, %v691
      %v693 = vpop.f32.mrb[0].mxu0
      %v694 = vadd.f32 0.0, %v693
      %695 = vmatprep.mubr.f32.mxu0 0.0
      %v696 = vand.u32 %v593, 4294901760
      %v697 = vsub.f32 %v593, %v696
      %v698 = vand.u32 %v697, 4294901760
      %v699 = vsub.f32 %v697, %v698
      %v700 = vand.u32 %v699, 4294901760
      %701 = vmatmul.mubr.f32.gmra.mrb[0].mxu0 %v700
      %v702 = vpop.f32.mrb[0].mxu0
      %v703 = vadd.f32 0.0, %v702
      %v704 = vpop.f32.mrb[0].mxu0
      %v705 = vadd.f32 0.0, %v704
      %706 = vdwg.mxu0
      %v707 = vand.u32 %v530, 4294901760
      %v708 = vsub.f32 %v530, %v707
      %v709 = vand.u32 %v708, 4294901760
      %v710 = vsub.f32 %v708, %v709
      %v711 = vand.u32 %v710, 4294901760
      %712 = vmatprep.subr.mxu0 %v711
      %v713 = vand.u32 %v529, 4294901760
      %v714 = vsub.f32 %v529, %v713
      %v715 = vand.u32 %v714, 4294901760
      %v716 = vsub.f32 %v714, %v715
      %v717 = vand.u32 %v716, 4294901760
      %718 = vmatpush1.msra.mxu0 %v717
      %v719 = vand.u32 %v538, 4294901760
      %v720 = vsub.f32 %v538, %v719
      %v721 = vand.u32 %v720, 4294901760
      %v722 = vsub.f32 %v720, %v721
      %v723 = vand.u32 %v722, 4294901760
      %724 = vmatprep.subr.mxu0 %v723
      %v725 = vand.u32 %v537, 4294901760
      %v726 = vsub.f32 %v537, %v725
      %v727 = vand.u32 %v726, 4294901760
      %v728 = vsub.f32 %v726, %v727
      %v729 = vand.u32 %v728, 4294901760
      %730 = vmatpush1.msra.mxu0 %v729
      %v731 = vand.u32 %v546, 4294901760
      %v732 = vsub.f32 %v546, %v731
      %v733 = vand.u32 %v732, 4294901760
      %v734 = vsub.f32 %v732, %v733
      %v735 = vand.u32 %v734, 4294901760
      %736 = vmatprep.subr.mxu0 %v735
      %v737 = vand.u32 %v545, 4294901760
      %v738 = vsub.f32 %v545, %v737
      %v739 = vand.u32 %v738, 4294901760
      %v740 = vsub.f32 %v738, %v739
      %v741 = vand.u32 %v740, 4294901760
      %742 = vmatpush1.msra.mxu0 %v741
      %v743 = vand.u32 %v554, 4294901760
      %v744 = vsub.f32 %v554, %v743
      %v745 = vand.u32 %v744, 4294901760
      %v746 = vsub.f32 %v744, %v745
      %v747 = vand.u32 %v746, 4294901760
      %748 = vmatprep.subr.mxu0 %v747
      %v749 = vand.u32 %v553, 4294901760
      %v750 = vsub.f32 %v553, %v749
      %v751 = vand.u32 %v750, 4294901760
      %v752 = vsub.f32 %v750, %v751
      %v753 = vand.u32 %v752, 4294901760
      %754 = vmatpush1.msra.mxu0 %v753
      %v755 = vand.u32 %v562, 4294901760
      %v756 = vsub.f32 %v562, %v755
      %v757 = vand.u32 %v756, 4294901760
      %v758 = vsub.f32 %v756, %v757
      %v759 = vand.u32 %v758, 4294901760
      %760 = vmatprep.subr.mxu0 %v759
      %v761 = vand.u32 %v561, 4294901760
      %v762 = vsub.f32 %v561, %v761
      %v763 = vand.u32 %v762, 4294901760
      %v764 = vsub.f32 %v762, %v763
      %v765 = vand.u32 %v764, 4294901760
      %766 = vmatpush1.msra.mxu0 %v765
      %v767 = vand.u32 %v570, 4294901760
      %v768 = vsub.f32 %v570, %v767
      %v769 = vand.u32 %v768, 4294901760
      %v770 = vsub.f32 %v768, %v769
      %v771 = vand.u32 %v770, 4294901760
      %772 = vmatprep.subr.mxu0 %v771
      %v773 = vand.u32 %v569, 4294901760
      %v774 = vsub.f32 %v569, %v773
      %v775 = vand.u32 %v774, 4294901760
      %v776 = vsub.f32 %v774, %v775
      %v777 = vand.u32 %v776, 4294901760
      %778 = vmatpush1.msra.mxu0 %v777
      %v779 = vand.u32 %v578, 4294901760
      %v780 = vsub.f32 %v578, %v779
      %v781 = vand.u32 %v780, 4294901760
      %v782 = vsub.f32 %v780, %v781
      %v783 = vand.u32 %v782, 4294901760
      %784 = vmatprep.subr.mxu0 %v783
      %v785 = vand.u32 %v577, 4294901760
      %v786 = vsub.f32 %v577, %v785
      %v787 = vand.u32 %v786, 4294901760
      %v788 = vsub.f32 %v786, %v787
      %v789 = vand.u32 %v788, 4294901760
      %790 = vmatpush1.msra.mxu0 %v789
      %791 = vmatprep.subr.mxu0 0.0
      %792 = vmatpush1.msra.mxu0 0.0
      %793 = vmatprep.subr.mxu0 0.0
      %794 = vmatpush1.msra.mxu0 0.0
      %795 = vmatprep.subr.mxu0 0.0
      %796 = vmatpush1.msra.mxu0 0.0
      %797 = vmatprep.subr.mxu0 0.0
      %798 = vmatpush1.msra.mxu0 0.0
      %799 = vmatprep.subr.mxu0 0.0
      %800 = vmatpush1.msra.mxu0 0.0
      %801 = vmatprep.subr.mxu0 0.0
      %802 = vmatpush1.msra.mxu0 0.0
      %803 = vmatprep.subr.mxu0 0.0
      %804 = vmatpush1.msra.mxu0 0.0
      %805 = vmatprep.subr.mxu0 0.0
      %806 = vmatpush1.msra.mxu0 0.0
      %807 = vmatprep.subr.mxu0 0.0
      %808 = vmatpush1.msra.mxu0 0.0
      %809 = vmatprep.subr.mxu0 0.0
      %810 = vmatpush1.msra.mxu0 0.0
      %811 = vmatprep.subr.mxu0 0.0
      %812 = vmatpush1.msra.mxu0 0.0
      %813 = vmatprep.subr.mxu0 0.0
      %814 = vmatpush1.msra.mxu0 0.0
      %815 = vmatprep.subr.mxu0 0.0
      %816 = vmatpush1.msra.mxu0 0.0
      %817 = vmatprep.subr.mxu0 0.0
      %818 = vmatpush1.msra.mxu0 0.0
      %819 = vmatprep.subr.mxu0 0.0
      %820 = vmatpush1.msra.mxu0 0.0
      %821 = vmatprep.subr.mxu0 0.0
      %822 = vmatpush1.msra.mxu0 0.0
      %823 = vmatprep.subr.mxu0 0.0
      %824 = vmatpush1.msra.mxu0 0.0
      %825 = vmatprep.subr.mxu0 0.0
      %826 = vmatpush1.msra.mxu0 0.0
      %827 = vmatprep.subr.mxu0 0.0
      %828 = vmatpush1.msra.mxu0 0.0
      %829 = vmatprep.subr.mxu0 0.0
      %830 = vmatpush1.msra.mxu0 0.0
      %831 = vmatprep.subr.mxu0 0.0
      %832 = vmatpush1.msra.mxu0 0.0
      %833 = vmatprep.subr.mxu0 0.0
      %834 = vmatpush1.msra.mxu0 0.0
      %835 = vmatprep.subr.mxu0 0.0
      %836 = vmatpush1.msra.mxu0 0.0
      %837 = vmatprep.subr.mxu0 0.0
      %838 = vmatpush1.msra.mxu0 0.0
      %839 = vmatprep.subr.mxu0 0.0
      %840 = vmatpush1.msra.mxu0 0.0
      %841 = vmatprep.mubr.f32.mxu0 0.0
      %v842 = vand.u32 %v587, 4294901760
      %843 = vmatmul.mubr.f32.gmra.mrb[0].mxu0 %v842
      %v844 = vpop.f32.mrb[0].mxu0
      %v845 = vadd.f32 %v681, %v844
      %v846 = vpop.f32.mrb[0].mxu0
      %v847 = vadd.f32 %v683, %v846
      %848 = vmatprep.mubr.f32.mxu0 0.0
      %v849 = vand.u32 %v590, 4294901760
      %850 = vmatmul.mubr.f32.gmra.mrb[0].mxu0 %v849
      %v851 = vpop.f32.mrb[0].mxu0
      %v852 = vadd.f32 %v692, %v851
      %v853 = vpop.f32.mrb[0].mxu0
      %v854 = vadd.f32 %v694, %v853
      %855 = vmatprep.mubr.f32.mxu0 0.0
      %v856 = vand.u32 %v593, 4294901760
      %857 = vmatmul.mubr.f32.gmra.mrb[0].mxu0 %v856
      %v858 = vpop.f32.mrb[0].mxu0
      %v859 = vadd.f32 %v703, %v858
      %v860 = vpop.f32.mrb[0].mxu0
      %v861 = vadd.f32 %v705, %v860
      %862 = vdwg.mxu0
      %v863 = vand.u32 %v530, 4294901760
      %v864 = vsub.f32 %v530, %v863
      %865 = vmatprep.subr.mxu0 %v864
      %v866 = vand.u32 %v529, 4294901760
      %v867 = vsub.f32 %v529, %v866
      %868 = vmatpush1.msra.mxu0 %v867
      %v869 = vand.u32 %v538, 4294901760
      %v870 = vsub.f32 %v538, %v869
      %871 = vmatprep.subr.mxu0 %v870
      %v872 = vand.u32 %v537, 4294901760
      %v873 = vsub.f32 %v537, %v872
      %874 = vmatpush1.msra.mxu0 %v873
      %v875 = vand.u32 %v546, 4294901760
      %v876 = vsub.f32 %v546, %v875
      %877 = vmatprep.subr.mxu0 %v876
      %v878 = vand.u32 %v545, 4294901760
      %v879 = vsub.f32 %v545, %v878
      %880 = vmatpush1.msra.mxu0 %v879
      %v881 = vand.u32 %v554, 4294901760
      %v882 = vsub.f32 %v554, %v881
      %883 = vmatprep.subr.mxu0 %v882
      %v884 = vand.u32 %v553, 4294901760
      %v885 = vsub.f32 %v553, %v884
      %886 = vmatpush1.msra.mxu0 %v885
      %v887 = vand.u32 %v562, 4294901760
      %v888 = vsub.f32 %v562, %v887
      %889 = vmatprep.subr.mxu0 %v888
      %v890 = vand.u32 %v561, 4294901760
      %v891 = vsub.f32 %v561, %v890
      %892 = vmatpush1.msra.mxu0 %v891
      %v893 = vand.u32 %v570, 4294901760
      %v894 = vsub.f32 %v570, %v893
      %895 = vmatprep.subr.mxu0 %v894
      %v896 = vand.u32 %v569, 4294901760
      %v897 = vsub.f32 %v569, %v896
      %898 = vmatpush1.msra.mxu0 %v897
      %v899 = vand.u32 %v578, 4294901760
      %v900 = vsub.f32 %v578, %v899
      %901 = vmatprep.subr.mxu0 %v900
      %v902 = vand.u32 %v577, 4294901760
      %v903 = vsub.f32 %v577, %v902
      %904 = vmatpush1.msra.mxu0 %v903
      %905 = vmatprep.subr.mxu0 0.0
      %906 = vmatpush1.msra.mxu0 0.0
      %907 = vmatprep.subr.mxu0 0.0
      %908 = vmatpush1.msra.mxu0 0.0
      %909 = vmatprep.subr.mxu0 0.0
      %910 = vmatpush1.msra.mxu0 0.0
      %911 = vmatprep.subr.mxu0 0.0
      %912 = vmatpush1.msra.mxu0 0.0
      %913 = vmatprep.subr.mxu0 0.0
      %914 = vmatpush1.msra.mxu0 0.0
      %915 = vmatprep.subr.mxu0 0.0
      %916 = vmatpush1.msra.mxu0 0.0
      %917 = vmatprep.subr.mxu0 0.0
      %918 = vmatpush1.msra.mxu0 0.0
      %919 = vmatprep.subr.mxu0 0.0
      %920 = vmatpush1.msra.mxu0 0.0
      %921 = vmatprep.subr.mxu0 0.0
      %922 = vmatpush1.msra.mxu0 0.0
      %923 = vmatprep.subr.mxu0 0.0
      %924 = vmatpush1.msra.mxu0 0.0
      %925 = vmatprep.subr.mxu0 0.0
      %926 = vmatpush1.msra.mxu0 0.0
      %927 = vmatprep.subr.mxu0 0.0
      %928 = vmatpush1.msra.mxu0 0.0
      %929 = vmatprep.subr.mxu0 0.0
      %930 = vmatpush1.msra.mxu0 0.0
      %931 = vmatprep.subr.mxu0 0.0
      %932 = vmatpush1.msra.mxu0 0.0
      %933 = vmatprep.subr.mxu0 0.0
      %934 = vmatpush1.msra.mxu0 0.0
      %935 = vmatprep.subr.mxu0 0.0
      %936 = vmatpush1.msra.mxu0 0.0
      %937 = vmatprep.subr.mxu0 0.0
      %938 = vmatpush1.msra.mxu0 0.0
      %939 = vmatprep.subr.mxu0 0.0
      %940 = vmatpush1.msra.mxu0 0.0
      %941 = vmatprep.subr.mxu0 0.0
      %942 = vmatpush1.msra.mxu0 0.0
      %943 = vmatprep.subr.mxu0 0.0
      %944 = vmatpush1.msra.mxu0 0.0
      %945 = vmatprep.subr.mxu0 0.0
      %946 = vmatpush1.msra.mxu0 0.0
      %947 = vmatprep.subr.mxu0 0.0
      %948 = vmatpush1.msra.mxu0 0.0
      %949 = vmatprep.subr.mxu0 0.0
      %950 = vmatpush1.msra.mxu0 0.0
      %951 = vmatprep.subr.mxu0 0.0
      %952 = vmatpush1.msra.mxu0 0.0
      %953 = vmatprep.subr.mxu0 0.0
      %954 = vmatpush1.msra.mxu0 0.0
      %955 = vmatprep.mubr.f32.mxu0 0.0
      %v956 = vand.u32 %v587, 4294901760
      %v957 = vsub.f32 %v587, %v956
      %958 = vmatmul.mubr.f32.gmra.mrb[0].mxu0 %v957
      %v959 = vpop.f32.mrb[0].mxu0
      %v960 = vadd.f32 %v845, %v959
      %v961 = vpop.f32.mrb[0].mxu0
      %v962 = vadd.f32 %v847, %v961
      %963 = vmatprep.mubr.f32.mxu0 0.0
      %v964 = vand.u32 %v590, 4294901760
      %v965 = vsub.f32 %v590, %v964
      %966 = vmatmul.mubr.f32.gmra.mrb[0].mxu0 %v965
      %v967 = vpop.f32.mrb[0].mxu0
      %v968 = vadd.f32 %v852, %v967
      %v969 = vpop.f32.mrb[0].mxu0
      %v970 = vadd.f32 %v854, %v969
      %971 = vmatprep.mubr.f32.mxu0 0.0
      %v972 = vand.u32 %v593, 4294901760
      %v973 = vsub.f32 %v593, %v972
      %974 = vmatmul.mubr.f32.gmra.mrb[0].mxu0 %v973
      %v975 = vpop.f32.mrb[0].mxu0
      %v976 = vadd.f32 %v859, %v975
      %v977 = vpop.f32.mrb[0].mxu0
      %v978 = vadd.f32 %v861, %v977
      %979 = vdwg.mxu0
      %v980 = vand.u32 %v530, 4294901760
      %981 = vmatprep.subr.mxu0 %v980
      %v982 = vand.u32 %v529, 4294901760
      %983 = vmatpush1.msra.mxu0 %v982
      %v984 = vand.u32 %v538, 4294901760
      %985 = vmatprep.subr.mxu0 %v984
      %v986 = vand.u32 %v537, 4294901760
      %987 = vmatpush1.msra.mxu0 %v986
      %v988 = vand.u32 %v546, 4294901760
      %989 = vmatprep.subr.mxu0 %v988
      %v990 = vand.u32 %v545, 4294901760
      %991 = vmatpush1.msra.mxu0 %v990
      %v992 = vand.u32 %v554, 4294901760
      %993 = vmatprep.subr.mxu0 %v992
      %v994 = vand.u32 %v553, 4294901760
      %995 = vmatpush1.msra.mxu0 %v994
      %v996 = vand.u32 %v562, 4294901760
      %997 = vmatprep.subr.mxu0 %v996
      %v998 = vand.u32 %v561, 4294901760
      %999 = vmatpush1.msra.mxu0 %v998
      %v1000 = vand.u32 %v570, 4294901760
      %1001 = vmatprep.subr.mxu0 %v1000
      %v1002 = vand.u32 %v569, 4294901760
      %1003 = vmatpush1.msra.mxu0 %v1002
      %v1004 = vand.u32 %v578, 4294901760
      %1005 = vmatprep.subr.mxu0 %v1004
      %v1006 = vand.u32 %v577, 4294901760
      %1007 = vmatpush1.msra.mxu0 %v1006
      %1008 = vmatprep.subr.mxu0 0.0
      %1009 = vmatpush1.msra.mxu0 0.0
      %1010 = vmatprep.subr.mxu0 0.0
      %1011 = vmatpush1.msra.mxu0 0.0
      %1012 = vmatprep.subr.mxu0 0.0
      %1013 = vmatpush1.msra.mxu0 0.0
      %1014 = vmatprep.subr.mxu0 0.0
      %1015 = vmatpush1.msra.mxu0 0.0
      %1016 = vmatprep.subr.mxu0 0.0
      %1017 = vmatpush1.msra.mxu0 0.0
      %1018 = vmatprep.subr.mxu0 0.0
      %1019 = vmatpush1.msra.mxu0 0.0
      %1020 = vmatprep.subr.mxu0 0.0
      %1021 = vmatpush1.msra.mxu0 0.0
      %1022 = vmatprep.subr.mxu0 0.0
      %1023 = vmatpush1.msra.mxu0 0.0
      %1024 = vmatprep.subr.mxu0 0.0
      %1025 = vmatpush1.msra.mxu0 0.0
      %1026 = vmatprep.subr.mxu0 0.0
      %1027 = vmatpush1.msra.mxu0 0.0
      %1028 = vmatprep.subr.mxu0 0.0
      %1029 = vmatpush1.msra.mxu0 0.0
      %1030 = vmatprep.subr.mxu0 0.0
      %1031 = vmatpush1.msra.mxu0 0.0
      %1032 = vmatprep.subr.mxu0 0.0
      %1033 = vmatpush1.msra.mxu0 0.0
      %1034 = vmatprep.subr.mxu0 0.0
      %1035 = vmatpush1.msra.mxu0 0.0
      %1036 = vmatprep.subr.mxu0 0.0
      %1037 = vmatpush1.msra.mxu0 0.0
      %1038 = vmatprep.subr.mxu0 0.0
      %1039 = vmatpush1.msra.mxu0 0.0
      %1040 = vmatprep.subr.mxu0 0.0
      %1041 = vmatpush1.msra.mxu0 0.0
      %1042 = vmatprep.subr.mxu0 0.0
      %1043 = vmatpush1.msra.mxu0 0.0
      %1044 = vmatprep.subr.mxu0 0.0
      %1045 = vmatpush1.msra.mxu0 0.0
      %1046 = vmatprep.subr.mxu0 0.0
      %1047 = vmatpush1.msra.mxu0 0.0
      %1048 = vmatprep.subr.mxu0 0.0
      %1049 = vmatpush1.msra.mxu0 0.0
      %1050 = vmatprep.subr.mxu0 0.0
      %1051 = vmatpush1.msra.mxu0 0.0
      %1052 = vmatprep.subr.mxu0 0.0
      %1053 = vmatpush1.msra.mxu0 0.0
      %1054 = vmatprep.subr.mxu0 0.0
      %1055 = vmatpush1.msra.mxu0 0.0
      %1056 = vmatprep.subr.mxu0 0.0
      %1057 = vmatpush1.msra.mxu0 0.0
      %1058 = vmatprep.mubr.f32.mxu0 0.0
      %v1059 = vand.u32 %v587, 4294901760
      %v1060 = vsub.f32 %v587, %v1059
      %v1061 = vand.u32 %v1060, 4294901760
      %1062 = vmatmul.mubr.f32.gmra.mrb[0].mxu0 %v1061
      %v1063 = vpop.f32.mrb[0].mxu0
      %v1064 = vadd.f32 %v960, %v1063
      %v1065 = vpop.f32.mrb[0].mxu0
      %v1066 = vadd.f32 %v962, %v1065
      %1067 = vmatprep.mubr.f32.mxu0 0.0
      %v1068 = vand.u32 %v590, 4294901760
      %v1069 = vsub.f32 %v590, %v1068
      %v1070 = vand.u32 %v1069, 4294901760
      %1071 = vmatmul.mubr.f32.gmra.mrb[0].mxu0 %v1070
      %v1072 = vpop.f32.mrb[0].mxu0
      %v1073 = vadd.f32 %v968, %v1072
      %v1074 = vpop.f32.mrb[0].mxu0
      %v1075 = vadd.f32 %v970, %v1074
      %1076 = vmatprep.mubr.f32.mxu0 0.0
      %v1077 = vand.u32 %v593, 4294901760
      %v1078 = vsub.f32 %v593, %v1077
      %v1079 = vand.u32 %v1078, 4294901760
      %1080 = vmatmul.mubr.f32.gmra.mrb[0].mxu0 %v1079
      %v1081 = vpop.f32.mrb[0].mxu0
      %v1082 = vadd.f32 %v976, %v1081
      %v1083 = vpop.f32.mrb[0].mxu0
      %v1084 = vadd.f32 %v978, %v1083
      %1085 = vdwg.mxu0
      %v1086 = vand.u32 %v530, 4294901760
      %v1087 = vsub.f32 %v530, %v1086
      %v1088 = vand.u32 %v1087, 4294901760
      %1089 = vmatprep.subr.mxu0 %v1088
      %v1090 = vand.u32 %v529, 4294901760
      %v1091 = vsub.f32 %v529, %v1090
      %v1092 = vand.u32 %v1091, 4294901760
      %1093 = vmatpush1.msra.mxu0 %v1092
      %v1094 = vand.u32 %v538, 4294901760
      %v1095 = vsub.f32 %v538, %v1094
      %v1096 = vand.u32 %v1095, 4294901760
      %1097 = vmatprep.subr.mxu0 %v1096
      %v1098 = vand.u32 %v537, 4294901760
      %v1099 = vsub.f32 %v537, %v1098
      %v1100 = vand.u32 %v1099, 4294901760
      %1101 = vmatpush1.msra.mxu0 %v1100
      %v1102 = vand.u32 %v546, 4294901760
      %v1103 = vsub.f32 %v546, %v1102
      %v1104 = vand.u32 %v1103, 4294901760
      %1105 = vmatprep.subr.mxu0 %v1104
      %v1106 = vand.u32 %v545, 4294901760
      %v1107 = vsub.f32 %v545, %v1106
      %v1108 = vand.u32 %v1107, 4294901760
      %1109 = vmatpush1.msra.mxu0 %v1108
      %v1110 = vand.u32 %v554, 4294901760
      %v1111 = vsub.f32 %v554, %v1110
      %v1112 = vand.u32 %v1111, 4294901760
      %1113 = vmatprep.subr.mxu0 %v1112
      %v1114 = vand.u32 %v553, 4294901760
      %v1115 = vsub.f32 %v553, %v1114
      %v1116 = vand.u32 %v1115, 4294901760
      %1117 = vmatpush1.msra.mxu0 %v1116
      %v1118 = vand.u32 %v562, 4294901760
      %v1119 = vsub.f32 %v562, %v1118
      %v1120 = vand.u32 %v1119, 4294901760
      %1121 = vmatprep.subr.mxu0 %v1120
      %v1122 = vand.u32 %v561, 4294901760
      %v1123 = vsub.f32 %v561, %v1122
      %v1124 = vand.u32 %v1123, 4294901760
      %1125 = vmatpush1.msra.mxu0 %v1124
      %v1126 = vand.u32 %v570, 4294901760
      %v1127 = vsub.f32 %v570, %v1126
      %v1128 = vand.u32 %v1127, 4294901760
      %1129 = vmatprep.subr.mxu0 %v1128
      %v1130 = vand.u32 %v569, 4294901760
      %v1131 = vsub.f32 %v569, %v1130
      %v1132 = vand.u32 %v1131, 4294901760
      %1133 = vmatpush1.msra.mxu0 %v1132
      %v1134 = vand.u32 %v578, 4294901760
      %v1135 = vsub.f32 %v578, %v1134
      %v1136 = vand.u32 %v1135, 4294901760
      %1137 = vmatprep.subr.mxu0 %v1136
      %v1138 = vand.u32 %v577, 4294901760
      %v1139 = vsub.f32 %v577, %v1138
      %v1140 = vand.u32 %v1139, 4294901760
      %1141 = vmatpush1.msra.mxu0 %v1140
      %1142 = vmatprep.subr.mxu0 0.0
      %1143 = vmatpush1.msra.mxu0 0.0
      %1144 = vmatprep.subr.mxu0 0.0
      %1145 = vmatpush1.msra.mxu0 0.0
      %1146 = vmatprep.subr.mxu0 0.0
      %1147 = vmatpush1.msra.mxu0 0.0
      %1148 = vmatprep.subr.mxu0 0.0
      %1149 = vmatpush1.msra.mxu0 0.0
      %1150 = vmatprep.subr.mxu0 0.0
      %1151 = vmatpush1.msra.mxu0 0.0
      %1152 = vmatprep.subr.mxu0 0.0
      %1153 = vmatpush1.msra.mxu0 0.0
      %1154 = vmatprep.subr.mxu0 0.0
      %1155 = vmatpush1.msra.mxu0 0.0
      %1156 = vmatprep.subr.mxu0 0.0
      %1157 = vmatpush1.msra.mxu0 0.0
      %1158 = vmatprep.subr.mxu0 0.0
      %1159 = vmatpush1.msra.mxu0 0.0
      %1160 = vmatprep.subr.mxu0 0.0
      %1161 = vmatpush1.msra.mxu0 0.0
      %1162 = vmatprep.subr.mxu0 0.0
      %1163 = vmatpush1.msra.mxu0 0.0
      %1164 = vmatprep.subr.mxu0 0.0
      %1165 = vmatpush1.msra.mxu0 0.0
      %1166 = vmatprep.subr.mxu0 0.0
      %1167 = vmatpush1.msra.mxu0 0.0
      %1168 = vmatprep.subr.mxu0 0.0
      %1169 = vmatpush1.msra.mxu0 0.0
      %1170 = vmatprep.subr.mxu0 0.0
      %1171 = vmatpush1.msra.mxu0 0.0
      %1172 = vmatprep.subr.mxu0 0.0
      %1173 = vmatpush1.msra.mxu0 0.0
      %1174 = vmatprep.subr.mxu0 0.0
      %1175 = vmatpush1.msra.mxu0 0.0
      %1176 = vmatprep.subr.mxu0 0.0
      %1177 = vmatpush1.msra.mxu0 0.0
      %1178 = vmatprep.subr.mxu0 0.0
      %1179 = vmatpush1.msra.mxu0 0.0
      %1180 = vmatprep.subr.mxu0 0.0
      %1181 = vmatpush1.msra.mxu0 0.0
      %1182 = vmatprep.subr.mxu0 0.0
      %1183 = vmatpush1.msra.mxu0 0.0
      %1184 = vmatprep.subr.mxu0 0.0
      %1185 = vmatpush1.msra.mxu0 0.0
      %1186 = vmatprep.subr.mxu0 0.0
      %1187 = vmatpush1.msra.mxu0 0.0
      %1188 = vmatprep.subr.mxu0 0.0
      %1189 = vmatpush1.msra.mxu0 0.0
      %1190 = vmatprep.subr.mxu0 0.0
      %1191 = vmatpush1.msra.mxu0 0.0
      %1192 = vmatprep.mubr.f32.mxu0 0.0
      %v1193 = vand.u32 %v587, 4294901760
      %1194 = vmatmul.mubr.f32.gmra.mrb[0].mxu0 %v1193
      %v1195 = vpop.f32.mrb[0].mxu0
      %v1196 = vadd.f32 %v1064, %v1195
      %v1197 = vpop.f32.mrb[0].mxu0
      %v1198 = vadd.f32 %v1066, %v1197
      %1199 = vmatprep.mubr.f32.mxu0 0.0
      %v1200 = vand.u32 %v590, 4294901760
      %1201 = vmatmul.mubr.f32.gmra.mrb[0].mxu0 %v1200
      %v1202 = vpop.f32.mrb[0].mxu0
      %v1203 = vadd.f32 %v1073, %v1202
      %v1204 = vpop.f32.mrb[0].mxu0
      %v1205 = vadd.f32 %v1075, %v1204
      %1206 = vmatprep.mubr.f32.mxu0 0.0
      %v1207 = vand.u32 %v593, 4294901760
      %1208 = vmatmul.mubr.f32.gmra.mrb[0].mxu0 %v1207
      %v1209 = vpop.f32.mrb[0].mxu0
      %v1210 = vadd.f32 %v1082, %v1209
      %v1211 = vpop.f32.mrb[0].mxu0
      %v1212 = vadd.f32 %v1084, %v1211
      %1213 = vdwg.mxu0
      %v1214 = vand.u32 %v530, 4294901760
      %1215 = vmatprep.subr.mxu0 %v1214
      %v1216 = vand.u32 %v529, 4294901760
      %1217 = vmatpush1.msra.mxu0 %v1216
      %v1218 = vand.u32 %v538, 4294901760
      %1219 = vmatprep.subr.mxu0 %v1218
      %v1220 = vand.u32 %v537, 4294901760
      %1221 = vmatpush1.msra.mxu0 %v1220
      %v1222 = vand.u32 %v546, 4294901760
      %1223 = vmatprep.subr.mxu0 %v1222
      %v1224 = vand.u32 %v545, 4294901760
      %1225 = vmatpush1.msra.mxu0 %v1224
      %v1226 = vand.u32 %v554, 4294901760
      %1227 = vmatprep.subr.mxu0 %v1226
      %v1228 = vand.u32 %v553, 4294901760
      %1229 = vmatpush1.msra.mxu0 %v1228
      %v1230 = vand.u32 %v562, 4294901760
      %1231 = vmatprep.subr.mxu0 %v1230
      %v1232 = vand.u32 %v561, 4294901760
      %1233 = vmatpush1.msra.mxu0 %v1232
      %v1234 = vand.u32 %v570, 4294901760
      %1235 = vmatprep.subr.mxu0 %v1234
      %v1236 = vand.u32 %v569, 4294901760
      %1237 = vmatpush1.msra.mxu0 %v1236
      %v1238 = vand.u32 %v578, 4294901760
      %1239 = vmatprep.subr.mxu0 %v1238
      %v1240 = vand.u32 %v577, 4294901760
      %1241 = vmatpush1.msra.mxu0 %v1240
      %1242 = vmatprep.subr.mxu0 0.0
      %1243 = vmatpush1.msra.mxu0 0.0
      %1244 = vmatprep.subr.mxu0 0.0
      %1245 = vmatpush1.msra.mxu0 0.0
      %1246 = vmatprep.subr.mxu0 0.0
      %1247 = vmatpush1.msra.mxu0 0.0
      %1248 = vmatprep.subr.mxu0 0.0
      %1249 = vmatpush1.msra.mxu0 0.0
      %1250 = vmatprep.subr.mxu0 0.0
      %1251 = vmatpush1.msra.mxu0 0.0
      %1252 = vmatprep.subr.mxu0 0.0
      %1253 = vmatpush1.msra.mxu0 0.0
      %1254 = vmatprep.subr.mxu0 0.0
      %1255 = vmatpush1.msra.mxu0 0.0
      %1256 = vmatprep.subr.mxu0 0.0
      %1257 = vmatpush1.msra.mxu0 0.0
      %1258 = vmatprep.subr.mxu0 0.0
      %1259 = vmatpush1.msra.mxu0 0.0
      %1260 = vmatprep.subr.mxu0 0.0
      %1261 = vmatpush1.msra.mxu0 0.0
      %1262 = vmatprep.subr.mxu0 0.0
      %1263 = vmatpush1.msra.mxu0 0.0
      %1264 = vmatprep.subr.mxu0 0.0
      %1265 = vmatpush1.msra.mxu0 0.0
      %1266 = vmatprep.subr.mxu0 0.0
      %1267 = vmatpush1.msra.mxu0 0.0
      %1268 = vmatprep.subr.mxu0 0.0
      %1269 = vmatpush1.msra.mxu0 0.0
      %1270 = vmatprep.subr.mxu0 0.0
      %1271 = vmatpush1.msra.mxu0 0.0
      %1272 = vmatprep.subr.mxu0 0.0
      %1273 = vmatpush1.msra.mxu0 0.0
      %1274 = vmatprep.subr.mxu0 0.0
      %1275 = vmatpush1.msra.mxu0 0.0
      %1276 = vmatprep.subr.mxu0 0.0
      %1277 = vmatpush1.msra.mxu0 0.0
      %1278 = vmatprep.subr.mxu0 0.0
      %1279 = vmatpush1.msra.mxu0 0.0
      %1280 = vmatprep.subr.mxu0 0.0
      %1281 = vmatpush1.msra.mxu0 0.0
      %1282 = vmatprep.subr.mxu0 0.0
      %1283 = vmatpush1.msra.mxu0 0.0
      %1284 = vmatprep.subr.mxu0 0.0
      %1285 = vmatpush1.msra.mxu0 0.0
      %1286 = vmatprep.subr.mxu0 0.0
      %1287 = vmatpush1.msra.mxu0 0.0
      %1288 = vmatprep.subr.mxu0 0.0
      %1289 = vmatpush1.msra.mxu0 0.0
      %1290 = vmatprep.subr.mxu0 0.0
      %1291 = vmatpush1.msra.mxu0 0.0
      %1292 = vmatprep.mubr.f32.mxu0 0.0
      %v1293 = vand.u32 %v587, 4294901760
      %1294 = vmatmul.mubr.f32.gmra.mrb[0].mxu0 %v1293
      %v1295 = vpop.f32.mrb[0].mxu0
      %v1296 = vadd.f32 %v1196, %v1295
      %v1297 = vpop.f32.mrb[0].mxu0
      %v1298 = vadd.f32 %v1198, %v1297
      %1299 = vmatprep.mubr.f32.mxu0 0.0
      %v1300 = vand.u32 %v590, 4294901760
      %1301 = vmatmul.mubr.f32.gmra.mrb[0].mxu0 %v1300
      %v1302 = vpop.f32.mrb[0].mxu0
      %v1303 = vadd.f32 %v1203, %v1302
      %v1304 = vpop.f32.mrb[0].mxu0
      %v1305 = vadd.f32 %v1205, %v1304
      %1306 = vmatprep.mubr.f32.mxu0 0.0
      %v1307 = vand.u32 %v593, 4294901760
      %1308 = vmatmul.mubr.f32.gmra.mrb[0].mxu0 %v1307
      %v1309 = vpop.f32.mrb[0].mxu0
      %v1310 = vadd.f32 %v1210, %v1309
      %v1311 = vpop.f32.mrb[0].mxu0
      %v1312 = vadd.f32 %v1212, %v1311
      %1313 = vdwg.mxu0
      %v1314 = vand.u32 %v532, 4294901760
      %1315 = vmatprep.subr.mxu0 %v1314
      %v1316 = vand.u32 %v531, 4294901760
      %1317 = vmatpush1.msra.mxu0 %v1316
      %v1318 = vand.u32 %v540, 4294901760
      %1319 = vmatprep.subr.mxu0 %v1318
      %v1320 = vand.u32 %v539, 4294901760
      %1321 = vmatpush1.msra.mxu0 %v1320
      %v1322 = vand.u32 %v548, 4294901760
      %1323 = vmatprep.subr.mxu0 %v1322
      %v1324 = vand.u32 %v547, 4294901760
      %1325 = vmatpush1.msra.mxu0 %v1324
      %v1326 = vand.u32 %v556, 4294901760
      %1327 = vmatprep.subr.mxu0 %v1326
      %v1328 = vand.u32 %v555, 4294901760
      %1329 = vmatpush1.msra.mxu0 %v1328
      %v1330 = vand.u32 %v564, 4294901760
      %1331 = vmatprep.subr.mxu0 %v1330
      %v1332 = vand.u32 %v563, 4294901760
      %1333 = vmatpush1.msra.mxu0 %v1332
      %v1334 = vand.u32 %v572, 4294901760
      %1335 = vmatprep.subr.mxu0 %v1334
      %v1336 = vand.u32 %v571, 4294901760
      %1337 = vmatpush1.msra.mxu0 %v1336
      %v1338 = vand.u32 %v580, 4294901760
      %1339 = vmatprep.subr.mxu0 %v1338
      %v1340 = vand.u32 %v579, 4294901760
      %1341 = vmatpush1.msra.mxu0 %v1340
      %1342 = vmatprep.subr.mxu0 0.0
      %1343 = vmatpush1.msra.mxu0 0.0
      %1344 = vmatprep.subr.mxu0 0.0
      %1345 = vmatpush1.msra.mxu0 0.0
      %1346 = vmatprep.subr.mxu0 0.0
      %1347 = vmatpush1.msra.mxu0 0.0
      %1348 = vmatprep.subr.mxu0 0.0
      %1349 = vmatpush1.msra.mxu0 0.0
      %1350 = vmatprep.subr.mxu0 0.0
      %1351 = vmatpush1.msra.mxu0 0.0
      %1352 = vmatprep.subr.mxu0 0.0
      %1353 = vmatpush1.msra.mxu0 0.0
      %1354 = vmatprep.subr.mxu0 0.0
      %1355 = vmatpush1.msra.mxu0 0.0
      %1356 = vmatprep.subr.mxu0 0.0
      %1357 = vmatpush1.msra.mxu0 0.0
      %1358 = vmatprep.subr.mxu0 0.0
      %1359 = vmatpush1.msra.mxu0 0.0
      %1360 = vmatprep.subr.mxu0 0.0
      %1361 = vmatpush1.msra.mxu0 0.0
      %1362 = vmatprep.subr.mxu0 0.0
      %1363 = vmatpush1.msra.mxu0 0.0
      %1364 = vmatprep.subr.mxu0 0.0
      %1365 = vmatpush1.msra.mxu0 0.0
      %1366 = vmatprep.subr.mxu0 0.0
      %1367 = vmatpush1.msra.mxu0 0.0
      %1368 = vmatprep.subr.mxu0 0.0
      %1369 = vmatpush1.msra.mxu0 0.0
      %1370 = vmatprep.subr.mxu0 0.0
      %1371 = vmatpush1.msra.mxu0 0.0
      %1372 = vmatprep.subr.mxu0 0.0
      %1373 = vmatpush1.msra.mxu0 0.0
      %1374 = vmatprep.subr.mxu0 0.0
      %1375 = vmatpush1.msra.mxu0 0.0
      %1376 = vmatprep.subr.mxu0 0.0
      %1377 = vmatpush1.msra.mxu0 0.0
      %1378 = vmatprep.subr.mxu0 0.0
      %1379 = vmatpush1.msra.mxu0 0.0
      %1380 = vmatprep.subr.mxu0 0.0
      %1381 = vmatpush1.msra.mxu0 0.0
      %1382 = vmatprep.subr.mxu0 0.0
      %1383 = vmatpush1.msra.mxu0 0.0
      %1384 = vmatprep.subr.mxu0 0.0
      %1385 = vmatpush1.msra.mxu0 0.0
      %1386 = vmatprep.subr.mxu0 0.0
      %1387 = vmatpush1.msra.mxu0 0.0
      %1388 = vmatprep.subr.mxu0 0.0
      %1389 = vmatpush1.msra.mxu0 0.0
      %1390 = vmatprep.subr.mxu0 0.0
      %1391 = vmatpush1.msra.mxu0 0.0
      %1392 = vmatprep.mubr.f32.mxu0 0.0
      %v1393 = vand.u32 %v587, 4294901760
      %v1394 = vsub.f32 %v587, %v1393
      %v1395 = vand.u32 %v1394, 4294901760
      %v1396 = vsub.f32 %v1394, %v1395
      %v1397 = vand.u32 %v1396, 4294901760
      %1398 = vmatmul.mubr.f32.gmra.mrb[0].mxu0 %v1397
      %v1399 = vpop.f32.mrb[0].mxu0
      %v1400 = vadd.f32 0.0, %v1399
      %v1401 = vpop.f32.mrb[0].mxu0
      %v1402 = vadd.f32 0.0, %v1401
      %1403 = vmatprep.mubr.f32.mxu0 0.0
      %v1404 = vand.u32 %v590, 4294901760
      %v1405 = vsub.f32 %v590, %v1404
      %v1406 = vand.u32 %v1405, 4294901760
      %v1407 = vsub.f32 %v1405, %v1406
      %v1408 = vand.u32 %v1407, 4294901760
      %1409 = vmatmul.mubr.f32.gmra.mrb[0].mxu0 %v1408
      %v1410 = vpop.f32.mrb[0].mxu0
      %v1411 = vadd.f32 0.0, %v1410
      %v1412 = vpop.f32.mrb[0].mxu0
      %v1413 = vadd.f32 0.0, %v1412
      %1414 = vmatprep.mubr.f32.mxu0 0.0
      %v1415 = vand.u32 %v593, 4294901760
      %v1416 = vsub.f32 %v593, %v1415
      %v1417 = vand.u32 %v1416, 4294901760
      %v1418 = vsub.f32 %v1416, %v1417
      %v1419 = vand.u32 %v1418, 4294901760
      %1420 = vmatmul.mubr.f32.gmra.mrb[0].mxu0 %v1419
      %v1421 = vpop.f32.mrb[0].mxu0
      %v1422 = vadd.f32 0.0, %v1421
      %v1423 = vpop.f32.mrb[0].mxu0
      %v1424 = vadd.f32 0.0, %v1423
      %1425 = vdwg.mxu0
      %v1426 = vand.u32 %v532, 4294901760
      %v1427 = vsub.f32 %v532, %v1426
      %v1428 = vand.u32 %v1427, 4294901760
      %v1429 = vsub.f32 %v1427, %v1428
      %v1430 = vand.u32 %v1429, 4294901760
      %1431 = vmatprep.subr.mxu0 %v1430
      %v1432 = vand.u32 %v531, 4294901760
      %v1433 = vsub.f32 %v531, %v1432
      %v1434 = vand.u32 %v1433, 4294901760
      %v1435 = vsub.f32 %v1433, %v1434
      %v1436 = vand.u32 %v1435, 4294901760
      %1437 = vmatpush1.msra.mxu0 %v1436
      %v1438 = vand.u32 %v540, 4294901760
      %v1439 = vsub.f32 %v540, %v1438
      %v1440 = vand.u32 %v1439, 4294901760
      %v1441 = vsub.f32 %v1439, %v1440
      %v1442 = vand.u32 %v1441, 4294901760
      %1443 = vmatprep.subr.mxu0 %v1442
      %v1444 = vand.u32 %v539, 4294901760
      %v1445 = vsub.f32 %v539, %v1444
      %v1446 = vand.u32 %v1445, 4294901760
      %v1447 = vsub.f32 %v1445, %v1446
      %v1448 = vand.u32 %v1447, 4294901760
      %1449 = vmatpush1.msra.mxu0 %v1448
      %v1450 = vand.u32 %v548, 4294901760
      %v1451 = vsub.f32 %v548, %v1450
      %v1452 = vand.u32 %v1451, 4294901760
      %v1453 = vsub.f32 %v1451, %v1452
      %v1454 = vand.u32 %v1453, 4294901760
      %1455 = vmatprep.subr.mxu0 %v1454
      %v1456 = vand.u32 %v547, 4294901760
      %v1457 = vsub.f32 %v547, %v1456
      %v1458 = vand.u32 %v1457, 4294901760
      %v1459 = vsub.f32 %v1457, %v1458
      %v1460 = vand.u32 %v1459, 4294901760
      %1461 = vmatpush1.msra.mxu0 %v1460
      %v1462 = vand.u32 %v556, 4294901760
      %v1463 = vsub.f32 %v556, %v1462
      %v1464 = vand.u32 %v1463, 4294901760
      %v1465 = vsub.f32 %v1463, %v1464
      %v1466 = vand.u32 %v1465, 4294901760
      %1467 = vmatprep.subr.mxu0 %v1466
      %v1468 = vand.u32 %v555, 4294901760
      %v1469 = vsub.f32 %v555, %v1468
      %v1470 = vand.u32 %v1469, 4294901760
      %v1471 = vsub.f32 %v1469, %v1470
      %v1472 = vand.u32 %v1471, 4294901760
      %1473 = vmatpush1.msra.mxu0 %v1472
      %v1474 = vand.u32 %v564, 4294901760
      %v1475 = vsub.f32 %v564, %v1474
      %v1476 = vand.u32 %v1475, 4294901760
      %v1477 = vsub.f32 %v1475, %v1476
      %v1478 = vand.u32 %v1477, 4294901760
      %1479 = vmatprep.subr.mxu0 %v1478
      %v1480 = vand.u32 %v563, 4294901760
      %v1481 = vsub.f32 %v563, %v1480
      %v1482 = vand.u32 %v1481, 4294901760
      %v1483 = vsub.f32 %v1481, %v1482
      %v1484 = vand.u32 %v1483, 4294901760
      %1485 = vmatpush1.msra.mxu0 %v1484
      %v1486 = vand.u32 %v572, 4294901760
      %v1487 = vsub.f32 %v572, %v1486
      %v1488 = vand.u32 %v1487, 4294901760
      %v1489 = vsub.f32 %v1487, %v1488
      %v1490 = vand.u32 %v1489, 4294901760
      %1491 = vmatprep.subr.mxu0 %v1490
      %v1492 = vand.u32 %v571, 4294901760
      %v1493 = vsub.f32 %v571, %v1492
      %v1494 = vand.u32 %v1493, 4294901760
      %v1495 = vsub.f32 %v1493, %v1494
      %v1496 = vand.u32 %v1495, 4294901760
      %1497 = vmatpush1.msra.mxu0 %v1496
      %v1498 = vand.u32 %v580, 4294901760
      %v1499 = vsub.f32 %v580, %v1498
      %v1500 = vand.u32 %v1499, 4294901760
      %v1501 = vsub.f32 %v1499, %v1500
      %v1502 = vand.u32 %v1501, 4294901760
      %1503 = vmatprep.subr.mxu0 %v1502
      %v1504 = vand.u32 %v579, 4294901760
      %v1505 = vsub.f32 %v579, %v1504
      %v1506 = vand.u32 %v1505, 4294901760
      %v1507 = vsub.f32 %v1505, %v1506
      %v1508 = vand.u32 %v1507, 4294901760
      %1509 = vmatpush1.msra.mxu0 %v1508
      %1510 = vmatprep.subr.mxu0 0.0
      %1511 = vmatpush1.msra.mxu0 0.0
      %1512 = vmatprep.subr.mxu0 0.0
      %1513 = vmatpush1.msra.mxu0 0.0
      %1514 = vmatprep.subr.mxu0 0.0
      %1515 = vmatpush1.msra.mxu0 0.0
      %1516 = vmatprep.subr.mxu0 0.0
      %1517 = vmatpush1.msra.mxu0 0.0
      %1518 = vmatprep.subr.mxu0 0.0
      %1519 = vmatpush1.msra.mxu0 0.0
      %1520 = vmatprep.subr.mxu0 0.0
      %1521 = vmatpush1.msra.mxu0 0.0
      %1522 = vmatprep.subr.mxu0 0.0
      %1523 = vmatpush1.msra.mxu0 0.0
      %1524 = vmatprep.subr.mxu0 0.0
      %1525 = vmatpush1.msra.mxu0 0.0
      %1526 = vmatprep.subr.mxu0 0.0
      %1527 = vmatpush1.msra.mxu0 0.0
      %1528 = vmatprep.subr.mxu0 0.0
      %1529 = vmatpush1.msra.mxu0 0.0
      %1530 = vmatprep.subr.mxu0 0.0
      %1531 = vmatpush1.msra.mxu0 0.0
      %1532 = vmatprep.subr.mxu0 0.0
      %1533 = vmatpush1.msra.mxu0 0.0
      %1534 = vmatprep.subr.mxu0 0.0
      %1535 = vmatpush1.msra.mxu0 0.0
      %1536 = vmatprep.subr.mxu0 0.0
      %1537 = vmatpush1.msra.mxu0 0.0
      %1538 = vmatprep.subr.mxu0 0.0
      %1539 = vmatpush1.msra.mxu0 0.0
      %1540 = vmatprep.subr.mxu0 0.0
      %1541 = vmatpush1.msra.mxu0 0.0
      %1542 = vmatprep.subr.mxu0 0.0
      %1543 = vmatpush1.msra.mxu0 0.0
      %1544 = vmatprep.subr.mxu0 0.0
      %1545 = vmatpush1.msra.mxu0 0.0
      %1546 = vmatprep.subr.mxu0 0.0
      %1547 = vmatpush1.msra.mxu0 0.0
      %1548 = vmatprep.subr.mxu0 0.0
      %1549 = vmatpush1.msra.mxu0 0.0
      %1550 = vmatprep.subr.mxu0 0.0
      %1551 = vmatpush1.msra.mxu0 0.0
      %1552 = vmatprep.subr.mxu0 0.0
      %1553 = vmatpush1.msra.mxu0 0.0
      %1554 = vmatprep.subr.mxu0 0.0
      %1555 = vmatpush1.msra.mxu0 0.0
      %1556 = vmatprep.subr.mxu0 0.0
      %1557 = vmatpush1.msra.mxu0 0.0
      %1558 = vmatprep.subr.mxu0 0.0
      %1559 = vmatpush1.msra.mxu0 0.0
      %1560 = vmatprep.mubr.f32.mxu0 0.0
      %v1561 = vand.u32 %v587, 4294901760
      %1562 = vmatmul.mubr.f32.gmra.mrb[0].mxu0 %v1561
      %v1563 = vpop.f32.mrb[0].mxu0
      %v1564 = vadd.f32 %v1400, %v1563
      %v1565 = vpop.f32.mrb[0].mxu0
      %v1566 = vadd.f32 %v1402, %v1565
      %1567 = vmatprep.mubr.f32.mxu0 0.0
      %v1568 = vand.u32 %v590, 4294901760
      %1569 = vmatmul.mubr.f32.gmra.mrb[0].mxu0 %v1568
      %v1570 = vpop.f32.mrb[0].mxu0
      %v1571 = vadd.f32 %v1411, %v1570
      %v1572 = vpop.f32.mrb[0].mxu0
      %v1573 = vadd.f32 %v1413, %v1572
      %1574 = vmatprep.mubr.f32.mxu0 0.0
      %v1575 = vand.u32 %v593, 4294901760
      %1576 = vmatmul.mubr.f32.gmra.mrb[0].mxu0 %v1575
      %v1577 = vpop.f32.mrb[0].mxu0
      %v1578 = vadd.f32 %v1422, %v1577
      %v1579 = vpop.f32.mrb[0].mxu0
      %v1580 = vadd.f32 %v1424, %v1579
      %1581 = vdwg.mxu0
      %v1582 = vand.u32 %v532, 4294901760
      %v1583 = vsub.f32 %v532, %v1582
      %1584 = vmatprep.subr.mxu0 %v1583
      %v1585 = vand.u32 %v531, 4294901760
      %v1586 = vsub.f32 %v531, %v1585
      %1587 = vmatpush1.msra.mxu0 %v1586
      %v1588 = vand.u32 %v540, 4294901760
      %v1589 = vsub.f32 %v540, %v1588
      %1590 = vmatprep.subr.mxu0 %v1589
      %v1591 = vand.u32 %v539, 4294901760
      %v1592 = vsub.f32 %v539, %v1591
      %1593 = vmatpush1.msra.mxu0 %v1592
      %v1594 = vand.u32 %v548, 4294901760
      %v1595 = vsub.f32 %v548, %v1594
      %1596 = vmatprep.subr.mxu0 %v1595
      %v1597 = vand.u32 %v547, 4294901760
      %v1598 = vsub.f32 %v547, %v1597
      %1599 = vmatpush1.msra.mxu0 %v1598
      %v1600 = vand.u32 %v556, 4294901760
      %v1601 = vsub.f32 %v556, %v1600
      %1602 = vmatprep.subr.mxu0 %v1601
      %v1603 = vand.u32 %v555, 4294901760
      %v1604 = vsub.f32 %v555, %v1603
      %1605 = vmatpush1.msra.mxu0 %v1604
      %v1606 = vand.u32 %v564, 4294901760
      %v1607 = vsub.f32 %v564, %v1606
      %1608 = vmatprep.subr.mxu0 %v1607
      %v1609 = vand.u32 %v563, 4294901760
      %v1610 = vsub.f32 %v563, %v1609
      %1611 = vmatpush1.msra.mxu0 %v1610
      %v1612 = vand.u32 %v572, 4294901760
      %v1613 = vsub.f32 %v572, %v1612
      %1614 = vmatprep.subr.mxu0 %v1613
      %v1615 = vand.u32 %v571, 4294901760
      %v1616 = vsub.f32 %v571, %v1615
      %1617 = vmatpush1.msra.mxu0 %v1616
      %v1618 = vand.u32 %v580, 4294901760
      %v1619 = vsub.f32 %v580, %v1618
      %1620 = vmatprep.subr.mxu0 %v1619
      %v1621 = vand.u32 %v579, 4294901760
      %v1622 = vsub.f32 %v579, %v1621
      %1623 = vmatpush1.msra.mxu0 %v1622
      %1624 = vmatprep.subr.mxu0 0.0
      %1625 = vmatpush1.msra.mxu0 0.0
      %1626 = vmatprep.subr.mxu0 0.0
      %1627 = vmatpush1.msra.mxu0 0.0
      %1628 = vmatprep.subr.mxu0 0.0
      %1629 = vmatpush1.msra.mxu0 0.0
      %1630 = vmatprep.subr.mxu0 0.0
      %1631 = vmatpush1.msra.mxu0 0.0
      %1632 = vmatprep.subr.mxu0 0.0
      %1633 = vmatpush1.msra.mxu0 0.0
      %1634 = vmatprep.subr.mxu0 0.0
      %1635 = vmatpush1.msra.mxu0 0.0
      %1636 = vmatprep.subr.mxu0 0.0
      %1637 = vmatpush1.msra.mxu0 0.0
      %1638 = vmatprep.subr.mxu0 0.0
      %1639 = vmatpush1.msra.mxu0 0.0
      %1640 = vmatprep.subr.mxu0 0.0
      %1641 = vmatpush1.msra.mxu0 0.0
      %1642 = vmatprep.subr.mxu0 0.0
      %1643 = vmatpush1.msra.mxu0 0.0
      %1644 = vmatprep.subr.mxu0 0.0
      %1645 = vmatpush1.msra.mxu0 0.0
      %1646 = vmatprep.subr.mxu0 0.0
      %1647 = vmatpush1.msra.mxu0 0.0
      %1648 = vmatprep.subr.mxu0 0.0
      %1649 = vmatpush1.msra.mxu0 0.0
      %1650 = vmatprep.subr.mxu0 0.0
      %1651 = vmatpush1.msra.mxu0 0.0
      %1652 = vmatprep.subr.mxu0 0.0
      %1653 = vmatpush1.msra.mxu0 0.0
      %1654 = vmatprep.subr.mxu0 0.0
      %1655 = vmatpush1.msra.mxu0 0.0
      %1656 = vmatprep.subr.mxu0 0.0
      %1657 = vmatpush1.msra.mxu0 0.0
      %1658 = vmatprep.subr.mxu0 0.0
      %1659 = vmatpush1.msra.mxu0 0.0
      %1660 = vmatprep.subr.mxu0 0.0
      %1661 = vmatpush1.msra.mxu0 0.0
      %1662 = vmatprep.subr.mxu0 0.0
      %1663 = vmatpush1.msra.mxu0 0.0
      %1664 = vmatprep.subr.mxu0 0.0
      %1665 = vmatpush1.msra.mxu0 0.0
      %1666 = vmatprep.subr.mxu0 0.0
      %1667 = vmatpush1.msra.mxu0 0.0
      %1668 = vmatprep.subr.mxu0 0.0
      %1669 = vmatpush1.msra.mxu0 0.0
      %1670 = vmatprep.subr.mxu0 0.0
      %1671 = vmatpush1.msra.mxu0 0.0
      %1672 = vmatprep.subr.mxu0 0.0
      %1673 = vmatpush1.msra.mxu0 0.0
      %1674 = vmatprep.mubr.f32.mxu0 0.0
      %v1675 = vand.u32 %v587, 4294901760
      %v1676 = vsub.f32 %v587, %v1675
      %1677 = vmatmul.mubr.f32.gmra.mrb[0].mxu0 %v1676
      %v1678 = vpop.f32.mrb[0].mxu0
      %v1679 = vadd.f32 %v1564, %v1678
      %v1680 = vpop.f32.mrb[0].mxu0
      %v1681 = vadd.f32 %v1566, %v1680
      %1682 = vmatprep.mubr.f32.mxu0 0.0
      %v1683 = vand.u32 %v590, 4294901760
      %v1684 = vsub.f32 %v590, %v1683
      %1685 = vmatmul.mubr.f32.gmra.mrb[0].mxu0 %v1684
      %v1686 = vpop.f32.mrb[0].mxu0
      %v1687 = vadd.f32 %v1571, %v1686
      %v1688 = vpop.f32.mrb[0].mxu0
      %v1689 = vadd.f32 %v1573, %v1688
      %1690 = vmatprep.mubr.f32.mxu0 0.0
      %v1691 = vand.u32 %v593, 4294901760
      %v1692 = vsub.f32 %v593, %v1691
      %1693 = vmatmul.mubr.f32.gmra.mrb[0].mxu0 %v1692
      %v1694 = vpop.f32.mrb[0].mxu0
      %v1695 = vadd.f32 %v1578, %v1694
      %v1696 = vpop.f32.mrb[0].mxu0
      %v1697 = vadd.f32 %v1580, %v1696
      %1698 = vdwg.mxu0
      %v1699 = vand.u32 %v532, 4294901760
      %1700 = vmatprep.subr.mxu0 %v1699
      %v1701 = vand.u32 %v531, 4294901760
      %1702 = vmatpush1.msra.mxu0 %v1701
      %v1703 = vand.u32 %v540, 4294901760
      %1704 = vmatprep.subr.mxu0 %v1703
      %v1705 = vand.u32 %v539, 4294901760
      %1706 = vmatpush1.msra.mxu0 %v1705
      %v1707 = vand.u32 %v548, 4294901760
      %1708 = vmatprep.subr.mxu0 %v1707
      %v1709 = vand.u32 %v547, 4294901760
      %1710 = vmatpush1.msra.mxu0 %v1709
      %v1711 = vand.u32 %v556, 4294901760
      %1712 = vmatprep.subr.mxu0 %v1711
      %v1713 = vand.u32 %v555, 4294901760
      %1714 = vmatpush1.msra.mxu0 %v1713
      %v1715 = vand.u32 %v564, 4294901760
      %1716 = vmatprep.subr.mxu0 %v1715
      %v1717 = vand.u32 %v563, 4294901760
      %1718 = vmatpush1.msra.mxu0 %v1717
      %v1719 = vand.u32 %v572, 4294901760
      %1720 = vmatprep.subr.mxu0 %v1719
      %v1721 = vand.u32 %v571, 4294901760
      %1722 = vmatpush1.msra.mxu0 %v1721
      %v1723 = vand.u32 %v580, 4294901760
      %1724 = vmatprep.subr.mxu0 %v1723
      %v1725 = vand.u32 %v579, 4294901760
      %1726 = vmatpush1.msra.mxu0 %v1725
      %1727 = vmatprep.subr.mxu0 0.0
      %1728 = vmatpush1.msra.mxu0 0.0
      %1729 = vmatprep.subr.mxu0 0.0
      %1730 = vmatpush1.msra.mxu0 0.0
      %1731 = vmatprep.subr.mxu0 0.0
      %1732 = vmatpush1.msra.mxu0 0.0
      %1733 = vmatprep.subr.mxu0 0.0
      %1734 = vmatpush1.msra.mxu0 0.0
      %1735 = vmatprep.subr.mxu0 0.0
      %1736 = vmatpush1.msra.mxu0 0.0
      %1737 = vmatprep.subr.mxu0 0.0
      %1738 = vmatpush1.msra.mxu0 0.0
      %1739 = vmatprep.subr.mxu0 0.0
      %1740 = vmatpush1.msra.mxu0 0.0
      %1741 = vmatprep.subr.mxu0 0.0
      %1742 = vmatpush1.msra.mxu0 0.0
      %1743 = vmatprep.subr.mxu0 0.0
      %1744 = vmatpush1.msra.mxu0 0.0
      %1745 = vmatprep.subr.mxu0 0.0
      %1746 = vmatpush1.msra.mxu0 0.0
      %1747 = vmatprep.subr.mxu0 0.0
      %1748 = vmatpush1.msra.mxu0 0.0
      %1749 = vmatprep.subr.mxu0 0.0
      %1750 = vmatpush1.msra.mxu0 0.0
      %1751 = vmatprep.subr.mxu0 0.0
      %1752 = vmatpush1.msra.mxu0 0.0
      %1753 = vmatprep.subr.mxu0 0.0
      %1754 = vmatpush1.msra.mxu0 0.0
      %1755 = vmatprep.subr.mxu0 0.0
      %1756 = vmatpush1.msra.mxu0 0.0
      %1757 = vmatprep.subr.mxu0 0.0
      %1758 = vmatpush1.msra.mxu0 0.0
      %1759 = vmatprep.subr.mxu0 0.0
      %1760 = vmatpush1.msra.mxu0 0.0
      %1761 = vmatprep.subr.mxu0 0.0
      %1762 = vmatpush1.msra.mxu0 0.0
      %1763 = vmatprep.subr.mxu0 0.0
      %1764 = vmatpush1.msra.mxu0 0.0
      %1765 = vmatprep.subr.mxu0 0.0
      %1766 = vmatpush1.msra.mxu0 0.0
      %1767 = vmatprep.subr.mxu0 0.0
      %1768 = vmatpush1.msra.mxu0 0.0
      %1769 = vmatprep.subr.mxu0 0.0
      %1770 = vmatpush1.msra.mxu0 0.0
      %1771 = vmatprep.subr.mxu0 0.0
      %1772 = vmatpush1.msra.mxu0 0.0
      %1773 = vmatprep.subr.mxu0 0.0
      %1774 = vmatpush1.msra.mxu0 0.0
      %1775 = vmatprep.subr.mxu0 0.0
      %1776 = vmatpush1.msra.mxu0 0.0
      %1777 = vmatprep.mubr.f32.mxu0 0.0
      %v1778 = vand.u32 %v587, 4294901760
      %v1779 = vsub.f32 %v587, %v1778
      %v1780 = vand.u32 %v1779, 4294901760
      %1781 = vmatmul.mubr.f32.gmra.mrb[0].mxu0 %v1780
      %v1782 = vpop.f32.mrb[0].mxu0
      %v1783 = vadd.f32 %v1679, %v1782
      %v1784 = vpop.f32.mrb[0].mxu0
      %v1785 = vadd.f32 %v1681, %v1784
      %1786 = vmatprep.mubr.f32.mxu0 0.0
      %v1787 = vand.u32 %v590, 4294901760
      %v1788 = vsub.f32 %v590, %v1787
      %v1789 = vand.u32 %v1788, 4294901760
      %1790 = vmatmul.mubr.f32.gmra.mrb[0].mxu0 %v1789
      %v1791 = vpop.f32.mrb[0].mxu0
      %v1792 = vadd.f32 %v1687, %v1791
      %v1793 = vpop.f32.mrb[0].mxu0
      %v1794 = vadd.f32 %v1689, %v1793
      %1795 = vmatprep.mubr.f32.mxu0 0.0
      %v1796 = vand.u32 %v593, 4294901760
      %v1797 = vsub.f32 %v593, %v1796
      %v1798 = vand.u32 %v1797, 4294901760
      %1799 = vmatmul.mubr.f32.gmra.mrb[0].mxu0 %v1798
      %v1800 = vpop.f32.mrb[0].mxu0
      %v1801 = vadd.f32 %v1695, %v1800
      %v1802 = vpop.f32.mrb[0].mxu0
      %v1803 = vadd.f32 %v1697, %v1802
      %1804 = vdwg.mxu0
      %v1805 = vand.u32 %v532, 4294901760
      %v1806 = vsub.f32 %v532, %v1805
      %v1807 = vand.u32 %v1806, 4294901760
      %1808 = vmatprep.subr.mxu0 %v1807
      %v1809 = vand.u32 %v531, 4294901760
      %v1810 = vsub.f32 %v531, %v1809
      %v1811 = vand.u32 %v1810, 4294901760
      %1812 = vmatpush1.msra.mxu0 %v1811
      %v1813 = vand.u32 %v540, 4294901760
      %v1814 = vsub.f32 %v540, %v1813
      %v1815 = vand.u32 %v1814, 4294901760
      %1816 = vmatprep.subr.mxu0 %v1815
      %v1817 = vand.u32 %v539, 4294901760
      %v1818 = vsub.f32 %v539, %v1817
      %v1819 = vand.u32 %v1818, 4294901760
      %1820 = vmatpush1.msra.mxu0 %v1819
      %v1821 = vand.u32 %v548, 4294901760
      %v1822 = vsub.f32 %v548, %v1821
      %v1823 = vand.u32 %v1822, 4294901760
      %1824 = vmatprep.subr.mxu0 %v1823
      %v1825 = vand.u32 %v547, 4294901760
      %v1826 = vsub.f32 %v547, %v1825
      %v1827 = vand.u32 %v1826, 4294901760
      %1828 = vmatpush1.msra.mxu0 %v1827
      %v1829 = vand.u32 %v556, 4294901760
      %v1830 = vsub.f32 %v556, %v1829
      %v1831 = vand.u32 %v1830, 4294901760
      %1832 = vmatprep.subr.mxu0 %v1831
      %v1833 = vand.u32 %v555, 4294901760
      %v1834 = vsub.f32 %v555, %v1833
      %v1835 = vand.u32 %v1834, 4294901760
      %1836 = vmatpush1.msra.mxu0 %v1835
      %v1837 = vand.u32 %v564, 4294901760
      %v1838 = vsub.f32 %v564, %v1837
      %v1839 = vand.u32 %v1838, 4294901760
      %1840 = vmatprep.subr.mxu0 %v1839
      %v1841 = vand.u32 %v563, 4294901760
      %v1842 = vsub.f32 %v563, %v1841
      %v1843 = vand.u32 %v1842, 4294901760
      %1844 = vmatpush1.msra.mxu0 %v1843
      %v1845 = vand.u32 %v572, 4294901760
      %v1846 = vsub.f32 %v572, %v1845
      %v1847 = vand.u32 %v1846, 4294901760
      %1848 = vmatprep.subr.mxu0 %v1847
      %v1849 = vand.u32 %v571, 4294901760
      %v1850 = vsub.f32 %v571, %v1849
      %v1851 = vand.u32 %v1850, 4294901760
      %1852 = vmatpush1.msra.mxu0 %v1851
      %v1853 = vand.u32 %v580, 4294901760
      %v1854 = vsub.f32 %v580, %v1853
      %v1855 = vand.u32 %v1854, 4294901760
      %1856 = vmatprep.subr.mxu0 %v1855
      %v1857 = vand.u32 %v579, 4294901760
      %v1858 = vsub.f32 %v579, %v1857
      %v1859 = vand.u32 %v1858, 4294901760
      %1860 = vmatpush1.msra.mxu0 %v1859
      %1861 = vmatprep.subr.mxu0 0.0
      %1862 = vmatpush1.msra.mxu0 0.0
      %1863 = vmatprep.subr.mxu0 0.0
      %1864 = vmatpush1.msra.mxu0 0.0
      %1865 = vmatprep.subr.mxu0 0.0
      %1866 = vmatpush1.msra.mxu0 0.0
      %1867 = vmatprep.subr.mxu0 0.0
      %1868 = vmatpush1.msra.mxu0 0.0
      %1869 = vmatprep.subr.mxu0 0.0
      %1870 = vmatpush1.msra.mxu0 0.0
      %1871 = vmatprep.subr.mxu0 0.0
      %1872 = vmatpush1.msra.mxu0 0.0
      %1873 = vmatprep.subr.mxu0 0.0
      %1874 = vmatpush1.msra.mxu0 0.0
      %1875 = vmatprep.subr.mxu0 0.0
      %1876 = vmatpush1.msra.mxu0 0.0
      %1877 = vmatprep.subr.mxu0 0.0
      %1878 = vmatpush1.msra.mxu0 0.0
      %1879 = vmatprep.subr.mxu0 0.0
      %1880 = vmatpush1.msra.mxu0 0.0
      %1881 = vmatprep.subr.mxu0 0.0
      %1882 = vmatpush1.msra.mxu0 0.0
      %1883 = vmatprep.subr.mxu0 0.0
      %1884 = vmatpush1.msra.mxu0 0.0
      %1885 = vmatprep.subr.mxu0 0.0
      %1886 = vmatpush1.msra.mxu0 0.0
      %1887 = vmatprep.subr.mxu0 0.0
      %1888 = vmatpush1.msra.mxu0 0.0
      %1889 = vmatprep.subr.mxu0 0.0
      %1890 = vmatpush1.msra.mxu0 0.0
      %1891 = vmatprep.subr.mxu0 0.0
      %1892 = vmatpush1.msra.mxu0 0.0
      %1893 = vmatprep.subr.mxu0 0.0
      %1894 = vmatpush1.msra.mxu0 0.0
      %1895 = vmatprep.subr.mxu0 0.0
      %1896 = vmatpush1.msra.mxu0 0.0
      %1897 = vmatprep.subr.mxu0 0.0
      %1898 = vmatpush1.msra.mxu0 0.0
      %1899 = vmatprep.subr.mxu0 0.0
      %1900 = vmatpush1.msra.mxu0 0.0
      %1901 = vmatprep.subr.mxu0 0.0
      %1902 = vmatpush1.msra.mxu0 0.0
      %1903 = vmatprep.subr.mxu0 0.0
      %1904 = vmatpush1.msra.mxu0 0.0
      %1905 = vmatprep.subr.mxu0 0.0
      %1906 = vmatpush1.msra.mxu0 0.0
      %1907 = vmatprep.subr.mxu0 0.0
      %1908 = vmatpush1.msra.mxu0 0.0
      %1909 = vmatprep.subr.mxu0 0.0
      %1910 = vmatpush1.msra.mxu0 0.0
      %1911 = vmatprep.mubr.f32.mxu0 0.0
      %v1912 = vand.u32 %v587, 4294901760
      %1913 = vmatmul.mubr.f32.gmra.mrb[0].mxu0 %v1912
      %v1914 = vpop.f32.mrb[0].mxu0
      %v1915 = vadd.f32 %v1783, %v1914
      %v1916 = vpop.f32.mrb[0].mxu0
      %v1917 = vadd.f32 %v1785, %v1916
      %1918 = vmatprep.mubr.f32.mxu0 0.0
      %v1919 = vand.u32 %v590, 4294901760
      %1920 = vmatmul.mubr.f32.gmra.mrb[0].mxu0 %v1919
      %v1921 = vpop.f32.mrb[0].mxu0
      %v1922 = vadd.f32 %v1792, %v1921
      %v1923 = vpop.f32.mrb[0].mxu0
      %v1924 = vadd.f32 %v1794, %v1923
      %1925 = vmatprep.mubr.f32.mxu0 0.0
      %v1926 = vand.u32 %v593, 4294901760
      %1927 = vmatmul.mubr.f32.gmra.mrb[0].mxu0 %v1926
      %v1928 = vpop.f32.mrb[0].mxu0
      %v1929 = vadd.f32 %v1801, %v1928
      %v1930 = vpop.f32.mrb[0].mxu0
      %v1931 = vadd.f32 %v1803, %v1930
      %1932 = vdwg.mxu0
      %v1933 = vand.u32 %v532, 4294901760
      %1934 = vmatprep.subr.mxu0 %v1933
      %v1935 = vand.u32 %v531, 4294901760
      %1936 = vmatpush1.msra.mxu0 %v1935
      %v1937 = vand.u32 %v540, 4294901760
      %1938 = vmatprep.subr.mxu0 %v1937
      %v1939 = vand.u32 %v539, 4294901760
      %1940 = vmatpush1.msra.mxu0 %v1939
      %v1941 = vand.u32 %v548, 4294901760
      %1942 = vmatprep.subr.mxu0 %v1941
      %v1943 = vand.u32 %v547, 4294901760
      %1944 = vmatpush1.msra.mxu0 %v1943
      %v1945 = vand.u32 %v556, 4294901760
      %1946 = vmatprep.subr.mxu0 %v1945
      %v1947 = vand.u32 %v555, 4294901760
      %1948 = vmatpush1.msra.mxu0 %v1947
      %v1949 = vand.u32 %v564, 4294901760
      %1950 = vmatprep.subr.mxu0 %v1949
      %v1951 = vand.u32 %v563, 4294901760
      %1952 = vmatpush1.msra.mxu0 %v1951
      %v1953 = vand.u32 %v572, 4294901760
      %1954 = vmatprep.subr.mxu0 %v1953
      %v1955 = vand.u32 %v571, 4294901760
      %1956 = vmatpush1.msra.mxu0 %v1955
      %v1957 = vand.u32 %v580, 4294901760
      %1958 = vmatprep.subr.mxu0 %v1957
      %v1959 = vand.u32 %v579, 4294901760
      %1960 = vmatpush1.msra.mxu0 %v1959
      %1961 = vmatprep.subr.mxu0 0.0
      %1962 = vmatpush1.msra.mxu0 0.0
      %1963 = vmatprep.subr.mxu0 0.0
      %1964 = vmatpush1.msra.mxu0 0.0
      %1965 = vmatprep.subr.mxu0 0.0
      %1966 = vmatpush1.msra.mxu0 0.0
      %1967 = vmatprep.subr.mxu0 0.0
      %1968 = vmatpush1.msra.mxu0 0.0
      %1969 = vmatprep.subr.mxu0 0.0
      %1970 = vmatpush1.msra.mxu0 0.0
      %1971 = vmatprep.subr.mxu0 0.0
      %1972 = vmatpush1.msra.mxu0 0.0
      %1973 = vmatprep.subr.mxu0 0.0
      %1974 = vmatpush1.msra.mxu0 0.0
      %1975 = vmatprep.subr.mxu0 0.0
      %1976 = vmatpush1.msra.mxu0 0.0
      %1977 = vmatprep.subr.mxu0 0.0
      %1978 = vmatpush1.msra.mxu0 0.0
      %1979 = vmatprep.subr.mxu0 0.0
      %1980 = vmatpush1.msra.mxu0 0.0
      %1981 = vmatprep.subr.mxu0 0.0
      %1982 = vmatpush1.msra.mxu0 0.0
      %1983 = vmatprep.subr.mxu0 0.0
      %1984 = vmatpush1.msra.mxu0 0.0
      %1985 = vmatprep.subr.mxu0 0.0
      %1986 = vmatpush1.msra.mxu0 0.0
      %1987 = vmatprep.subr.mxu0 0.0
      %1988 = vmatpush1.msra.mxu0 0.0
      %1989 = vmatprep.subr.mxu0 0.0
      %1990 = vmatpush1.msra.mxu0 0.0
      %1991 = vmatprep.subr.mxu0 0.0
      %1992 = vmatpush1.msra.mxu0 0.0
      %1993 = vmatprep.subr.mxu0 0.0
      %1994 = vmatpush1.msra.mxu0 0.0
      %1995 = vmatprep.subr.mxu0 0.0
      %1996 = vmatpush1.msra.mxu0 0.0
      %1997 = vmatprep.subr.mxu0 0.0
      %1998 = vmatpush1.msra.mxu0 0.0
      %1999 = vmatprep.subr.mxu0 0.0
      %2000 = vmatpush1.msra.mxu0 0.0
      %2001 = vmatprep.subr.mxu0 0.0
      %2002 = vmatpush1.msra.mxu0 0.0
      %2003 = vmatprep.subr.mxu0 0.0
      %2004 = vmatpush1.msra.mxu0 0.0
      %2005 = vmatprep.subr.mxu0 0.0
      %2006 = vmatpush1.msra.mxu0 0.0
      %2007 = vmatprep.subr.mxu0 0.0
      %2008 = vmatpush1.msra.mxu0 0.0
      %2009 = vmatprep.subr.mxu0 0.0
      %2010 = vmatpush1.msra.mxu0 0.0
      %2011 = vmatprep.mubr.f32.mxu0 0.0
      %v2012 = vand.u32 %v587, 4294901760
      %2013 = vmatmul.mubr.f32.gmra.mrb[0].mxu0 %v2012
      %v2014 = vpop.f32.mrb[0].mxu0
      %v2015 = vadd.f32 %v1915, %v2014
      %v2016 = vpop.f32.mrb[0].mxu0
      %v2017 = vadd.f32 %v1917, %v2016
      %2018 = vmatprep.mubr.f32.mxu0 0.0
      %v2019 = vand.u32 %v590, 4294901760
      %2020 = vmatmul.mubr.f32.gmra.mrb[0].mxu0 %v2019
      %v2021 = vpop.f32.mrb[0].mxu0
      %v2022 = vadd.f32 %v1922, %v2021
      %v2023 = vpop.f32.mrb[0].mxu0
      %v2024 = vadd.f32 %v1924, %v2023
      %2025 = vmatprep.mubr.f32.mxu0 0.0
      %v2026 = vand.u32 %v593, 4294901760
      %2027 = vmatmul.mubr.f32.gmra.mrb[0].mxu0 %v2026
      %v2028 = vpop.f32.mrb[0].mxu0
      %v2029 = vadd.f32 %v1929, %v2028
      %v2030 = vpop.f32.mrb[0].mxu0
      %v2031 = vadd.f32 %v1931, %v2030
      %2032 = vdwg.mxu0
      %v2033 = vand.u32 %v534, 4294901760
      %2034 = vmatprep.subr.mxu0 %v2033
      %v2035 = vand.u32 %v533, 4294901760
      %2036 = vmatpush1.msra.mxu0 %v2035
      %v2037 = vand.u32 %v542, 4294901760
      %2038 = vmatprep.subr.mxu0 %v2037
      %v2039 = vand.u32 %v541, 4294901760
      %2040 = vmatpush1.msra.mxu0 %v2039
      %v2041 = vand.u32 %v550, 4294901760
      %2042 = vmatprep.subr.mxu0 %v2041
      %v2043 = vand.u32 %v549, 4294901760
      %2044 = vmatpush1.msra.mxu0 %v2043
      %v2045 = vand.u32 %v558, 4294901760
      %2046 = vmatprep.subr.mxu0 %v2045
      %v2047 = vand.u32 %v557, 4294901760
      %2048 = vmatpush1.msra.mxu0 %v2047
      %v2049 = vand.u32 %v566, 4294901760
      %2050 = vmatprep.subr.mxu0 %v2049
      %v2051 = vand.u32 %v565, 4294901760
      %2052 = vmatpush1.msra.mxu0 %v2051
      %v2053 = vand.u32 %v574, 4294901760
      %2054 = vmatprep.subr.mxu0 %v2053
      %v2055 = vand.u32 %v573, 4294901760
      %2056 = vmatpush1.msra.mxu0 %v2055
      %v2057 = vand.u32 %v582, 4294901760
      %2058 = vmatprep.subr.mxu0 %v2057
      %v2059 = vand.u32 %v581, 4294901760
      %2060 = vmatpush1.msra.mxu0 %v2059
      %2061 = vmatprep.subr.mxu0 0.0
      %2062 = vmatpush1.msra.mxu0 0.0
      %2063 = vmatprep.subr.mxu0 0.0
      %2064 = vmatpush1.msra.mxu0 0.0
      %2065 = vmatprep.subr.mxu0 0.0
      %2066 = vmatpush1.msra.mxu0 0.0
      %2067 = vmatprep.subr.mxu0 0.0
      %2068 = vmatpush1.msra.mxu0 0.0
      %2069 = vmatprep.subr.mxu0 0.0
      %2070 = vmatpush1.msra.mxu0 0.0
      %2071 = vmatprep.subr.mxu0 0.0
      %2072 = vmatpush1.msra.mxu0 0.0
      %2073 = vmatprep.subr.mxu0 0.0
      %2074 = vmatpush1.msra.mxu0 0.0
      %2075 = vmatprep.subr.mxu0 0.0
      %2076 = vmatpush1.msra.mxu0 0.0
      %2077 = vmatprep.subr.mxu0 0.0
      %2078 = vmatpush1.msra.mxu0 0.0
      %2079 = vmatprep.subr.mxu0 0.0
      %2080 = vmatpush1.msra.mxu0 0.0
      %2081 = vmatprep.subr.mxu0 0.0
      %2082 = vmatpush1.msra.mxu0 0.0
      %2083 = vmatprep.subr.mxu0 0.0
      %2084 = vmatpush1.msra.mxu0 0.0
      %2085 = vmatprep.subr.mxu0 0.0
      %2086 = vmatpush1.msra.mxu0 0.0
      %2087 = vmatprep.subr.mxu0 0.0
      %2088 = vmatpush1.msra.mxu0 0.0
      %2089 = vmatprep.subr.mxu0 0.0
      %2090 = vmatpush1.msra.mxu0 0.0
      %2091 = vmatprep.subr.mxu0 0.0
      %2092 = vmatpush1.msra.mxu0 0.0
      %2093 = vmatprep.subr.mxu0 0.0
      %2094 = vmatpush1.msra.mxu0 0.0
      %2095 = vmatprep.subr.mxu0 0.0
      %2096 = vmatpush1.msra.mxu0 0.0
      %2097 = vmatprep.subr.mxu0 0.0
      %2098 = vmatpush1.msra.mxu0 0.0
      %2099 = vmatprep.subr.mxu0 0.0
      %2100 = vmatpush1.msra.mxu0 0.0
      %2101 = vmatprep.subr.mxu0 0.0
      %2102 = vmatpush1.msra.mxu0 0.0
      %2103 = vmatprep.subr.mxu0 0.0
      %2104 = vmatpush1.msra.mxu0 0.0
      %2105 = vmatprep.subr.mxu0 0.0
      %2106 = vmatpush1.msra.mxu0 0.0
      %2107 = vmatprep.subr.mxu0 0.0
      %2108 = vmatpush1.msra.mxu0 0.0
      %2109 = vmatprep.subr.mxu0 0.0
      %2110 = vmatpush1.msra.mxu0 0.0
      %2111 = vmatprep.mubr.f32.mxu0 0.0
      %v2112 = vand.u32 %v587, 4294901760
      %v2113 = vsub.f32 %v587, %v2112
      %v2114 = vand.u32 %v2113, 4294901760
      %v2115 = vsub.f32 %v2113, %v2114
      %v2116 = vand.u32 %v2115, 4294901760
      %2117 = vmatmul.mubr.f32.gmra.mrb[0].mxu0 %v2116
      %v2118 = vpop.f32.mrb[0].mxu0
      %v2119 = vadd.f32 0.0, %v2118
      %v2120 = vpop.f32.mrb[0].mxu0
      %v2121 = vadd.f32 0.0, %v2120
      %2122 = vmatprep.mubr.f32.mxu0 0.0
      %v2123 = vand.u32 %v590, 4294901760
      %v2124 = vsub.f32 %v590, %v2123
      %v2125 = vand.u32 %v2124, 4294901760
      %v2126 = vsub.f32 %v2124, %v2125
      %v2127 = vand.u32 %v2126, 4294901760
      %2128 = vmatmul.mubr.f32.gmra.mrb[0].mxu0 %v2127
      %v2129 = vpop.f32.mrb[0].mxu0
      %v2130 = vadd.f32 0.0, %v2129
      %v2131 = vpop.f32.mrb[0].mxu0
      %v2132 = vadd.f32 0.0, %v2131
      %2133 = vmatprep.mubr.f32.mxu0 0.0
      %v2134 = vand.u32 %v593, 4294901760
      %v2135 = vsub.f32 %v593, %v2134
      %v2136 = vand.u32 %v2135, 4294901760
      %v2137 = vsub.f32 %v2135, %v2136
      %v2138 = vand.u32 %v2137, 4294901760
      %2139 = vmatmul.mubr.f32.gmra.mrb[0].mxu0 %v2138
      %v2140 = vpop.f32.mrb[0].mxu0
      %v2141 = vadd.f32 0.0, %v2140
      %v2142 = vpop.f32.mrb[0].mxu0
      %v2143 = vadd.f32 0.0, %v2142
      %2144 = vdwg.mxu0
      %v2145 = vand.u32 %v534, 4294901760
      %v2146 = vsub.f32 %v534, %v2145
      %v2147 = vand.u32 %v2146, 4294901760
      %v2148 = vsub.f32 %v2146, %v2147
      %v2149 = vand.u32 %v2148, 4294901760
      %2150 = vmatprep.subr.mxu0 %v2149
      %v2151 = vand.u32 %v533, 4294901760
      %v2152 = vsub.f32 %v533, %v2151
      %v2153 = vand.u32 %v2152, 4294901760
      %v2154 = vsub.f32 %v2152, %v2153
      %v2155 = vand.u32 %v2154, 4294901760
      %2156 = vmatpush1.msra.mxu0 %v2155
      %v2157 = vand.u32 %v542, 4294901760
      %v2158 = vsub.f32 %v542, %v2157
      %v2159 = vand.u32 %v2158, 4294901760
      %v2160 = vsub.f32 %v2158, %v2159
      %v2161 = vand.u32 %v2160, 4294901760
      %2162 = vmatprep.subr.mxu0 %v2161
      %v2163 = vand.u32 %v541, 4294901760
      %v2164 = vsub.f32 %v541, %v2163
      %v2165 = vand.u32 %v2164, 4294901760
      %v2166 = vsub.f32 %v2164, %v2165
      %v2167 = vand.u32 %v2166, 4294901760
      %2168 = vmatpush1.msra.mxu0 %v2167
      %v2169 = vand.u32 %v550, 4294901760
      %v2170 = vsub.f32 %v550, %v2169
      %v2171 = vand.u32 %v2170, 4294901760
      %v2172 = vsub.f32 %v2170, %v2171
      %v2173 = vand.u32 %v2172, 4294901760
      %2174 = vmatprep.subr.mxu0 %v2173
      %v2175 = vand.u32 %v549, 4294901760
      %v2176 = vsub.f32 %v549, %v2175
      %v2177 = vand.u32 %v2176, 4294901760
      %v2178 = vsub.f32 %v2176, %v2177
      %v2179 = vand.u32 %v2178, 4294901760
      %2180 = vmatpush1.msra.mxu0 %v2179
      %v2181 = vand.u32 %v558, 4294901760
      %v2182 = vsub.f32 %v558, %v2181
      %v2183 = vand.u32 %v2182, 4294901760
      %v2184 = vsub.f32 %v2182, %v2183
      %v2185 = vand.u32 %v2184, 4294901760
      %2186 = vmatprep.subr.mxu0 %v2185
      %v2187 = vand.u32 %v557, 4294901760
      %v2188 = vsub.f32 %v557, %v2187
      %v2189 = vand.u32 %v2188, 4294901760
      %v2190 = vsub.f32 %v2188, %v2189
      %v2191 = vand.u32 %v2190, 4294901760
      %2192 = vmatpush1.msra.mxu0 %v2191
      %v2193 = vand.u32 %v566, 4294901760
      %v2194 = vsub.f32 %v566, %v2193
      %v2195 = vand.u32 %v2194, 4294901760
      %v2196 = vsub.f32 %v2194, %v2195
      %v2197 = vand.u32 %v2196, 4294901760
      %2198 = vmatprep.subr.mxu0 %v2197
      %v2199 = vand.u32 %v565, 4294901760
      %v2200 = vsub.f32 %v565, %v2199
      %v2201 = vand.u32 %v2200, 4294901760
      %v2202 = vsub.f32 %v2200, %v2201
      %v2203 = vand.u32 %v2202, 4294901760
      %2204 = vmatpush1.msra.mxu0 %v2203
      %v2205 = vand.u32 %v574, 4294901760
      %v2206 = vsub.f32 %v574, %v2205
      %v2207 = vand.u32 %v2206, 4294901760
      %v2208 = vsub.f32 %v2206, %v2207
      %v2209 = vand.u32 %v2208, 4294901760
      %2210 = vmatprep.subr.mxu0 %v2209
      %v2211 = vand.u32 %v573, 4294901760
      %v2212 = vsub.f32 %v573, %v2211
      %v2213 = vand.u32 %v2212, 4294901760
      %v2214 = vsub.f32 %v2212, %v2213
      %v2215 = vand.u32 %v2214, 4294901760
      %2216 = vmatpush1.msra.mxu0 %v2215
      %v2217 = vand.u32 %v582, 4294901760
      %v2218 = vsub.f32 %v582, %v2217
      %v2219 = vand.u32 %v2218, 4294901760
      %v2220 = vsub.f32 %v2218, %v2219
      %v2221 = vand.u32 %v2220, 4294901760
      %2222 = vmatprep.subr.mxu0 %v2221
      %v2223 = vand.u32 %v581, 4294901760
      %v2224 = vsub.f32 %v581, %v2223
      %v2225 = vand.u32 %v2224, 4294901760
      %v2226 = vsub.f32 %v2224, %v2225
      %v2227 = vand.u32 %v2226, 4294901760
      %2228 = vmatpush1.msra.mxu0 %v2227
      %2229 = vmatprep.subr.mxu0 0.0
      %2230 = vmatpush1.msra.mxu0 0.0
      %2231 = vmatprep.subr.mxu0 0.0
      %2232 = vmatpush1.msra.mxu0 0.0
      %2233 = vmatprep.subr.mxu0 0.0
      %2234 = vmatpush1.msra.mxu0 0.0
      %2235 = vmatprep.subr.mxu0 0.0
      %2236 = vmatpush1.msra.mxu0 0.0
      %2237 = vmatprep.subr.mxu0 0.0
      %2238 = vmatpush1.msra.mxu0 0.0
      %2239 = vmatprep.subr.mxu0 0.0
      %2240 = vmatpush1.msra.mxu0 0.0
      %2241 = vmatprep.subr.mxu0 0.0
      %2242 = vmatpush1.msra.mxu0 0.0
      %2243 = vmatprep.subr.mxu0 0.0
      %2244 = vmatpush1.msra.mxu0 0.0
      %2245 = vmatprep.subr.mxu0 0.0
      %2246 = vmatpush1.msra.mxu0 0.0
      %2247 = vmatprep.subr.mxu0 0.0
      %2248 = vmatpush1.msra.mxu0 0.0
      %2249 = vmatprep.subr.mxu0 0.0
      %2250 = vmatpush1.msra.mxu0 0.0
      %2251 = vmatprep.subr.mxu0 0.0
      %2252 = vmatpush1.msra.mxu0 0.0
      %2253 = vmatprep.subr.mxu0 0.0
      %2254 = vmatpush1.msra.mxu0 0.0
      %2255 = vmatprep.subr.mxu0 0.0
      %2256 = vmatpush1.msra.mxu0 0.0
      %2257 = vmatprep.subr.mxu0 0.0
      %2258 = vmatpush1.msra.mxu0 0.0
      %2259 = vmatprep.subr.mxu0 0.0
      %2260 = vmatpush1.msra.mxu0 0.0
      %2261 = vmatprep.subr.mxu0 0.0
      %2262 = vmatpush1.msra.mxu0 0.0
      %2263 = vmatprep.subr.mxu0 0.0
      %2264 = vmatpush1.msra.mxu0 0.0
      %2265 = vmatprep.subr.mxu0 0.0
      %2266 = vmatpush1.msra.mxu0 0.0
      %2267 = vmatprep.subr.mxu0 0.0
      %2268 = vmatpush1.msra.mxu0 0.0
      %2269 = vmatprep.subr.mxu0 0.0
      %2270 = vmatpush1.msra.mxu0 0.0
      %2271 = vmatprep.subr.mxu0 0.0
      %2272 = vmatpush1.msra.mxu0 0.0
      %2273 = vmatprep.subr.mxu0 0.0
      %2274 = vmatpush1.msra.mxu0 0.0
      %2275 = vmatprep.subr.mxu0 0.0
      %2276 = vmatpush1.msra.mxu0 0.0
      %2277 = vmatprep.subr.mxu0 0.0
      %2278 = vmatpush1.msra.mxu0 0.0
      %2279 = vmatprep.mubr.f32.mxu0 0.0
      %v2280 = vand.u32 %v587, 4294901760
      %2281 = vmatmul.mubr.f32.gmra.mrb[0].mxu0 %v2280
      %v2282 = vpop.f32.mrb[0].mxu0
      %v2283 = vadd.f32 %v2119, %v2282
      %v2284 = vpop.f32.mrb[0].mxu0
      %v2285 = vadd.f32 %v2121, %v2284
      %2286 = vmatprep.mubr.f32.mxu0 0.0
      %v2287 = vand.u32 %v590, 4294901760
      %2288 = vmatmul.mubr.f32.gmra.mrb[0].mxu0 %v2287
      %v2289 = vpop.f32.mrb[0].mxu0
      %v2290 = vadd.f32 %v2130, %v2289
      %v2291 = vpop.f32.mrb[0].mxu0
      %v2292 = vadd.f32 %v2132, %v2291
      %2293 = vmatprep.mubr.f32.mxu0 0.0
      %v2294 = vand.u32 %v593, 4294901760
      %2295 = vmatmul.mubr.f32.gmra.mrb[0].mxu0 %v2294
      %v2296 = vpop.f32.mrb[0].mxu0
      %v2297 = vadd.f32 %v2141, %v2296
      %v2298 = vpop.f32.mrb[0].mxu0
      %v2299 = vadd.f32 %v2143, %v2298
      %2300 = vdwg.mxu0
      %v2301 = vand.u32 %v534, 4294901760
      %v2302 = vsub.f32 %v534, %v2301
      %2303 = vmatprep.subr.mxu0 %v2302
      %v2304 = vand.u32 %v533, 4294901760
      %v2305 = vsub.f32 %v533, %v2304
      %2306 = vmatpush1.msra.mxu0 %v2305
      %v2307 = vand.u32 %v542, 4294901760
      %v2308 = vsub.f32 %v542, %v2307
      %2309 = vmatprep.subr.mxu0 %v2308
      %v2310 = vand.u32 %v541, 4294901760
      %v2311 = vsub.f32 %v541, %v2310
      %2312 = vmatpush1.msra.mxu0 %v2311
      %v2313 = vand.u32 %v550, 4294901760
      %v2314 = vsub.f32 %v550, %v2313
      %2315 = vmatprep.subr.mxu0 %v2314
      %v2316 = vand.u32 %v549, 4294901760
      %v2317 = vsub.f32 %v549, %v2316
      %2318 = vmatpush1.msra.mxu0 %v2317
      %v2319 = vand.u32 %v558, 4294901760
      %v2320 = vsub.f32 %v558, %v2319
      %2321 = vmatprep.subr.mxu0 %v2320
      %v2322 = vand.u32 %v557, 4294901760
      %v2323 = vsub.f32 %v557, %v2322
      %2324 = vmatpush1.msra.mxu0 %v2323
      %v2325 = vand.u32 %v566, 4294901760
      %v2326 = vsub.f32 %v566, %v2325
      %2327 = vmatprep.subr.mxu0 %v2326
      %v2328 = vand.u32 %v565, 4294901760
      %v2329 = vsub.f32 %v565, %v2328
      %2330 = vmatpush1.msra.mxu0 %v2329
      %v2331 = vand.u32 %v574, 4294901760
      %v2332 = vsub.f32 %v574, %v2331
      %2333 = vmatprep.subr.mxu0 %v2332
      %v2334 = vand.u32 %v573, 4294901760
      %v2335 = vsub.f32 %v573, %v2334
      %2336 = vmatpush1.msra.mxu0 %v2335
      %v2337 = vand.u32 %v582, 4294901760
      %v2338 = vsub.f32 %v582, %v2337
      %2339 = vmatprep.subr.mxu0 %v2338
      %v2340 = vand.u32 %v581, 4294901760
      %v2341 = vsub.f32 %v581, %v2340
      %2342 = vmatpush1.msra.mxu0 %v2341
      %2343 = vmatprep.subr.mxu0 0.0
      %2344 = vmatpush1.msra.mxu0 0.0
      %2345 = vmatprep.subr.mxu0 0.0
      %2346 = vmatpush1.msra.mxu0 0.0
      %2347 = vmatprep.subr.mxu0 0.0
      %2348 = vmatpush1.msra.mxu0 0.0
      %2349 = vmatprep.subr.mxu0 0.0
      %2350 = vmatpush1.msra.mxu0 0.0
      %2351 = vmatprep.subr.mxu0 0.0
      %2352 = vmatpush1.msra.mxu0 0.0
      %2353 = vmatprep.subr.mxu0 0.0
      %2354 = vmatpush1.msra.mxu0 0.0
      %2355 = vmatprep.subr.mxu0 0.0
      %2356 = vmatpush1.msra.mxu0 0.0
      %2357 = vmatprep.subr.mxu0 0.0
      %2358 = vmatpush1.msra.mxu0 0.0
      %2359 = vmatprep.subr.mxu0 0.0
      %2360 = vmatpush1.msra.mxu0 0.0
      %2361 = vmatprep.subr.mxu0 0.0
      %2362 = vmatpush1.msra.mxu0 0.0
      %2363 = vmatprep.subr.mxu0 0.0
      %2364 = vmatpush1.msra.mxu0 0.0
      %2365 = vmatprep.subr.mxu0 0.0
      %2366 = vmatpush1.msra.mxu0 0.0
      %2367 = vmatprep.subr.mxu0 0.0
      %2368 = vmatpush1.msra.mxu0 0.0
      %2369 = vmatprep.subr.mxu0 0.0
      %2370 = vmatpush1.msra.mxu0 0.0
      %2371 = vmatprep.subr.mxu0 0.0
      %2372 = vmatpush1.msra.mxu0 0.0
      %2373 = vmatprep.subr.mxu0 0.0
      %2374 = vmatpush1.msra.mxu0 0.0
      %2375 = vmatprep.subr.mxu0 0.0
      %2376 = vmatpush1.msra.mxu0 0.0
      %2377 = vmatprep.subr.mxu0 0.0
      %2378 = vmatpush1.msra.mxu0 0.0
      %2379 = vmatprep.subr.mxu0 0.0
      %2380 = vmatpush1.msra.mxu0 0.0
      %2381 = vmatprep.subr.mxu0 0.0
      %2382 = vmatpush1.msra.mxu0 0.0
      %2383 = vmatprep.subr.mxu0 0.0
      %2384 = vmatpush1.msra.mxu0 0.0
      %2385 = vmatprep.subr.mxu0 0.0
      %2386 = vmatpush1.msra.mxu0 0.0
      %2387 = vmatprep.subr.mxu0 0.0
      %2388 = vmatpush1.msra.mxu0 0.0
      %2389 = vmatprep.subr.mxu0 0.0
      %2390 = vmatpush1.msra.mxu0 0.0
      %2391 = vmatprep.subr.mxu0 0.0
      %2392 = vmatpush1.msra.mxu0 0.0
      %2393 = vmatprep.mubr.f32.mxu0 0.0
      %v2394 = vand.u32 %v587, 4294901760
      %v2395 = vsub.f32 %v587, %v2394
      %2396 = vmatmul.mubr.f32.gmra.mrb[0].mxu0 %v2395
      %v2397 = vpop.f32.mrb[0].mxu0
      %v2398 = vadd.f32 %v2283, %v2397
      %v2399 = vpop.f32.mrb[0].mxu0
      %v2400 = vadd.f32 %v2285, %v2399
      %2401 = vmatprep.mubr.f32.mxu0 0.0
      %v2402 = vand.u32 %v590, 4294901760
      %v2403 = vsub.f32 %v590, %v2402
      %2404 = vmatmul.mubr.f32.gmra.mrb[0].mxu0 %v2403
      %v2405 = vpop.f32.mrb[0].mxu0
      %v2406 = vadd.f32 %v2290, %v2405
      %v2407 = vpop.f32.mrb[0].mxu0
      %v2408 = vadd.f32 %v2292, %v2407
      %2409 = vmatprep.mubr.f32.mxu0 0.0
      %v2410 = vand.u32 %v593, 4294901760
      %v2411 = vsub.f32 %v593, %v2410
      %2412 = vmatmul.mubr.f32.gmra.mrb[0].mxu0 %v2411
      %v2413 = vpop.f32.mrb[0].mxu0
      %v2414 = vadd.f32 %v2297, %v2413
      %v2415 = vpop.f32.mrb[0].mxu0
      %v2416 = vadd.f32 %v2299, %v2415
      %2417 = vdwg.mxu0
      %v2418 = vand.u32 %v534, 4294901760
      %2419 = vmatprep.subr.mxu0 %v2418
      %v2420 = vand.u32 %v533, 4294901760
      %2421 = vmatpush1.msra.mxu0 %v2420
      %v2422 = vand.u32 %v542, 4294901760
      %2423 = vmatprep.subr.mxu0 %v2422
      %v2424 = vand.u32 %v541, 4294901760
      %2425 = vmatpush1.msra.mxu0 %v2424
      %v2426 = vand.u32 %v550, 4294901760
      %2427 = vmatprep.subr.mxu0 %v2426
      %v2428 = vand.u32 %v549, 4294901760
      %2429 = vmatpush1.msra.mxu0 %v2428
      %v2430 = vand.u32 %v558, 4294901760
      %2431 = vmatprep.subr.mxu0 %v2430
      %v2432 = vand.u32 %v557, 4294901760
      %2433 = vmatpush1.msra.mxu0 %v2432
      %v2434 = vand.u32 %v566, 4294901760
      %2435 = vmatprep.subr.mxu0 %v2434
      %v2436 = vand.u32 %v565, 4294901760
      %2437 = vmatpush1.msra.mxu0 %v2436
      %v2438 = vand.u32 %v574, 4294901760
      %2439 = vmatprep.subr.mxu0 %v2438
      %v2440 = vand.u32 %v573, 4294901760
      %2441 = vmatpush1.msra.mxu0 %v2440
      %v2442 = vand.u32 %v582, 4294901760
      %2443 = vmatprep.subr.mxu0 %v2442
      %v2444 = vand.u32 %v581, 4294901760
      %2445 = vmatpush1.msra.mxu0 %v2444
      %2446 = vmatprep.subr.mxu0 0.0
      %2447 = vmatpush1.msra.mxu0 0.0
      %2448 = vmatprep.subr.mxu0 0.0
      %2449 = vmatpush1.msra.mxu0 0.0
      %2450 = vmatprep.subr.mxu0 0.0
      %2451 = vmatpush1.msra.mxu0 0.0
      %2452 = vmatprep.subr.mxu0 0.0
      %2453 = vmatpush1.msra.mxu0 0.0
      %2454 = vmatprep.subr.mxu0 0.0
      %2455 = vmatpush1.msra.mxu0 0.0
      %2456 = vmatprep.subr.mxu0 0.0
      %2457 = vmatpush1.msra.mxu0 0.0
      %2458 = vmatprep.subr.mxu0 0.0
      %2459 = vmatpush1.msra.mxu0 0.0
      %2460 = vmatprep.subr.mxu0 0.0
      %2461 = vmatpush1.msra.mxu0 0.0
      %2462 = vmatprep.subr.mxu0 0.0
      %2463 = vmatpush1.msra.mxu0 0.0
      %2464 = vmatprep.subr.mxu0 0.0
      %2465 = vmatpush1.msra.mxu0 0.0
      %2466 = vmatprep.subr.mxu0 0.0
      %2467 = vmatpush1.msra.mxu0 0.0
      %2468 = vmatprep.subr.mxu0 0.0
      %2469 = vmatpush1.msra.mxu0 0.0
      %2470 = vmatprep.subr.mxu0 0.0
      %2471 = vmatpush1.msra.mxu0 0.0
      %2472 = vmatprep.subr.mxu0 0.0
      %2473 = vmatpush1.msra.mxu0 0.0
      %2474 = vmatprep.subr.mxu0 0.0
      %2475 = vmatpush1.msra.mxu0 0.0
      %2476 = vmatprep.subr.mxu0 0.0
      %2477 = vmatpush1.msra.mxu0 0.0
      %2478 = vmatprep.subr.mxu0 0.0
      %2479 = vmatpush1.msra.mxu0 0.0
      %2480 = vmatprep.subr.mxu0 0.0
      %2481 = vmatpush1.msra.mxu0 0.0
      %2482 = vmatprep.subr.mxu0 0.0
      %2483 = vmatpush1.msra.mxu0 0.0
      %2484 = vmatprep.subr.mxu0 0.0
      %2485 = vmatpush1.msra.mxu0 0.0
      %2486 = vmatprep.subr.mxu0 0.0
      %2487 = vmatpush1.msra.mxu0 0.0
      %2488 = vmatprep.subr.mxu0 0.0
      %2489 = vmatpush1.msra.mxu0 0.0
      %2490 = vmatprep.subr.mxu0 0.0
      %2491 = vmatpush1.msra.mxu0 0.0
      %2492 = vmatprep.subr.mxu0 0.0
      %2493 = vmatpush1.msra.mxu0 0.0
      %2494 = vmatprep.subr.mxu0 0.0
      %2495 = vmatpush1.msra.mxu0 0.0
      %2496 = vmatprep.mubr.f32.mxu0 0.0
      %v2497 = vand.u32 %v587, 4294901760
      %v2498 = vsub.f32 %v587, %v2497
      %v2499 = vand.u32 %v2498, 4294901760
      %2500 = vmatmul.mubr.f32.gmra.mrb[0].mxu0 %v2499
      %v2501 = vpop.f32.mrb[0].mxu0
      %v2502 = vadd.f32 %v2398, %v2501
      %v2503 = vpop.f32.mrb[0].mxu0
      %v2504 = vadd.f32 %v2400, %v2503
      %2505 = vmatprep.mubr.f32.mxu0 0.0
      %v2506 = vand.u32 %v590, 4294901760
      %v2507 = vsub.f32 %v590, %v2506
      %v2508 = vand.u32 %v2507, 4294901760
      %2509 = vmatmul.mubr.f32.gmra.mrb[0].mxu0 %v2508
      %v2510 = vpop.f32.mrb[0].mxu0
      %v2511 = vadd.f32 %v2406, %v2510
      %v2512 = vpop.f32.mrb[0].mxu0
      %v2513 = vadd.f32 %v2408, %v2512
      %2514 = vmatprep.mubr.f32.mxu0 0.0
      %v2515 = vand.u32 %v593, 4294901760
      %v2516 = vsub.f32 %v593, %v2515
      %v2517 = vand.u32 %v2516, 4294901760
      %2518 = vmatmul.mubr.f32.gmra.mrb[0].mxu0 %v2517
      %v2519 = vpop.f32.mrb[0].mxu0
      %v2520 = vadd.f32 %v2414, %v2519
      %v2521 = vpop.f32.mrb[0].mxu0
      %v2522 = vadd.f32 %v2416, %v2521
      %2523 = vdwg.mxu0
      %v2524 = vand.u32 %v534, 4294901760
      %v2525 = vsub.f32 %v534, %v2524
      %v2526 = vand.u32 %v2525, 4294901760
      %2527 = vmatprep.subr.mxu0 %v2526
      %v2528 = vand.u32 %v533, 4294901760
      %v2529 = vsub.f32 %v533, %v2528
      %v2530 = vand.u32 %v2529, 4294901760
      %2531 = vmatpush1.msra.mxu0 %v2530
      %v2532 = vand.u32 %v542, 4294901760
      %v2533 = vsub.f32 %v542, %v2532
      %v2534 = vand.u32 %v2533, 4294901760
      %2535 = vmatprep.subr.mxu0 %v2534
      %v2536 = vand.u32 %v541, 4294901760
      %v2537 = vsub.f32 %v541, %v2536
      %v2538 = vand.u32 %v2537, 4294901760
      %2539 = vmatpush1.msra.mxu0 %v2538
      %v2540 = vand.u32 %v550, 4294901760
      %v2541 = vsub.f32 %v550, %v2540
      %v2542 = vand.u32 %v2541, 4294901760
      %2543 = vmatprep.subr.mxu0 %v2542
      %v2544 = vand.u32 %v549, 4294901760
      %v2545 = vsub.f32 %v549, %v2544
      %v2546 = vand.u32 %v2545, 4294901760
      %2547 = vmatpush1.msra.mxu0 %v2546
      %v2548 = vand.u32 %v558, 4294901760
      %v2549 = vsub.f32 %v558, %v2548
      %v2550 = vand.u32 %v2549, 4294901760
      %2551 = vmatprep.subr.mxu0 %v2550
      %v2552 = vand.u32 %v557, 4294901760
      %v2553 = vsub.f32 %v557, %v2552
      %v2554 = vand.u32 %v2553, 4294901760
      %2555 = vmatpush1.msra.mxu0 %v2554
      %v2556 = vand.u32 %v566, 4294901760
      %v2557 = vsub.f32 %v566, %v2556
      %v2558 = vand.u32 %v2557, 4294901760
      %2559 = vmatprep.subr.mxu0 %v2558
      %v2560 = vand.u32 %v565, 4294901760
      %v2561 = vsub.f32 %v565, %v2560
      %v2562 = vand.u32 %v2561, 4294901760
      %2563 = vmatpush1.msra.mxu0 %v2562
      %v2564 = vand.u32 %v574, 4294901760
      %v2565 = vsub.f32 %v574, %v2564
      %v2566 = vand.u32 %v2565, 4294901760
      %2567 = vmatprep.subr.mxu0 %v2566
      %v2568 = vand.u32 %v573, 4294901760
      %v2569 = vsub.f32 %v573, %v2568
      %v2570 = vand.u32 %v2569, 4294901760
      %2571 = vmatpush1.msra.mxu0 %v2570
      %v2572 = vand.u32 %v582, 4294901760
      %v2573 = vsub.f32 %v582, %v2572
      %v2574 = vand.u32 %v2573, 4294901760
      %2575 = vmatprep.subr.mxu0 %v2574
      %v2576 = vand.u32 %v581, 4294901760
      %v2577 = vsub.f32 %v581, %v2576
      %v2578 = vand.u32 %v2577, 4294901760
      %2579 = vmatpush1.msra.mxu0 %v2578
      %2580 = vmatprep.subr.mxu0 0.0
      %2581 = vmatpush1.msra.mxu0 0.0
      %2582 = vmatprep.subr.mxu0 0.0
      %2583 = vmatpush1.msra.mxu0 0.0
      %2584 = vmatprep.subr.mxu0 0.0
      %2585 = vmatpush1.msra.mxu0 0.0
      %2586 = vmatprep.subr.mxu0 0.0
      %2587 = vmatpush1.msra.mxu0 0.0
      %2588 = vmatprep.subr.mxu0 0.0
      %2589 = vmatpush1.msra.mxu0 0.0
      %2590 = vmatprep.subr.mxu0 0.0
      %2591 = vmatpush1.msra.mxu0 0.0
      %2592 = vmatprep.subr.mxu0 0.0
      %2593 = vmatpush1.msra.mxu0 0.0
      %2594 = vmatprep.subr.mxu0 0.0
      %2595 = vmatpush1.msra.mxu0 0.0
      %2596 = vmatprep.subr.mxu0 0.0
      %2597 = vmatpush1.msra.mxu0 0.0
      %2598 = vmatprep.subr.mxu0 0.0
      %2599 = vmatpush1.msra.mxu0 0.0
      %2600 = vmatprep.subr.mxu0 0.0
      %2601 = vmatpush1.msra.mxu0 0.0
      %2602 = vmatprep.subr.mxu0 0.0
      %2603 = vmatpush1.msra.mxu0 0.0
      %2604 = vmatprep.subr.mxu0 0.0
      %2605 = vmatpush1.msra.mxu0 0.0
      %2606 = vmatprep.subr.mxu0 0.0
      %2607 = vmatpush1.msra.mxu0 0.0
      %2608 = vmatprep.subr.mxu0 0.0
      %2609 = vmatpush1.msra.mxu0 0.0
      %2610 = vmatprep.subr.mxu0 0.0
      %2611 = vmatpush1.msra.mxu0 0.0
      %2612 = vmatprep.subr.mxu0 0.0
      %2613 = vmatpush1.msra.mxu0 0.0
      %2614 = vmatprep.subr.mxu0 0.0
      %2615 = vmatpush1.msra.mxu0 0.0
      %2616 = vmatprep.subr.mxu0 0.0
      %2617 = vmatpush1.msra.mxu0 0.0
      %2618 = vmatprep.subr.mxu0 0.0
      %2619 = vmatpush1.msra.mxu0 0.0
      %2620 = vmatprep.subr.mxu0 0.0
      %2621 = vmatpush1.msra.mxu0 0.0
      %2622 = vmatprep.subr.mxu0 0.0
      %2623 = vmatpush1.msra.mxu0 0.0
      %2624 = vmatprep.subr.mxu0 0.0
      %2625 = vmatpush1.msra.mxu0 0.0
      %2626 = vmatprep.subr.mxu0 0.0
      %2627 = vmatpush1.msra.mxu0 0.0
      %2628 = vmatprep.subr.mxu0 0.0
      %2629 = vmatpush1.msra.mxu0 0.0
      %2630 = vmatprep.mubr.f32.mxu0 0.0
      %v2631 = vand.u32 %v587, 4294901760
      %2632 = vmatmul.mubr.f32.gmra.mrb[0].mxu0 %v2631
      %v2633 = vpop.f32.mrb[0].mxu0
      %v2634 = vadd.f32 %v2502, %v2633
      %v2635 = vpop.f32.mrb[0].mxu0
      %v2636 = vadd.f32 %v2504, %v2635
      %2637 = vmatprep.mubr.f32.mxu0 0.0
      %v2638 = vand.u32 %v590, 4294901760
      %2639 = vmatmul.mubr.f32.gmra.mrb[0].mxu0 %v2638
      %v2640 = vpop.f32.mrb[0].mxu0
      %v2641 = vadd.f32 %v2511, %v2640
      %v2642 = vpop.f32.mrb[0].mxu0
      %v2643 = vadd.f32 %v2513, %v2642
      %2644 = vmatprep.mubr.f32.mxu0 0.0
      %v2645 = vand.u32 %v593, 4294901760
      %2646 = vmatmul.mubr.f32.gmra.mrb[0].mxu0 %v2645
      %v2647 = vpop.f32.mrb[0].mxu0
      %v2648 = vadd.f32 %v2520, %v2647
      %v2649 = vpop.f32.mrb[0].mxu0
      %v2650 = vadd.f32 %v2522, %v2649
      %2651 = vdwg.mxu0
      %v2652 = vand.u32 %v534, 4294901760
      %2653 = vmatprep.subr.mxu0 %v2652
      %v2654 = vand.u32 %v533, 4294901760
      %2655 = vmatpush1.msra.mxu0 %v2654
      %v2656 = vand.u32 %v542, 4294901760
      %2657 = vmatprep.subr.mxu0 %v2656
      %v2658 = vand.u32 %v541, 4294901760
      %2659 = vmatpush1.msra.mxu0 %v2658
      %v2660 = vand.u32 %v550, 4294901760
      %2661 = vmatprep.subr.mxu0 %v2660
      %v2662 = vand.u32 %v549, 4294901760
      %2663 = vmatpush1.msra.mxu0 %v2662
      %v2664 = vand.u32 %v558, 4294901760
      %2665 = vmatprep.subr.mxu0 %v2664
      %v2666 = vand.u32 %v557, 4294901760
      %2667 = vmatpush1.msra.mxu0 %v2666
      %v2668 = vand.u32 %v566, 4294901760
      %2669 = vmatprep.subr.mxu0 %v2668
      %v2670 = vand.u32 %v565, 4294901760
      %2671 = vmatpush1.msra.mxu0 %v2670
      %v2672 = vand.u32 %v574, 4294901760
      %2673 = vmatprep.subr.mxu0 %v2672
      %v2674 = vand.u32 %v573, 4294901760
      %2675 = vmatpush1.msra.mxu0 %v2674
      %v2676 = vand.u32 %v582, 4294901760
      %2677 = vmatprep.subr.mxu0 %v2676
      %v2678 = vand.u32 %v581, 4294901760
      %2679 = vmatpush1.msra.mxu0 %v2678
      %2680 = vmatprep.subr.mxu0 0.0
      %2681 = vmatpush1.msra.mxu0 0.0
      %2682 = vmatprep.subr.mxu0 0.0
      %2683 = vmatpush1.msra.mxu0 0.0
      %2684 = vmatprep.subr.mxu0 0.0
      %2685 = vmatpush1.msra.mxu0 0.0
      %2686 = vmatprep.subr.mxu0 0.0
      %2687 = vmatpush1.msra.mxu0 0.0
      %2688 = vmatprep.subr.mxu0 0.0
      %2689 = vmatpush1.msra.mxu0 0.0
      %2690 = vmatprep.subr.mxu0 0.0
      %2691 = vmatpush1.msra.mxu0 0.0
      %2692 = vmatprep.subr.mxu0 0.0
      %2693 = vmatpush1.msra.mxu0 0.0
      %2694 = vmatprep.subr.mxu0 0.0
      %2695 = vmatpush1.msra.mxu0 0.0
      %2696 = vmatprep.subr.mxu0 0.0
      %2697 = vmatpush1.msra.mxu0 0.0
      %2698 = vmatprep.subr.mxu0 0.0
      %2699 = vmatpush1.msra.mxu0 0.0
      %2700 = vmatprep.subr.mxu0 0.0
      %2701 = vmatpush1.msra.mxu0 0.0
      %2702 = vmatprep.subr.mxu0 0.0
      %2703 = vmatpush1.msra.mxu0 0.0
      %2704 = vmatprep.subr.mxu0 0.0
      %2705 = vmatpush1.msra.mxu0 0.0
      %2706 = vmatprep.subr.mxu0 0.0
      %2707 = vmatpush1.msra.mxu0 0.0
      %2708 = vmatprep.subr.mxu0 0.0
      %2709 = vmatpush1.msra.mxu0 0.0
      %2710 = vmatprep.subr.mxu0 0.0
      %2711 = vmatpush1.msra.mxu0 0.0
      %2712 = vmatprep.subr.mxu0 0.0
      %2713 = vmatpush1.msra.mxu0 0.0
      %2714 = vmatprep.subr.mxu0 0.0
      %2715 = vmatpush1.msra.mxu0 0.0
      %2716 = vmatprep.subr.mxu0 0.0
      %2717 = vmatpush1.msra.mxu0 0.0
      %2718 = vmatprep.subr.mxu0 0.0
      %2719 = vmatpush1.msra.mxu0 0.0
      %2720 = vmatprep.subr.mxu0 0.0
      %2721 = vmatpush1.msra.mxu0 0.0
      %2722 = vmatprep.subr.mxu0 0.0
      %2723 = vmatpush1.msra.mxu0 0.0
      %2724 = vmatprep.subr.mxu0 0.0
      %2725 = vmatpush1.msra.mxu0 0.0
      %2726 = vmatprep.subr.mxu0 0.0
      %2727 = vmatpush1.msra.mxu0 0.0
      %2728 = vmatprep.subr.mxu0 0.0
      %2729 = vmatpush1.msra.mxu0 0.0
      %2730 = vmatprep.mubr.f32.mxu0 0.0
      %v2731 = vand.u32 %v587, 4294901760
      %2732 = vmatmul.mubr.f32.gmra.mrb[0].mxu0 %v2731
      %v2733 = vpop.f32.mrb[0].mxu0
      %v2734 = vadd.f32 %v2634, %v2733
      %v2735 = vpop.f32.mrb[0].mxu0
      %v2736 = vadd.f32 %v2636, %v2735
      %2737 = vmatprep.mubr.f32.mxu0 0.0
      %v2738 = vand.u32 %v590, 4294901760
      %2739 = vmatmul.mubr.f32.gmra.mrb[0].mxu0 %v2738
      %v2740 = vpop.f32.mrb[0].mxu0
      %v2741 = vadd.f32 %v2641, %v2740
      %v2742 = vpop.f32.mrb[0].mxu0
      %v2743 = vadd.f32 %v2643, %v2742
      %2744 = vmatprep.mubr.f32.mxu0 0.0
      %v2745 = vand.u32 %v593, 4294901760
      %2746 = vmatmul.mubr.f32.gmra.mrb[0].mxu0 %v2745
      %v2747 = vpop.f32.mrb[0].mxu0
      %v2748 = vadd.f32 %v2648, %v2747
      %v2749 = vpop.f32.mrb[0].mxu0
      %v2750 = vadd.f32 %v2650, %v2749
      %2751 = vdwg.mxu0
      %v2752 = vand.u32 %v536, 4294901760
      %2753 = vmatprep.subr.mxu0 %v2752
      %v2754 = vand.u32 %v535, 4294901760
      %2755 = vmatpush1.msra.mxu0 %v2754
      %v2756 = vand.u32 %v544, 4294901760
      %2757 = vmatprep.subr.mxu0 %v2756
      %v2758 = vand.u32 %v543, 4294901760
      %2759 = vmatpush1.msra.mxu0 %v2758
      %v2760 = vand.u32 %v552, 4294901760
      %2761 = vmatprep.subr.mxu0 %v2760
      %v2762 = vand.u32 %v551, 4294901760
      %2763 = vmatpush1.msra.mxu0 %v2762
      %v2764 = vand.u32 %v560, 4294901760
      %2765 = vmatprep.subr.mxu0 %v2764
      %v2766 = vand.u32 %v559, 4294901760
      %2767 = vmatpush1.msra.mxu0 %v2766
      %v2768 = vand.u32 %v568, 4294901760
      %2769 = vmatprep.subr.mxu0 %v2768
      %v2770 = vand.u32 %v567, 4294901760
      %2771 = vmatpush1.msra.mxu0 %v2770
      %v2772 = vand.u32 %v576, 4294901760
      %2773 = vmatprep.subr.mxu0 %v2772
      %v2774 = vand.u32 %v575, 4294901760
      %2775 = vmatpush1.msra.mxu0 %v2774
      %v2776 = vand.u32 %v584, 4294901760
      %2777 = vmatprep.subr.mxu0 %v2776
      %v2778 = vand.u32 %v583, 4294901760
      %2779 = vmatpush1.msra.mxu0 %v2778
      %2780 = vmatprep.subr.mxu0 0.0
      %2781 = vmatpush1.msra.mxu0 0.0
      %2782 = vmatprep.subr.mxu0 0.0
      %2783 = vmatpush1.msra.mxu0 0.0
      %2784 = vmatprep.subr.mxu0 0.0
      %2785 = vmatpush1.msra.mxu0 0.0
      %2786 = vmatprep.subr.mxu0 0.0
      %2787 = vmatpush1.msra.mxu0 0.0
      %2788 = vmatprep.subr.mxu0 0.0
      %2789 = vmatpush1.msra.mxu0 0.0
      %2790 = vmatprep.subr.mxu0 0.0
      %2791 = vmatpush1.msra.mxu0 0.0
      %2792 = vmatprep.subr.mxu0 0.0
      %2793 = vmatpush1.msra.mxu0 0.0
      %2794 = vmatprep.subr.mxu0 0.0
      %2795 = vmatpush1.msra.mxu0 0.0
      %2796 = vmatprep.subr.mxu0 0.0
      %2797 = vmatpush1.msra.mxu0 0.0
      %2798 = vmatprep.subr.mxu0 0.0
      %2799 = vmatpush1.msra.mxu0 0.0
      %2800 = vmatprep.subr.mxu0 0.0
      %2801 = vmatpush1.msra.mxu0 0.0
      %2802 = vmatprep.subr.mxu0 0.0
      %2803 = vmatpush1.msra.mxu0 0.0
      %2804 = vmatprep.subr.mxu0 0.0
      %2805 = vmatpush1.msra.mxu0 0.0
      %2806 = vmatprep.subr.mxu0 0.0
      %2807 = vmatpush1.msra.mxu0 0.0
      %2808 = vmatprep.subr.mxu0 0.0
      %2809 = vmatpush1.msra.mxu0 0.0
      %2810 = vmatprep.subr.mxu0 0.0
      %2811 = vmatpush1.msra.mxu0 0.0
      %2812 = vmatprep.subr.mxu0 0.0
      %2813 = vmatpush1.msra.mxu0 0.0
      %2814 = vmatprep.subr.mxu0 0.0
      %2815 = vmatpush1.msra.mxu0 0.0
      %2816 = vmatprep.subr.mxu0 0.0
      %2817 = vmatpush1.msra.mxu0 0.0
      %2818 = vmatprep.subr.mxu0 0.0
      %2819 = vmatpush1.msra.mxu0 0.0
      %2820 = vmatprep.subr.mxu0 0.0
      %2821 = vmatpush1.msra.mxu0 0.0
      %2822 = vmatprep.subr.mxu0 0.0
      %2823 = vmatpush1.msra.mxu0 0.0
      %2824 = vmatprep.subr.mxu0 0.0
      %2825 = vmatpush1.msra.mxu0 0.0
      %2826 = vmatprep.subr.mxu0 0.0
      %2827 = vmatpush1.msra.mxu0 0.0
      %2828 = vmatprep.subr.mxu0 0.0
      %2829 = vmatpush1.msra.mxu0 0.0
      %2830 = vmatprep.mubr.f32.mxu0 0.0
      %v2831 = vand.u32 %v587, 4294901760
      %v2832 = vsub.f32 %v587, %v2831
      %v2833 = vand.u32 %v2832, 4294901760
      %v2834 = vsub.f32 %v2832, %v2833
      %v2835 = vand.u32 %v2834, 4294901760
      %2836 = vmatmul.mubr.f32.gmra.mrb[0].mxu0 %v2835
      %v2837 = vpop.f32.mrb[0].mxu0
      %v2838 = vadd.f32 0.0, %v2837
      %v2839 = vpop.f32.mrb[0].mxu0
      %v2840 = vadd.f32 0.0, %v2839
      %2841 = vmatprep.mubr.f32.mxu0 0.0
      %v2842 = vand.u32 %v590, 4294901760
      %v2843 = vsub.f32 %v590, %v2842
      %v2844 = vand.u32 %v2843, 4294901760
      %v2845 = vsub.f32 %v2843, %v2844
      %v2846 = vand.u32 %v2845, 4294901760
      %2847 = vmatmul.mubr.f32.gmra.mrb[0].mxu0 %v2846
      %v2848 = vpop.f32.mrb[0].mxu0
      %v2849 = vadd.f32 0.0, %v2848
      %v2850 = vpop.f32.mrb[0].mxu0
      %v2851 = vadd.f32 0.0, %v2850
      %2852 = vmatprep.mubr.f32.mxu0 0.0
      %v2853 = vand.u32 %v593, 4294901760
      %v2854 = vsub.f32 %v593, %v2853
      %v2855 = vand.u32 %v2854, 4294901760
      %v2856 = vsub.f32 %v2854, %v2855
      %v2857 = vand.u32 %v2856, 4294901760
      %2858 = vmatmul.mubr.f32.gmra.mrb[0].mxu0 %v2857
      %v2859 = vpop.f32.mrb[0].mxu0
      %v2860 = vadd.f32 0.0, %v2859
      %v2861 = vpop.f32.mrb[0].mxu0
      %v2862 = vadd.f32 0.0, %v2861
      %2863 = vdwg.mxu0
      %v2864 = vand.u32 %v536, 4294901760
      %v2865 = vsub.f32 %v536, %v2864
      %v2866 = vand.u32 %v2865, 4294901760
      %v2867 = vsub.f32 %v2865, %v2866
      %v2868 = vand.u32 %v2867, 4294901760
      %2869 = vmatprep.subr.mxu0 %v2868
      %v2870 = vand.u32 %v535, 4294901760
      %v2871 = vsub.f32 %v535, %v2870
      %v2872 = vand.u32 %v2871, 4294901760
      %v2873 = vsub.f32 %v2871, %v2872
      %v2874 = vand.u32 %v2873, 4294901760
      %2875 = vmatpush1.msra.mxu0 %v2874
      %v2876 = vand.u32 %v544, 4294901760
      %v2877 = vsub.f32 %v544, %v2876
      %v2878 = vand.u32 %v2877, 4294901760
      %v2879 = vsub.f32 %v2877, %v2878
      %v2880 = vand.u32 %v2879, 4294901760
      %2881 = vmatprep.subr.mxu0 %v2880
      %v2882 = vand.u32 %v543, 4294901760
      %v2883 = vsub.f32 %v543, %v2882
      %v2884 = vand.u32 %v2883, 4294901760
      %v2885 = vsub.f32 %v2883, %v2884
      %v2886 = vand.u32 %v2885, 4294901760
      %2887 = vmatpush1.msra.mxu0 %v2886
      %v2888 = vand.u32 %v552, 4294901760
      %v2889 = vsub.f32 %v552, %v2888
      %v2890 = vand.u32 %v2889, 4294901760
      %v2891 = vsub.f32 %v2889, %v2890
      %v2892 = vand.u32 %v2891, 4294901760
      %2893 = vmatprep.subr.mxu0 %v2892
      %v2894 = vand.u32 %v551, 4294901760
      %v2895 = vsub.f32 %v551, %v2894
      %v2896 = vand.u32 %v2895, 4294901760
      %v2897 = vsub.f32 %v2895, %v2896
      %v2898 = vand.u32 %v2897, 4294901760
      %2899 = vmatpush1.msra.mxu0 %v2898
      %v2900 = vand.u32 %v560, 4294901760
      %v2901 = vsub.f32 %v560, %v2900
      %v2902 = vand.u32 %v2901, 4294901760
      %v2903 = vsub.f32 %v2901, %v2902
      %v2904 = vand.u32 %v2903, 4294901760
      %2905 = vmatprep.subr.mxu0 %v2904
      %v2906 = vand.u32 %v559, 4294901760
      %v2907 = vsub.f32 %v559, %v2906
      %v2908 = vand.u32 %v2907, 4294901760
      %v2909 = vsub.f32 %v2907, %v2908
      %v2910 = vand.u32 %v2909, 4294901760
      %2911 = vmatpush1.msra.mxu0 %v2910
      %v2912 = vand.u32 %v568, 4294901760
      %v2913 = vsub.f32 %v568, %v2912
      %v2914 = vand.u32 %v2913, 4294901760
      %v2915 = vsub.f32 %v2913, %v2914
      %v2916 = vand.u32 %v2915, 4294901760
      %2917 = vmatprep.subr.mxu0 %v2916
      %v2918 = vand.u32 %v567, 4294901760
      %v2919 = vsub.f32 %v567, %v2918
      %v2920 = vand.u32 %v2919, 4294901760
      %v2921 = vsub.f32 %v2919, %v2920
      %v2922 = vand.u32 %v2921, 4294901760
      %2923 = vmatpush1.msra.mxu0 %v2922
      %v2924 = vand.u32 %v576, 4294901760
      %v2925 = vsub.f32 %v576, %v2924
      %v2926 = vand.u32 %v2925, 4294901760
      %v2927 = vsub.f32 %v2925, %v2926
      %v2928 = vand.u32 %v2927, 4294901760
      %2929 = vmatprep.subr.mxu0 %v2928
      %v2930 = vand.u32 %v575, 4294901760
      %v2931 = vsub.f32 %v575, %v2930
      %v2932 = vand.u32 %v2931, 4294901760
      %v2933 = vsub.f32 %v2931, %v2932
      %v2934 = vand.u32 %v2933, 4294901760
      %2935 = vmatpush1.msra.mxu0 %v2934
      %v2936 = vand.u32 %v584, 4294901760
      %v2937 = vsub.f32 %v584, %v2936
      %v2938 = vand.u32 %v2937, 4294901760
      %v2939 = vsub.f32 %v2937, %v2938
      %v2940 = vand.u32 %v2939, 4294901760
      %2941 = vmatprep.subr.mxu0 %v2940
      %v2942 = vand.u32 %v583, 4294901760
      %v2943 = vsub.f32 %v583, %v2942
      %v2944 = vand.u32 %v2943, 4294901760
      %v2945 = vsub.f32 %v2943, %v2944
      %v2946 = vand.u32 %v2945, 4294901760
      %2947 = vmatpush1.msra.mxu0 %v2946
      %2948 = vmatprep.subr.mxu0 0.0
      %2949 = vmatpush1.msra.mxu0 0.0
      %2950 = vmatprep.subr.mxu0 0.0
      %2951 = vmatpush1.msra.mxu0 0.0
      %2952 = vmatprep.subr.mxu0 0.0
      %2953 = vmatpush1.msra.mxu0 0.0
      %2954 = vmatprep.subr.mxu0 0.0
      %2955 = vmatpush1.msra.mxu0 0.0
      %2956 = vmatprep.subr.mxu0 0.0
      %2957 = vmatpush1.msra.mxu0 0.0
      %2958 = vmatprep.subr.mxu0 0.0
      %2959 = vmatpush1.msra.mxu0 0.0
      %2960 = vmatprep.subr.mxu0 0.0
      %2961 = vmatpush1.msra.mxu0 0.0
      %2962 = vmatprep.subr.mxu0 0.0
      %2963 = vmatpush1.msra.mxu0 0.0
      %2964 = vmatprep.subr.mxu0 0.0
      %2965 = vmatpush1.msra.mxu0 0.0
      %2966 = vmatprep.subr.mxu0 0.0
      %2967 = vmatpush1.msra.mxu0 0.0
      %2968 = vmatprep.subr.mxu0 0.0
      %2969 = vmatpush1.msra.mxu0 0.0
      %2970 = vmatprep.subr.mxu0 0.0
      %2971 = vmatpush1.msra.mxu0 0.0
      %2972 = vmatprep.subr.mxu0 0.0
      %2973 = vmatpush1.msra.mxu0 0.0
      %2974 = vmatprep.subr.mxu0 0.0
      %2975 = vmatpush1.msra.mxu0 0.0
      %2976 = vmatprep.subr.mxu0 0.0
      %2977 = vmatpush1.msra.mxu0 0.0
      %2978 = vmatprep.subr.mxu0 0.0
      %2979 = vmatpush1.msra.mxu0 0.0
      %2980 = vmatprep.subr.mxu0 0.0
      %2981 = vmatpush1.msra.mxu0 0.0
      %2982 = vmatprep.subr.mxu0 0.0
      %2983 = vmatpush1.msra.mxu0 0.0
      %2984 = vmatprep.subr.mxu0 0.0
      %2985 = vmatpush1.msra.mxu0 0.0
      %2986 = vmatprep.subr.mxu0 0.0
      %2987 = vmatpush1.msra.mxu0 0.0
      %2988 = vmatprep.subr.mxu0 0.0
      %2989 = vmatpush1.msra.mxu0 0.0
      %2990 = vmatprep.subr.mxu0 0.0
      %2991 = vmatpush1.msra.mxu0 0.0
      %2992 = vmatprep.subr.mxu0 0.0
      %2993 = vmatpush1.msra.mxu0 0.0
      %2994 = vmatprep.subr.mxu0 0.0
      %2995 = vmatpush1.msra.mxu0 0.0
      %2996 = vmatprep.subr.mxu0 0.0
      %2997 = vmatpush1.msra.mxu0 0.0
      %2998 = vmatprep.mubr.f32.mxu0 0.0
      %v2999 = vand.u32 %v587, 4294901760
      %3000 = vmatmul.mubr.f32.gmra.mrb[0].mxu0 %v2999
      %v3001 = vpop.f32.mrb[0].mxu0
      %v3002 = vadd.f32 %v2838, %v3001
      %v3003 = vpop.f32.mrb[0].mxu0
      %v3004 = vadd.f32 %v2840, %v3003
      %3005 = vmatprep.mubr.f32.mxu0 0.0
      %v3006 = vand.u32 %v590, 4294901760
      %3007 = vmatmul.mubr.f32.gmra.mrb[0].mxu0 %v3006
      %v3008 = vpop.f32.mrb[0].mxu0
      %v3009 = vadd.f32 %v2849, %v3008
      %v3010 = vpop.f32.mrb[0].mxu0
      %v3011 = vadd.f32 %v2851, %v3010
      %3012 = vmatprep.mubr.f32.mxu0 0.0
      %v3013 = vand.u32 %v593, 4294901760
      %3014 = vmatmul.mubr.f32.gmra.mrb[0].mxu0 %v3013
      %v3015 = vpop.f32.mrb[0].mxu0
      %v3016 = vadd.f32 %v2860, %v3015
      %v3017 = vpop.f32.mrb[0].mxu0
      %v3018 = vadd.f32 %v2862, %v3017
      %3019 = vdwg.mxu0
      %v3020 = vand.u32 %v536, 4294901760
      %v3021 = vsub.f32 %v536, %v3020
      %3022 = vmatprep.subr.mxu0 %v3021
      %v3023 = vand.u32 %v535, 4294901760
      %v3024 = vsub.f32 %v535, %v3023
      %3025 = vmatpush1.msra.mxu0 %v3024
      %v3026 = vand.u32 %v544, 4294901760
      %v3027 = vsub.f32 %v544, %v3026
      %3028 = vmatprep.subr.mxu0 %v3027
      %v3029 = vand.u32 %v543, 4294901760
      %v3030 = vsub.f32 %v543, %v3029
      %3031 = vmatpush1.msra.mxu0 %v3030
      %v3032 = vand.u32 %v552, 4294901760
      %v3033 = vsub.f32 %v552, %v3032
      %3034 = vmatprep.subr.mxu0 %v3033
      %v3035 = vand.u32 %v551, 4294901760
      %v3036 = vsub.f32 %v551, %v3035
      %3037 = vmatpush1.msra.mxu0 %v3036
      %v3038 = vand.u32 %v560, 4294901760
      %v3039 = vsub.f32 %v560, %v3038
      %3040 = vmatprep.subr.mxu0 %v3039
      %v3041 = vand.u32 %v559, 4294901760
      %v3042 = vsub.f32 %v559, %v3041
      %3043 = vmatpush1.msra.mxu0 %v3042
      %v3044 = vand.u32 %v568, 4294901760
      %v3045 = vsub.f32 %v568, %v3044
      %3046 = vmatprep.subr.mxu0 %v3045
      %v3047 = vand.u32 %v567, 4294901760
      %v3048 = vsub.f32 %v567, %v3047
      %3049 = vmatpush1.msra.mxu0 %v3048
      %v3050 = vand.u32 %v576, 4294901760
      %v3051 = vsub.f32 %v576, %v3050
      %3052 = vmatprep.subr.mxu0 %v3051
      %v3053 = vand.u32 %v575, 4294901760
      %v3054 = vsub.f32 %v575, %v3053
      %3055 = vmatpush1.msra.mxu0 %v3054
      %v3056 = vand.u32 %v584, 4294901760
      %v3057 = vsub.f32 %v584, %v3056
      %3058 = vmatprep.subr.mxu0 %v3057
      %v3059 = vand.u32 %v583, 4294901760
      %v3060 = vsub.f32 %v583, %v3059
      %3061 = vmatpush1.msra.mxu0 %v3060
      %3062 = vmatprep.subr.mxu0 0.0
      %3063 = vmatpush1.msra.mxu0 0.0
      %3064 = vmatprep.subr.mxu0 0.0
      %3065 = vmatpush1.msra.mxu0 0.0
      %3066 = vmatprep.subr.mxu0 0.0
      %3067 = vmatpush1.msra.mxu0 0.0
      %3068 = vmatprep.subr.mxu0 0.0
      %3069 = vmatpush1.msra.mxu0 0.0
      %3070 = vmatprep.subr.mxu0 0.0
      %3071 = vmatpush1.msra.mxu0 0.0
      %3072 = vmatprep.subr.mxu0 0.0
      %3073 = vmatpush1.msra.mxu0 0.0
      %3074 = vmatprep.subr.mxu0 0.0
      %3075 = vmatpush1.msra.mxu0 0.0
      %3076 = vmatprep.subr.mxu0 0.0
      %3077 = vmatpush1.msra.mxu0 0.0
      %3078 = vmatprep.subr.mxu0 0.0
      %3079 = vmatpush1.msra.mxu0 0.0
      %3080 = vmatprep.subr.mxu0 0.0
      %3081 = vmatpush1.msra.mxu0 0.0
      %3082 = vmatprep.subr.mxu0 0.0
      %3083 = vmatpush1.msra.mxu0 0.0
      %3084 = vmatprep.subr.mxu0 0.0
      %3085 = vmatpush1.msra.mxu0 0.0
      %3086 = vmatprep.subr.mxu0 0.0
      %3087 = vmatpush1.msra.mxu0 0.0
      %3088 = vmatprep.subr.mxu0 0.0
      %3089 = vmatpush1.msra.mxu0 0.0
      %3090 = vmatprep.subr.mxu0 0.0
      %3091 = vmatpush1.msra.mxu0 0.0
      %3092 = vmatprep.subr.mxu0 0.0
      %3093 = vmatpush1.msra.mxu0 0.0
      %3094 = vmatprep.subr.mxu0 0.0
      %3095 = vmatpush1.msra.mxu0 0.0
      %3096 = vmatprep.subr.mxu0 0.0
      %3097 = vmatpush1.msra.mxu0 0.0
      %3098 = vmatprep.subr.mxu0 0.0
      %3099 = vmatpush1.msra.mxu0 0.0
      %3100 = vmatprep.subr.mxu0 0.0
      %3101 = vmatpush1.msra.mxu0 0.0
      %3102 = vmatprep.subr.mxu0 0.0
      %3103 = vmatpush1.msra.mxu0 0.0
      %3104 = vmatprep.subr.mxu0 0.0
      %3105 = vmatpush1.msra.mxu0 0.0
      %3106 = vmatprep.subr.mxu0 0.0
      %3107 = vmatpush1.msra.mxu0 0.0
      %3108 = vmatprep.subr.mxu0 0.0
      %3109 = vmatpush1.msra.mxu0 0.0
      %3110 = vmatprep.subr.mxu0 0.0
      %3111 = vmatpush1.msra.mxu0 0.0
      %3112 = vmatprep.mubr.f32.mxu0 0.0
      %v3113 = vand.u32 %v587, 4294901760
      %v3114 = vsub.f32 %v587, %v3113
      %3115 = vmatmul.mubr.f32.gmra.mrb[0].mxu0 %v3114
      %v3116 = vpop.f32.mrb[0].mxu0
      %v3117 = vadd.f32 %v3002, %v3116
      %v3118 = vpop.f32.mrb[0].mxu0
      %v3119 = vadd.f32 %v3004, %v3118
      %3120 = vmatprep.mubr.f32.mxu0 0.0
      %v3121 = vand.u32 %v590, 4294901760
      %v3122 = vsub.f32 %v590, %v3121
      %3123 = vmatmul.mubr.f32.gmra.mrb[0].mxu0 %v3122
      %v3124 = vpop.f32.mrb[0].mxu0
      %v3125 = vadd.f32 %v3009, %v3124
      %v3126 = vpop.f32.mrb[0].mxu0
      %v3127 = vadd.f32 %v3011, %v3126
      %3128 = vmatprep.mubr.f32.mxu0 0.0
      %v3129 = vand.u32 %v593, 4294901760
      %v3130 = vsub.f32 %v593, %v3129
      %3131 = vmatmul.mubr.f32.gmra.mrb[0].mxu0 %v3130
      %v3132 = vpop.f32.mrb[0].mxu0
      %v3133 = vadd.f32 %v3016, %v3132
      %v3134 = vpop.f32.mrb[0].mxu0
      %v3135 = vadd.f32 %v3018, %v3134
      %3136 = vdwg.mxu0
      %v3137 = vand.u32 %v536, 4294901760
      %3138 = vmatprep.subr.mxu0 %v3137
      %v3139 = vand.u32 %v535, 4294901760
      %3140 = vmatpush1.msra.mxu0 %v3139
      %v3141 = vand.u32 %v544, 4294901760
      %3142 = vmatprep.subr.mxu0 %v3141
      %v3143 = vand.u32 %v543, 4294901760
      %3144 = vmatpush1.msra.mxu0 %v3143
      %v3145 = vand.u32 %v552, 4294901760
      %3146 = vmatprep.subr.mxu0 %v3145
      %v3147 = vand.u32 %v551, 4294901760
      %3148 = vmatpush1.msra.mxu0 %v3147
      %v3149 = vand.u32 %v560, 4294901760
      %3150 = vmatprep.subr.mxu0 %v3149
      %v3151 = vand.u32 %v559, 4294901760
      %3152 = vmatpush1.msra.mxu0 %v3151
      %v3153 = vand.u32 %v568, 4294901760
      %3154 = vmatprep.subr.mxu0 %v3153
      %v3155 = vand.u32 %v567, 4294901760
      %3156 = vmatpush1.msra.mxu0 %v3155
      %v3157 = vand.u32 %v576, 4294901760
      %3158 = vmatprep.subr.mxu0 %v3157
      %v3159 = vand.u32 %v575, 4294901760
      %3160 = vmatpush1.msra.mxu0 %v3159
      %v3161 = vand.u32 %v584, 4294901760
      %3162 = vmatprep.subr.mxu0 %v3161
      %v3163 = vand.u32 %v583, 4294901760
      %3164 = vmatpush1.msra.mxu0 %v3163
      %3165 = vmatprep.subr.mxu0 0.0
      %3166 = vmatpush1.msra.mxu0 0.0
      %3167 = vmatprep.subr.mxu0 0.0
      %3168 = vmatpush1.msra.mxu0 0.0
      %3169 = vmatprep.subr.mxu0 0.0
      %3170 = vmatpush1.msra.mxu0 0.0
      %3171 = vmatprep.subr.mxu0 0.0
      %3172 = vmatpush1.msra.mxu0 0.0
      %3173 = vmatprep.subr.mxu0 0.0
      %3174 = vmatpush1.msra.mxu0 0.0
      %3175 = vmatprep.subr.mxu0 0.0
      %3176 = vmatpush1.msra.mxu0 0.0
      %3177 = vmatprep.subr.mxu0 0.0
      %3178 = vmatpush1.msra.mxu0 0.0
      %3179 = vmatprep.subr.mxu0 0.0
      %3180 = vmatpush1.msra.mxu0 0.0
      %3181 = vmatprep.subr.mxu0 0.0
      %3182 = vmatpush1.msra.mxu0 0.0
      %3183 = vmatprep.subr.mxu0 0.0
      %3184 = vmatpush1.msra.mxu0 0.0
      %3185 = vmatprep.subr.mxu0 0.0
      %3186 = vmatpush1.msra.mxu0 0.0
      %3187 = vmatprep.subr.mxu0 0.0
      %3188 = vmatpush1.msra.mxu0 0.0
      %3189 = vmatprep.subr.mxu0 0.0
      %3190 = vmatpush1.msra.mxu0 0.0
      %3191 = vmatprep.subr.mxu0 0.0
      %3192 = vmatpush1.msra.mxu0 0.0
      %3193 = vmatprep.subr.mxu0 0.0
      %3194 = vmatpush1.msra.mxu0 0.0
      %3195 = vmatprep.subr.mxu0 0.0
      %3196 = vmatpush1.msra.mxu0 0.0
      %3197 = vmatprep.subr.mxu0 0.0
      %3198 = vmatpush1.msra.mxu0 0.0
      %3199 = vmatprep.subr.mxu0 0.0
      %3200 = vmatpush1.msra.mxu0 0.0
      %3201 = vmatprep.subr.mxu0 0.0
      %3202 = vmatpush1.msra.mxu0 0.0
      %3203 = vmatprep.subr.mxu0 0.0
      %3204 = vmatpush1.msra.mxu0 0.0
      %3205 = vmatprep.subr.mxu0 0.0
      %3206 = vmatpush1.msra.mxu0 0.0
      %3207 = vmatprep.subr.mxu0 0.0
      %3208 = vmatpush1.msra.mxu0 0.0
      %3209 = vmatprep.subr.mxu0 0.0
      %3210 = vmatpush1.msra.mxu0 0.0
      %3211 = vmatprep.subr.mxu0 0.0
      %3212 = vmatpush1.msra.mxu0 0.0
      %3213 = vmatprep.subr.mxu0 0.0
      %3214 = vmatpush1.msra.mxu0 0.0
      %3215 = vmatprep.mubr.f32.mxu0 0.0
      %v3216 = vand.u32 %v587, 4294901760
      %v3217 = vsub.f32 %v587, %v3216
      %v3218 = vand.u32 %v3217, 4294901760
      %3219 = vmatmul.mubr.f32.gmra.mrb[0].mxu0 %v3218
      %v3220 = vpop.f32.mrb[0].mxu0
      %v3221 = vadd.f32 %v3117, %v3220
      %v3222 = vpop.f32.mrb[0].mxu0
      %v3223 = vadd.f32 %v3119, %v3222
      %3224 = vmatprep.mubr.f32.mxu0 0.0
      %v3225 = vand.u32 %v590, 4294901760
      %v3226 = vsub.f32 %v590, %v3225
      %v3227 = vand.u32 %v3226, 4294901760
      %3228 = vmatmul.mubr.f32.gmra.mrb[0].mxu0 %v3227
      %v3229 = vpop.f32.mrb[0].mxu0
      %v3230 = vadd.f32 %v3125, %v3229
      %v3231 = vpop.f32.mrb[0].mxu0
      %v3232 = vadd.f32 %v3127, %v3231
      %3233 = vmatprep.mubr.f32.mxu0 0.0
      %v3234 = vand.u32 %v593, 4294901760
      %v3235 = vsub.f32 %v593, %v3234
      %v3236 = vand.u32 %v3235, 4294901760
      %3237 = vmatmul.mubr.f32.gmra.mrb[0].mxu0 %v3236
      %v3238 = vpop.f32.mrb[0].mxu0
      %v3239 = vadd.f32 %v3133, %v3238
      %v3240 = vpop.f32.mrb[0].mxu0
      %v3241 = vadd.f32 %v3135, %v3240
      %3242 = vdwg.mxu0
      %v3243 = vand.u32 %v536, 4294901760
      %v3244 = vsub.f32 %v536, %v3243
      %v3245 = vand.u32 %v3244, 4294901760
      %3246 = vmatprep.subr.mxu0 %v3245
      %v3247 = vand.u32 %v535, 4294901760
      %v3248 = vsub.f32 %v535, %v3247
      %v3249 = vand.u32 %v3248, 4294901760
      %3250 = vmatpush1.msra.mxu0 %v3249
      %v3251 = vand.u32 %v544, 4294901760
      %v3252 = vsub.f32 %v544, %v3251
      %v3253 = vand.u32 %v3252, 4294901760
      %3254 = vmatprep.subr.mxu0 %v3253
      %v3255 = vand.u32 %v543, 4294901760
      %v3256 = vsub.f32 %v543, %v3255
      %v3257 = vand.u32 %v3256, 4294901760
      %3258 = vmatpush1.msra.mxu0 %v3257
      %v3259 = vand.u32 %v552, 4294901760
      %v3260 = vsub.f32 %v552, %v3259
      %v3261 = vand.u32 %v3260, 4294901760
      %3262 = vmatprep.subr.mxu0 %v3261
      %v3263 = vand.u32 %v551, 4294901760
      %v3264 = vsub.f32 %v551, %v3263
      %v3265 = vand.u32 %v3264, 4294901760
      %3266 = vmatpush1.msra.mxu0 %v3265
      %v3267 = vand.u32 %v560, 4294901760
      %v3268 = vsub.f32 %v560, %v3267
      %v3269 = vand.u32 %v3268, 4294901760
      %3270 = vmatprep.subr.mxu0 %v3269
      %v3271 = vand.u32 %v559, 4294901760
      %v3272 = vsub.f32 %v559, %v3271
      %v3273 = vand.u32 %v3272, 4294901760
      %3274 = vmatpush1.msra.mxu0 %v3273
      %v3275 = vand.u32 %v568, 4294901760
      %v3276 = vsub.f32 %v568, %v3275
      %v3277 = vand.u32 %v3276, 4294901760
      %3278 = vmatprep.subr.mxu0 %v3277
      %v3279 = vand.u32 %v567, 4294901760
      %v3280 = vsub.f32 %v567, %v3279
      %v3281 = vand.u32 %v3280, 4294901760
      %3282 = vmatpush1.msra.mxu0 %v3281
      %v3283 = vand.u32 %v576, 4294901760
      %v3284 = vsub.f32 %v576, %v3283
      %v3285 = vand.u32 %v3284, 4294901760
      %3286 = vmatprep.subr.mxu0 %v3285
      %v3287 = vand.u32 %v575, 4294901760
      %v3288 = vsub.f32 %v575, %v3287
      %v3289 = vand.u32 %v3288, 4294901760
      %3290 = vmatpush1.msra.mxu0 %v3289
      %v3291 = vand.u32 %v584, 4294901760
      %v3292 = vsub.f32 %v584, %v3291
      %v3293 = vand.u32 %v3292, 4294901760
      %3294 = vmatprep.subr.mxu0 %v3293
      %v3295 = vand.u32 %v583, 4294901760
      %v3296 = vsub.f32 %v583, %v3295
      %v3297 = vand.u32 %v3296, 4294901760
      %3298 = vmatpush1.msra.mxu0 %v3297
      %3299 = vmatprep.subr.mxu0 0.0
      %3300 = vmatpush1.msra.mxu0 0.0
      %3301 = vmatprep.subr.mxu0 0.0
      %3302 = vmatpush1.msra.mxu0 0.0
      %3303 = vmatprep.subr.mxu0 0.0
      %3304 = vmatpush1.msra.mxu0 0.0
      %3305 = vmatprep.subr.mxu0 0.0
      %3306 = vmatpush1.msra.mxu0 0.0
      %3307 = vmatprep.subr.mxu0 0.0
      %3308 = vmatpush1.msra.mxu0 0.0
      %3309 = vmatprep.subr.mxu0 0.0
      %3310 = vmatpush1.msra.mxu0 0.0
      %3311 = vmatprep.subr.mxu0 0.0
      %3312 = vmatpush1.msra.mxu0 0.0
      %3313 = vmatprep.subr.mxu0 0.0
      %3314 = vmatpush1.msra.mxu0 0.0
      %3315 = vmatprep.subr.mxu0 0.0
      %3316 = vmatpush1.msra.mxu0 0.0
      %3317 = vmatprep.subr.mxu0 0.0
      %3318 = vmatpush1.msra.mxu0 0.0
      %3319 = vmatprep.subr.mxu0 0.0
      %3320 = vmatpush1.msra.mxu0 0.0
      %3321 = vmatprep.subr.mxu0 0.0
      %3322 = vmatpush1.msra.mxu0 0.0
      %3323 = vmatprep.subr.mxu0 0.0
      %3324 = vmatpush1.msra.mxu0 0.0
      %3325 = vmatprep.subr.mxu0 0.0
      %3326 = vmatpush1.msra.mxu0 0.0
      %3327 = vmatprep.subr.mxu0 0.0
      %3328 = vmatpush1.msra.mxu0 0.0
      %3329 = vmatprep.subr.mxu0 0.0
      %3330 = vmatpush1.msra.mxu0 0.0
      %3331 = vmatprep.subr.mxu0 0.0
      %3332 = vmatpush1.msra.mxu0 0.0
      %3333 = vmatprep.subr.mxu0 0.0
      %3334 = vmatpush1.msra.mxu0 0.0
      %3335 = vmatprep.subr.mxu0 0.0
      %3336 = vmatpush1.msra.mxu0 0.0
      %3337 = vmatprep.subr.mxu0 0.0
      %3338 = vmatpush1.msra.mxu0 0.0
      %3339 = vmatprep.subr.mxu0 0.0
      %3340 = vmatpush1.msra.mxu0 0.0
      %3341 = vmatprep.subr.mxu0 0.0
      %3342 = vmatpush1.msra.mxu0 0.0
      %3343 = vmatprep.subr.mxu0 0.0
      %3344 = vmatpush1.msra.mxu0 0.0
      %3345 = vmatprep.subr.mxu0 0.0
      %3346 = vmatpush1.msra.mxu0 0.0
      %3347 = vmatprep.subr.mxu0 0.0
      %3348 = vmatpush1.msra.mxu0 0.0
      %3349 = vmatprep.mubr.f32.mxu0 0.0
      %v3350 = vand.u32 %v587, 4294901760
      %3351 = vmatmul.mubr.f32.gmra.mrb[0].mxu0 %v3350
      %v3352 = vpop.f32.mrb[0].mxu0
      %v3353 = vadd.f32 %v3221, %v3352
      %v3354 = vpop.f32.mrb[0].mxu0
      %v3355 = vadd.f32 %v3223, %v3354
      %3356 = vmatprep.mubr.f32.mxu0 0.0
      %v3357 = vand.u32 %v590, 4294901760
      %3358 = vmatmul.mubr.f32.gmra.mrb[0].mxu0 %v3357
      %v3359 = vpop.f32.mrb[0].mxu0
      %v3360 = vadd.f32 %v3230, %v3359
      %v3361 = vpop.f32.mrb[0].mxu0
      %v3362 = vadd.f32 %v3232, %v3361
      %3363 = vmatprep.mubr.f32.mxu0 0.0
      %v3364 = vand.u32 %v593, 4294901760
      %3365 = vmatmul.mubr.f32.gmra.mrb[0].mxu0 %v3364
      %v3366 = vpop.f32.mrb[0].mxu0
      %v3367 = vadd.f32 %v3239, %v3366
      %v3368 = vpop.f32.mrb[0].mxu0
      %v3369 = vadd.f32 %v3241, %v3368
      %3370 = vdwg.mxu0
      %v3371 = vand.u32 %v536, 4294901760
      %3372 = vmatprep.subr.mxu0 %v3371
      %v3373 = vand.u32 %v535, 4294901760
      %3374 = vmatpush1.msra.mxu0 %v3373
      %v3375 = vand.u32 %v544, 4294901760
      %3376 = vmatprep.subr.mxu0 %v3375
      %v3377 = vand.u32 %v543, 4294901760
      %3378 = vmatpush1.msra.mxu0 %v3377
      %v3379 = vand.u32 %v552, 4294901760
      %3380 = vmatprep.subr.mxu0 %v3379
      %v3381 = vand.u32 %v551, 4294901760
      %3382 = vmatpush1.msra.mxu0 %v3381
      %v3383 = vand.u32 %v560, 4294901760
      %3384 = vmatprep.subr.mxu0 %v3383
      %v3385 = vand.u32 %v559, 4294901760
      %3386 = vmatpush1.msra.mxu0 %v3385
      %v3387 = vand.u32 %v568, 4294901760
      %3388 = vmatprep.subr.mxu0 %v3387
      %v3389 = vand.u32 %v567, 4294901760
      %3390 = vmatpush1.msra.mxu0 %v3389
      %v3391 = vand.u32 %v576, 4294901760
      %3392 = vmatprep.subr.mxu0 %v3391
      %v3393 = vand.u32 %v575, 4294901760
      %3394 = vmatpush1.msra.mxu0 %v3393
      %v3395 = vand.u32 %v584, 4294901760
      %3396 = vmatprep.subr.mxu0 %v3395
      %v3397 = vand.u32 %v583, 4294901760
      %3398 = vmatpush1.msra.mxu0 %v3397
      %3399 = vmatprep.subr.mxu0 0.0
      %3400 = vmatpush1.msra.mxu0 0.0
      %3401 = vmatprep.subr.mxu0 0.0
      %3402 = vmatpush1.msra.mxu0 0.0
      %3403 = vmatprep.subr.mxu0 0.0
      %3404 = vmatpush1.msra.mxu0 0.0
      %3405 = vmatprep.subr.mxu0 0.0
      %3406 = vmatpush1.msra.mxu0 0.0
      %3407 = vmatprep.subr.mxu0 0.0
      %3408 = vmatpush1.msra.mxu0 0.0
      %3409 = vmatprep.subr.mxu0 0.0
      %3410 = vmatpush1.msra.mxu0 0.0
      %3411 = vmatprep.subr.mxu0 0.0
      %3412 = vmatpush1.msra.mxu0 0.0
      %3413 = vmatprep.subr.mxu0 0.0
      %3414 = vmatpush1.msra.mxu0 0.0
      %3415 = vmatprep.subr.mxu0 0.0
      %3416 = vmatpush1.msra.mxu0 0.0
      %3417 = vmatprep.subr.mxu0 0.0
      %3418 = vmatpush1.msra.mxu0 0.0
      %3419 = vmatprep.subr.mxu0 0.0
      %3420 = vmatpush1.msra.mxu0 0.0
      %3421 = vmatprep.subr.mxu0 0.0
      %3422 = vmatpush1.msra.mxu0 0.0
      %3423 = vmatprep.subr.mxu0 0.0
      %3424 = vmatpush1.msra.mxu0 0.0
      %3425 = vmatprep.subr.mxu0 0.0
      %3426 = vmatpush1.msra.mxu0 0.0
      %3427 = vmatprep.subr.mxu0 0.0
      %3428 = vmatpush1.msra.mxu0 0.0
      %3429 = vmatprep.subr.mxu0 0.0
      %3430 = vmatpush1.msra.mxu0 0.0
      %3431 = vmatprep.subr.mxu0 0.0
      %3432 = vmatpush1.msra.mxu0 0.0
      %3433 = vmatprep.subr.mxu0 0.0
      %3434 = vmatpush1.msra.mxu0 0.0
      %3435 = vmatprep.subr.mxu0 0.0
      %3436 = vmatpush1.msra.mxu0 0.0
      %3437 = vmatprep.subr.mxu0 0.0
      %3438 = vmatpush1.msra.mxu0 0.0
      %3439 = vmatprep.subr.mxu0 0.0
      %3440 = vmatpush1.msra.mxu0 0.0
      %3441 = vmatprep.subr.mxu0 0.0
      %3442 = vmatpush1.msra.mxu0 0.0
      %3443 = vmatprep.subr.mxu0 0.0
      %3444 = vmatpush1.msra.mxu0 0.0
      %3445 = vmatprep.subr.mxu0 0.0
      %3446 = vmatpush1.msra.mxu0 0.0
      %3447 = vmatprep.subr.mxu0 0.0
      %3448 = vmatpush1.msra.mxu0 0.0
      %3449 = vmatprep.mubr.f32.mxu0 0.0
      %v3450 = vand.u32 %v587, 4294901760
      %3451 = vmatmul.mubr.f32.gmra.mrb[0].mxu0 %v3450
      %v3452 = vpop.f32.mrb[0].mxu0
      %v3453 = vadd.f32 %v3353, %v3452
      %v3454 = vpop.f32.mrb[0].mxu0
      %v3455 = vadd.f32 %v3355, %v3454
      %3456 = vmatprep.mubr.f32.mxu0 0.0
      %v3457 = vand.u32 %v590, 4294901760
      %3458 = vmatmul.mubr.f32.gmra.mrb[0].mxu0 %v3457
      %v3459 = vpop.f32.mrb[0].mxu0
      %v3460 = vadd.f32 %v3360, %v3459
      %v3461 = vpop.f32.mrb[0].mxu0
      %v3462 = vadd.f32 %v3362, %v3461
      %3463 = vmatprep.mubr.f32.mxu0 0.0
      %v3464 = vand.u32 %v593, 4294901760
      %3465 = vmatmul.mubr.f32.gmra.mrb[0].mxu0 %v3464
      %v3466 = vpop.f32.mrb[0].mxu0
      %v3467 = vadd.f32 %v3367, %v3466
      %v3468 = vpop.f32.mrb[0].mxu0
      %v3469 = vadd.f32 %v3369, %v3468
      %3470 = vdwg.mxu0
      %3471 = vst [vmem:[%s143] sm:$0xff] %v1296
      %3472 = vst [vmem:[%s143 + $0x8] sm:$0xff] %v1298
      %3473 = vst [vmem:[%s143 + $0x10] sm:$0xff] %v2015
      %3474 = vst [vmem:[%s143 + $0x18] sm:$0xff] %v2017
      %3475 = vst [vmem:[%s143 + $0x20] sm:$0xff] %v2734
      %3476 = vst [vmem:[%s143 + $0x28] sm:$0xff] %v2736
      %3477 = vst [vmem:[%s143 + $0x30] sm:$0xff] %v3453
      %3478 = vst [vmem:[%s143 + $0x38] sm:$0xff] %v3455
      %3479 = vst [vmem:[%s143 + $0x40] sm:$0xff] %v1303
      %3480 = vst [vmem:[%s143 + $0x48] sm:$0xff] %v1305
      %3481 = vst [vmem:[%s143 + $0x50] sm:$0xff] %v2022
      %3482 = vst [vmem:[%s143 + $0x58] sm:$0xff] %v2024
      %3483 = vst [vmem:[%s143 + $0x60] sm:$0xff] %v2741
      %3484 = vst [vmem:[%s143 + $0x68] sm:$0xff] %v2743
      %3485 = vst [vmem:[%s143 + $0x70] sm:$0xff] %v3460
      %3486 = vst [vmem:[%s143 + $0x78] sm:$0xff] %v3462
      %3487 = vst [vmem:[%s143 + $0x80] sm:$0xff] %v1310
      %3488 = vst [vmem:[%s143 + $0x88] sm:$0xff] %v1312
      %3489 = vst [vmem:[%s143 + $0x90] sm:$0xff] %v2029
      %3490 = vst [vmem:[%s143 + $0x98] sm:$0xff] %v2031
      %3491 = vst [vmem:[%s143 + $0xa0] sm:$0xff] %v2748
      %3492 = vst [vmem:[%s143 + $0xa8] sm:$0xff] %v2750
      %3493 = vst [vmem:[%s143 + $0xb0] sm:$0xff] %v3467
      %3494 = vst [vmem:[%s143 + $0xb8] sm:$0xff] %v3469
      %p3495 = scmp.lt.s32.totalorder %s13, 1
      %s3496 = scalar_select %p3495, %s13, 1
      %s3497 = smul.addr %s3496, 24
      %s3498 = smul.addr %s3497, 8
      %s3499 = scalar_lea.vmem %s2, %s3498
      // Predicated region
      $region29: #{stride_conv_forward.1} parent=27 // pred_check
        %p3500 = pneg %p78
      $region30: #{stride_conv_forward.1} parent=27 // pred_check_branch
        %3502 = sbr.rel (%p3500) target = $region32
      $region31: #{stride_conv_forward.1} parent=27 // pred_region
        _
      $region32: #{stride_conv_forward.1} parent=27 // pred_fallthru
        _
    $region28: #{stride_conv_forward.1} parent=5 // pred_fallthru
      _
    %p3503 = scmp.le.s32.totalorder 2, %s8
    // Predicated region
    $region33: #{stride_conv_forward.1} parent=5 // pred_check
      %p3504 = pneg %p3503
    $region34: #{stride_conv_forward.1} parent=5 // pred_check_branch
      %3506 = sbr.rel (%p3504) target = $region36
    $region35: #{stride_conv_forward.1} parent=5 // pred_region
      %s3507 = ssub.s32 %s8, 2
      // Predicated region
      $region37: #{stride_conv_forward.1} parent=35 // pred_check
        %p3508 = pneg %p84
      $region38: #{stride_conv_forward.1} parent=35 // pred_check_branch
        %3510 = sbr.rel (%p3508) target = $region40
      $region39: #{stride_conv_forward.1} parent=35 // pred_region
        %p3511 = scmp.lt.s32.totalorder %s14, 1
        %s3512 = scalar_select %p3511, %s14, 1
        %s3513 = smul.addr %s3512, 24
        %s3514 = smul.addr %s3513, 8
        %s3515 = scalar_lea.vmem %s2, %s3514
      $region40: #{stride_conv_forward.1} parent=35 // pred_fallthru
        _
    $region36: #{stride_conv_forward.1} parent=5 // pred_fallthru
      _
  $region6: #{stride_conv_forward.1} parent=0 // loop_footer
    %s12 = sadd.s32 1, %s8
  $region7: #{stride_conv_forward.1} parent=0 // loop_footer_branch
    %7 = sbr.rel target = $region3
  $region8: #{stride_conv_forward.1} parent=0 // loop_exit
    _

</llo_original>
